<compile_context>
chip_gen: v6e
topology: v6e:2x2x1
jax: 0.10.0
libtpu: 0.0.40
codegen_flags: <defaults>
</compile_context>

<pallas_src>
import functools

import jax
import jax.numpy as jnp
import numpy as np
from jax import lax
from jax.experimental import pallas as pl
from jax.experimental.pallas import tpu as pltpu


def _listwise_kernel(scores_ref, rank_ref, mask_ref, loss_ref, flag_ref, *,
                     inv_temp, top_k):
    s = scores_ref[...] * inv_temp            # (TB, Hp) scaled scores
    r = rank_ref[...]                         # (TB, Hp) rankings (exact small ints in f32)
    msk = mask_ref[...]                       # (TB, Hp) 1.0 / 0.0

    ranked = (msk > 0.5) & (r > 0.0)          # mask & rank>0
    if top_k is None:
        active = ranked
    else:
        active = ranked & (r < float(top_k))
    af = jnp.where(active, 1.0, 0.0).astype(jnp.float32)

    # --- masked softmax over active horses (== pred_probs on the compacted set)
    neg = jnp.float32(-1e9)
    s_m = jnp.where(active, s, neg)
    m = jnp.max(s_m, axis=-1, keepdims=True)
    e = jnp.where(active, jnp.exp(s_m - m), 0.0)
    z = jnp.maximum(jnp.sum(e, axis=-1, keepdims=True), jnp.float32(1e-30))
    p = e / z                                 # zeros on inactive lanes

    # --- entropy term  sum_j q_j log q_j == sum_i p_i log p_i (perm. invariant)
    logp_safe = jnp.log(jnp.where(active, p, 1.0))
    ent = jnp.sum(af * p * logp_safe, axis=-1, keepdims=True)        # (TB, 1)

    # --- positions within the compacted "active" set ------------------------
    li = lax.broadcasted_iota(jnp.int32, s.shape, 1).astype(jnp.float32)
    a_j = af[:, None, :]                                             # (TB, 1, Hp)
    r_i, r_j = r[:, :, None], r[:, None, :]
    li_i, li_j = li[:, :, None], li[:, None, :]

    # stable argsort position of element i among active elements, sorted by rank
    precede = jnp.where((r_j < r_i) | ((r_j == r_i) & (li_j < li_i)), 1.0, 0.0)
    rank_pos = jnp.sum(a_j * precede, axis=-1)                       # (TB, Hp)
    # position of element i in the compacted (original index order) array
    idx_pos = jnp.sum(a_j * jnp.where(li_j < li_i, 1.0, 0.0), axis=-1)

    # --- cross term  sum_j q_j * log(p_j + 1e-8) ----------------------------
    # element i (sitting at rank-order position rank_pos_i) pairs with the
    # element k whose compacted index position equals rank_pos_i.
    logp_eps = jnp.log(p + jnp.float32(1e-8))
    match = jnp.where(rank_pos[:, :, None] == idx_pos[:, None, :], 1.0, 0.0)
    gathered = jnp.sum(match * a_j * logp_eps[:, None, :], axis=-1)  # (TB, Hp)
    cross = jnp.sum(af * p * gathered, axis=-1, keepdims=True)       # (TB, 1)

    kl = ent - cross

    # --- per-race "this race contributes a loss" flag ------------------------
    n_rank = jnp.sum(jnp.where(ranked, 1.0, 0.0), axis=-1, keepdims=True)
    n_act = jnp.sum(af, axis=-1, keepdims=True)
    flag = (n_rank >= 1.5) & (n_act >= 0.5)   # >=2 ranked runners, >=1 after top_k

    loss_ref[...] = jnp.where(flag, kl, jnp.zeros_like(kl))
    flag_ref[...] = jnp.where(flag, 1.0, 0.0).astype(jnp.float32)


def listwise_loss(scores, rankings, mask, *, temperature=1.0, top_k=None,
                  reduction='mean', tile_b=8):
    """Pallas implementation of ListwiseLoss.forward.

    scores: (B, H) float, rankings: (B, H) int (0 = unranked), mask: (B, H) bool.
    """
    scores = jnp.asarray(scores, jnp.float32)
    rankings = jnp.asarray(rankings).astype(jnp.float32)
    mask = jnp.asarray(mask).astype(jnp.float32)
    B, H = scores.shape

    Hp = pl.cdiv(H, 128) * 128          # horses on the lane axis (lane-dense)
    Bp = pl.cdiv(B, tile_b) * tile_b    # races on the sublane axis

    def pad(x):
        return jnp.pad(x, ((0, Bp - B), (0, Hp - H)))

    s_p, r_p, m_p = pad(scores), pad(rankings), pad(mask)

    kernel = functools.partial(_listwise_kernel,
                               inv_temp=float(1.0 / temperature),
                               top_k=top_k)

    row_spec = pl.BlockSpec((tile_b, Hp), lambda b: (b, 0))
    out_spec = pl.BlockSpec((tile_b, 1), lambda b: (b, 0))

    losses, flags = pl.pallas_call(
        kernel,
        out_shape=(jax.ShapeDtypeStruct((Bp, 1), jnp.float32),
                   jax.ShapeDtypeStruct((Bp, 1), jnp.float32)),
        grid_spec=pltpu.PrefetchScalarGridSpec(
            num_scalar_prefetch=0,
            grid=(Bp // tile_b,),
            in_specs=[row_spec, row_spec, row_spec],
            out_specs=[out_spec, out_spec],
        ),
        compiler_params=pltpu.CompilerParams(
            dimension_semantics=("parallel",)),
    )(s_p, r_p, m_p)

    total = jnp.sum(losses)
    count = jnp.sum(flags)
    if reduction == 'mean':
        return jnp.where(count > 0, total / jnp.maximum(count, 1.0), 0.0)
    elif reduction == 'sum':
        return total
    else:
        # TODO(synk): torch reduction='none' returns a variable-length tensor of
        # only the contributing races; we return per-race losses (0 where
        # skipped) together with the contribute flags instead.
        return losses[:B, 0], flags[:B, 0]


# ------------------------- pure NumPy reference ------------------------------
def _ref_listwise(scores, rankings, mask, temperature, top_k, reduction):
    scores = np.asarray(scores, np.float32)
    rankings = np.asarray(rankings)
    mask = np.asarray(mask).astype(bool)
    B, H = scores.shape
    losses = []
    for b in range(B):
        s = scores[b] / temperature
        vi = np.where(mask[b])[0]
        if len(vi) == 0:
            continue
        vs, vr = s[vi], rankings[b][vi]
        rm = vr > 0
        if not rm.any():
            continue
        fs, fr = vs[rm], vr[rm]
        if len(fs) <= 1:
            continue
        if top_k is not None:
            tk = fr < top_k
            if not tk.any():
                continue
            fs, fr = fs[tk], fr[tk]
        order = np.argsort(fr, kind='stable')
        ideal = fs[order]

        def softmax(x):
            e = np.exp(x - x.max())
            return e / e.sum()

        p, q = softmax(fs), softmax(ideal)
        losses.append(float(np.sum(q * (np.log(q) - np.log(p + 1e-8)))))
    if not losses:
        return 0.0
    arr = np.asarray(losses)
    if reduction == 'mean':
        return float(arr.mean())
    if reduction == 'sum':
        return float(arr.sum())
    return arr


if __name__ == "__main__":
    B, H = 8, 18   # 8 races, 18 horses each
    key = jax.random.PRNGKey(0)
    k_s, k_r, k_m = jax.random.split(key, 3)

    scores = jax.random.normal(k_s, (B, H), dtype=jnp.float32)

    # per-race permutation rankings 1..H
    rankings = jnp.stack([
        jax.random.permutation(k, jnp.arange(1, H + 1, dtype=jnp.int32))
        for k in jax.random.split(k_r, B)])
    rankings = rankings.at[2, :5].set(0)              # race 2: some unranked horses

    mask = jax.random.bernoulli(k_m, 0.8, (B, H))
    mask = mask.at[0].set(False)                      # race 0: no runners  -> skipped
    mask = mask.at[1].set(False).at[1, 3].set(True)   # race 1: one runner  -> skipped

    # case 1: default (mean reduction, no top_k)
    out1 = jax.block_until_ready(
        listwise_loss(scores, rankings, mask, temperature=0.75,
                      top_k=None, reduction='mean'))
    ref1 = _ref_listwise(scores, rankings, mask, 0.75, None, 'mean')

    # case 2: top_k filter + sum reduction
    out2 = jax.block_until_ready(
        listwise_loss(scores, rankings, mask, temperature=1.0,
                      top_k=6, reduction='sum'))
    ref2 = _ref_listwise(scores, rankings, mask, 1.0, 6, 'sum')

    assert np.isclose(float(out1), ref1, rtol=1e-4, atol=1e-5), (float(out1), ref1)
    assert np.isclose(float(out2), ref2, rtol=1e-4, atol=1e-5), (float(out2), ref2)

    print("KERNEL_OK")
</pallas_src>

<mosaic_0001>
module attributes {stable_mosaic.version = 11 : i64} {
  func.func @_listwise_kernel(%arg0: i32, %arg1: memref<8x128xf32, #tpu.memory_space<vmem>>, %arg2: memref<8x128xf32, #tpu.memory_space<vmem>>, %arg3: memref<8x128xf32, #tpu.memory_space<vmem>>, %arg4: memref<8x1xf32, #tpu.memory_space<vmem>>, %arg5: memref<8x1xf32, #tpu.memory_space<vmem>>) attributes {dimension_semantics = [#tpu.dimension_semantics<parallel>], iteration_bounds = array<i64: 1>, scalar_prefetch = 0 : i64, scratch_operands = 0 : i64, tpu.core_type = #tpu.core_type<tc>, window_params = [{transform_indices = @transform_0, window_bounds = array<i64: 8, 128>}, {transform_indices = @transform_1, window_bounds = array<i64: 8, 128>}, {transform_indices = @transform_2, window_bounds = array<i64: 8, 128>}, {transform_indices = @transform_3, window_bounds = array<i64: 8, 1>}, {transform_indices = @transform_4, window_bounds = array<i64: 8, 1>}]} {
    %c0 = arith.constant 0 : index
    %c0_0 = arith.constant 0 : index
    %0 = vector.load %arg1[%c0, %c0_0] : memref<8x128xf32, #tpu.memory_space<vmem>>, vector<8x128xf32>
    %cst = arith.constant 1.33333337 : f32
    %1 = vector.broadcast %cst : f32 to vector<8x128xf32>
    %2 = arith.mulf %0, %1 : vector<8x128xf32>
    %c0_1 = arith.constant 0 : index
    %c0_2 = arith.constant 0 : index
    %3 = vector.load %arg2[%c0_1, %c0_2] : memref<8x128xf32, #tpu.memory_space<vmem>>, vector<8x128xf32>
    %c0_3 = arith.constant 0 : index
    %c0_4 = arith.constant 0 : index
    %4 = vector.load %arg3[%c0_3, %c0_4] : memref<8x128xf32, #tpu.memory_space<vmem>>, vector<8x128xf32>
    %cst_5 = arith.constant 5.000000e-01 : f32
    %5 = vector.broadcast %cst_5 : f32 to vector<8x128xf32>
    %6 = arith.cmpf ogt, %4, %5 : vector<8x128xf32>
    %cst_6 = arith.constant 0.000000e+00 : f32
    %7 = vector.broadcast %cst_6 : f32 to vector<8x128xf32>
    %8 = arith.cmpf ogt, %3, %7 : vector<8x128xf32>
    %9 = arith.andi %6, %8 : vector<8x128xi1>
    %cst_7 = arith.constant 1.000000e+00 : f32
    %cst_8 = arith.constant 0.000000e+00 : f32
    %10 = vector.broadcast %cst_7 : f32 to vector<8x128xf32>
    %11 = vector.broadcast %cst_8 : f32 to vector<8x128xf32>
    %12 = arith.select %9, %10, %11 : vector<8x128xi1>, vector<8x128xf32>
    %cst_9 = arith.constant -1.000000e+09 : f32
    %13 = vector.broadcast %cst_9 : f32 to vector<8x128xf32>
    %14 = arith.select %9, %2, %13 : vector<8x128xi1>, vector<8x128xf32>
    %cst_10 = arith.constant dense<0xFF800000> : vector<8xf32>
    %15 = vector.multi_reduction <maximumf>, %14, %cst_10 [1] : vector<8x128xf32> to vector<8xf32>
    %16 = vector.shape_cast %15 : vector<8xf32> to vector<8x1xf32>
    %17 = vector.broadcast %16 : vector<8x1xf32> to vector<8x128xf32>
    %18 = arith.subf %14, %17 : vector<8x128xf32>
    %19 = math.exp %18 : vector<8x128xf32>
    %cst_11 = arith.constant 0.000000e+00 : f32
    %20 = vector.broadcast %cst_11 : f32 to vector<8x128xf32>
    %21 = arith.select %9, %19, %20 : vector<8x128xi1>, vector<8x128xf32>
    %cst_12 = arith.constant dense<0.000000e+00> : vector<8xf32>
    %22 = vector.multi_reduction <add>, %21, %cst_12 [1] : vector<8x128xf32> to vector<8xf32>
    %23 = vector.shape_cast %22 : vector<8xf32> to vector<8x1xf32>
    %cst_13 = arith.constant 1.000000e-30 : f32
    %24 = vector.broadcast %cst_13 : f32 to vector<8x1xf32>
    %25 = arith.maximumf %23, %24 : vector<8x1xf32>
    %26 = vector.broadcast %25 : vector<8x1xf32> to vector<8x128xf32>
    %27 = arith.divf %21, %26 : vector<8x128xf32>
    %cst_14 = arith.constant 1.000000e+00 : f32
    %28 = vector.broadcast %cst_14 : f32 to vector<8x128xf32>
    %29 = arith.select %9, %27, %28 : vector<8x128xi1>, vector<8x128xf32>
    %30 = math.log %29 : vector<8x128xf32>
    %31 = arith.mulf %12, %27 : vector<8x128xf32>
    %32 = arith.mulf %31, %30 : vector<8x128xf32>
    %cst_15 = arith.constant dense<0.000000e+00> : vector<8xf32>
    %33 = vector.multi_reduction <add>, %32, %cst_15 [1] : vector<8x128xf32> to vector<8xf32>
    %34 = vector.shape_cast %33 : vector<8xf32> to vector<8x1xf32>
    %35 = tpu.iota {dimensions = array<i32: 1>} : vector<8x128xi32>
    %36 = arith.sitofp %35 : vector<8x128xi32> to vector<8x128xf32>
    %37 = vector.shape_cast %12 : vector<8x128xf32> to vector<8x1x128xf32>
    %38 = vector.shape_cast %3 : vector<8x128xf32> to vector<8x128x1xf32>
    %39 = vector.shape_cast %3 : vector<8x128xf32> to vector<8x1x128xf32>
    %40 = vector.shape_cast %36 : vector<8x128xf32> to vector<8x128x1xf32>
    %41 = vector.shape_cast %36 : vector<8x128xf32> to vector<8x1x128xf32>
    %42 = vector.broadcast %39 : vector<8x1x128xf32> to vector<8x128x128xf32>
    %43 = vector.broadcast %38 : vector<8x128x1xf32> to vector<8x128x128xf32>
    %44 = arith.cmpf olt, %42, %43 : vector<8x128x128xf32>
    %45 = vector.broadcast %39 : vector<8x1x128xf32> to vector<8x128x128xf32>
    %46 = vector.broadcast %38 : vector<8x128x1xf32> to vector<8x128x128xf32>
    %47 = arith.cmpf oeq, %45, %46 : vector<8x128x128xf32>
    %48 = vector.broadcast %41 : vector<8x1x128xf32> to vector<8x128x128xf32>
    %49 = vector.broadcast %40 : vector<8x128x1xf32> to vector<8x128x128xf32>
    %50 = arith.cmpf olt, %48, %49 : vector<8x128x128xf32>
    %51 = arith.andi %47, %50 : vector<8x128x128xi1>
    %52 = arith.ori %44, %51 : vector<8x128x128xi1>
    %cst_16 = arith.constant 1.000000e+00 : f32
    %cst_17 = arith.constant 0.000000e+00 : f32
    %53 = vector.broadcast %cst_16 : f32 to vector<8x128x128xf32>
    %54 = vector.broadcast %cst_17 : f32 to vector<8x128x128xf32>
    %55 = arith.select %52, %53, %54 : vector<8x128x128xi1>, vector<8x128x128xf32>
    %56 = vector.broadcast %37 : vector<8x1x128xf32> to vector<8x128x128xf32>
    %57 = arith.mulf %56, %55 : vector<8x128x128xf32>
    %cst_18 = arith.constant dense<0.000000e+00> : vector<8x128xf32>
    %58 = vector.multi_reduction <add>, %57, %cst_18 [2] : vector<8x128x128xf32> to vector<8x128xf32>
    %59 = vector.broadcast %41 : vector<8x1x128xf32> to vector<8x128x128xf32>
    %60 = vector.broadcast %40 : vector<8x128x1xf32> to vector<8x128x128xf32>
    %61 = arith.cmpf olt, %59, %60 : vector<8x128x128xf32>
    %cst_19 = arith.constant 1.000000e+00 : f32
    %cst_20 = arith.constant 0.000000e+00 : f32
    %62 = vector.broadcast %cst_19 : f32 to vector<8x128x128xf32>
    %63 = vector.broadcast %cst_20 : f32 to vector<8x128x128xf32>
    %64 = arith.select %61, %62, %63 : vector<8x128x128xi1>, vector<8x128x128xf32>
    %65 = vector.broadcast %37 : vector<8x1x128xf32> to vector<8x128x128xf32>
    %66 = arith.mulf %65, %64 : vector<8x128x128xf32>
    %cst_21 = arith.constant dense<0.000000e+00> : vector<8x128xf32>
    %67 = vector.multi_reduction <add>, %66, %cst_21 [2] : vector<8x128x128xf32> to vector<8x128xf32>
    %cst_22 = arith.constant 9.99999993E-9 : f32
    %68 = vector.broadcast %cst_22 : f32 to vector<8x128xf32>
    %69 = arith.addf %27, %68 : vector<8x128xf32>
    %70 = math.log %69 : vector<8x128xf32>
    %71 = vector.shape_cast %58 : vector<8x128xf32> to vector<8x128x1xf32>
    %72 = vector.shape_cast %67 : vector<8x128xf32> to vector<8x1x128xf32>
    %73 = vector.broadcast %71 : vector<8x128x1xf32> to vector<8x128x128xf32>
    %74 = vector.broadcast %72 : vector<8x1x128xf32> to vector<8x128x128xf32>
    %75 = arith.cmpf oeq, %73, %74 : vector<8x128x128xf32>
    %cst_23 = arith.constant 1.000000e+00 : f32
    %cst_24 = arith.constant 0.000000e+00 : f32
    %76 = vector.broadcast %cst_23 : f32 to vector<8x128x128xf32>
    %77 = vector.broadcast %cst_24 : f32 to vector<8x128x128xf32>
    %78 = arith.select %75, %76, %77 : vector<8x128x128xi1>, vector<8x128x128xf32>
    %79 = vector.broadcast %37 : vector<8x1x128xf32> to vector<8x128x128xf32>
    %80 = arith.mulf %78, %79 : vector<8x128x128xf32>
    %81 = vector.shape_cast %70 : vector<8x128xf32> to vector<8x1x128xf32>
    %82 = vector.broadcast %81 : vector<8x1x128xf32> to vector<8x128x128xf32>
    %83 = arith.mulf %80, %82 : vector<8x128x128xf32>
    %cst_25 = arith.constant dense<0.000000e+00> : vector<8x128xf32>
    %84 = vector.multi_reduction <add>, %83, %cst_25 [2] : vector<8x128x128xf32> to vector<8x128xf32>
    %85 = arith.mulf %12, %27 : vector<8x128xf32>
    %86 = arith.mulf %85, %84 : vector<8x128xf32>
    %cst_26 = arith.constant dense<0.000000e+00> : vector<8xf32>
    %87 = vector.multi_reduction <add>, %86, %cst_26 [1] : vector<8x128xf32> to vector<8xf32>
    %88 = vector.shape_cast %87 : vector<8xf32> to vector<8x1xf32>
    %89 = arith.subf %34, %88 : vector<8x1xf32>
    %cst_27 = arith.constant 1.000000e+00 : f32
    %cst_28 = arith.constant 0.000000e+00 : f32
    %90 = vector.broadcast %cst_27 : f32 to vector<8x128xf32>
    %91 = vector.broadcast %cst_28 : f32 to vector<8x128xf32>
    %92 = arith.select %9, %90, %91 : vector<8x128xi1>, vector<8x128xf32>
    %cst_29 = arith.constant dense<0.000000e+00> : vector<8xf32>
    %93 = vector.multi_reduction <add>, %92, %cst_29 [1] : vector<8x128xf32> to vector<8xf32>
    %94 = vector.shape_cast %93 : vector<8xf32> to vector<8x1xf32>
    %cst_30 = arith.constant dense<0.000000e+00> : vector<8xf32>
    %95 = vector.multi_reduction <add>, %12, %cst_30 [1] : vector<8x128xf32> to vector<8xf32>
    %96 = vector.shape_cast %95 : vector<8xf32> to vector<8x1xf32>
    %cst_31 = arith.constant 1.500000e+00 : f32
    %97 = vector.broadcast %cst_31 : f32 to vector<8x1xf32>
    %98 = arith.cmpf oge, %94, %97 : vector<8x1xf32>
    %cst_32 = arith.constant 5.000000e-01 : f32
    %99 = vector.broadcast %cst_32 : f32 to vector<8x1xf32>
    %100 = arith.cmpf oge, %96, %99 : vector<8x1xf32>
    %101 = arith.andi %98, %100 : vector<8x1xi1>
    %cst_33 = arith.constant 0.000000e+00 : f32
    %102 = vector.broadcast %cst_33 : f32 to vector<8x1xf32>
    %103 = arith.select %101, %89, %102 : vector<8x1xi1>, vector<8x1xf32>
    %c0_34 = arith.constant 0 : index
    %c0_35 = arith.constant 0 : index
    %104 = vector.load %arg4[%c0_34, %c0_35] : memref<8x1xf32, #tpu.memory_space<vmem>>, vector<8x1xf32>
    tpu.vector_store %arg4[%c0_34, %c0_35], %103 {strides = array<i32>} : memref<8x1xf32, #tpu.memory_space<vmem>>, vector<8x1xf32>,
    %cst_36 = arith.constant 1.000000e+00 : f32
    %cst_37 = arith.constant 0.000000e+00 : f32
    %105 = vector.broadcast %cst_36 : f32 to vector<8x1xf32>
    %106 = vector.broadcast %cst_37 : f32 to vector<8x1xf32>
    %107 = arith.select %101, %105, %106 : vector<8x1xi1>, vector<8x1xf32>
    %c0_38 = arith.constant 0 : index
    %c0_39 = arith.constant 0 : index
    %108 = vector.load %arg5[%c0_38, %c0_39] : memref<8x1xf32, #tpu.memory_space<vmem>>, vector<8x1xf32>
    tpu.vector_store %arg5[%c0_38, %c0_39], %107 {strides = array<i32>} : memref<8x1xf32, #tpu.memory_space<vmem>>, vector<8x1xf32>,
    return
  }
  func.func @transform_0(%arg0: i32) -> (i32, i32) {
    %c0_i32 = arith.constant 0 : i32
    %c0_i32_0 = arith.constant 0 : i32
    return %arg0, %c0_i32 : i32, i32
  }
  func.func @transform_1(%arg0: i32) -> (i32, i32) {
    %c0_i32 = arith.constant 0 : i32
    %c0_i32_0 = arith.constant 0 : i32
    return %arg0, %c0_i32 : i32, i32
  }
  func.func @transform_2(%arg0: i32) -> (i32, i32) {
    %c0_i32 = arith.constant 0 : i32
    %c0_i32_0 = arith.constant 0 : i32
    return %arg0, %c0_i32 : i32, i32
  }
  func.func @transform_3(%arg0: i32) -> (i32, i32) {
    %c0_i32 = arith.constant 0 : i32
    %c0_i32_0 = arith.constant 0 : i32
    return %arg0, %c0_i32 : i32, i32
  }
  func.func @transform_4(%arg0: i32) -> (i32, i32) {
    %c0_i32 = arith.constant 0 : i32
    %c0_i32_0 = arith.constant 0 : i32
    return %arg0, %c0_i32 : i32, i32
  }
}

</mosaic_0001>

<llo_original>
// kernel: tpu_custom_call.1
$region0: #{tpu_custom_call.1}
  #allocation0 [shape = 'u32[]', space=smem, size = 0x4, offset = 0x4, fixed_abs, tag = 'smem constant byte address 0x4 - core index']
  #allocation1 [shape = 'u32[144,128]{1,0:T(1,128)}', space=vmem, size = 0x12000, scoped, tag = 'internal scratch']
  %s0 = inlined_call_operand.hbm [shape: f32[8,128], index: 0, kind: input, shape index: {}]
  %s1 = inlined_call_operand.hbm [shape: f32[8,128], index: 1, kind: input, shape index: {}]
  %s2 = inlined_call_operand.hbm [shape: f32[8,128], index: 2, kind: input, shape index: {}]
  %s3 = inlined_call_operand.vmem [shape: f32[8,1], index: 3, kind: output, shape index: {0}]
  %s4 = inlined_call_operand.vmem [shape: f32[8,1], index: 4, kind: output, shape index: {1}]
  %5 = xla_tuple %s3, %s4
  %s6 = sld [smem:[#allocation0]]
  $region42: #{tpu_custom_call.1} parent=0
    _
  %s8 = ssub.s32 1, %s6
  %s9 = scalar_select 0, %s8, %s6
  $region1: #{tpu_custom_call.1} parent=0
    #allocation2 [shape = 'u8[4096]{0}', space=vmem, size = 0x1000, scoped, tag = 'input window, operand 0, single buffered']
    #allocation3 [shape = 's32[1]{0}', space=sflag, size = 0x4, scoped, tag = 'scoped memory for tpu_custom_call.1']
    #allocation4 [shape = 'u8[4096]{0}', space=vmem, size = 0x1000, scoped, tag = 'input window, operand 1, single buffered']
    #allocation5 [shape = 's32[1]{0}', space=sflag, size = 0x4, scoped, tag = 'scoped memory for tpu_custom_call.1']
    #allocation6 [shape = 'u8[4096]{0}', space=vmem, size = 0x1000, scoped, tag = 'input window, operand 2, single buffered']
    %10 = vsyncpa [#allocation3], 0
    %11 = vsyncpa [#allocation5], 0
    // Predicated region
    $region2: #{tpu_custom_call.1} parent=1 // pred_check
      _
    $region3: #{tpu_custom_call.1} parent=1 // pred_check_branch
      %13 = sbr.rel (0) target = $region5
    $region4: #{tpu_custom_call.1} parent=1 // pred_region
      %s15 = ssub.s32 128, 128
      %16 = vsyncadd [#allocation3], %s15
      %s18 = sshll.u32 [#allocation2], 4
      %s19 = int_to_ptr.vmem [resolvable:$true] %s18
      %21 = dma.hbm_to_vmem [thread:$0]  %s0, 128, %s19, [#allocation3]
    $region5: #{tpu_custom_call.1} parent=1 // pred_fallthru
      _
    // Predicated region
    $region6: #{tpu_custom_call.1} parent=1 // pred_check
      _
    $region7: #{tpu_custom_call.1} parent=1 // pred_check_branch
      %23 = sbr.rel (0) target = $region9
    $region8: #{tpu_custom_call.1} parent=1 // pred_region
      %s25 = ssub.s32 128, 128
      %26 = vsyncadd [#allocation5], %s25
      %s28 = sshll.u32 [#allocation4], 4
      %s29 = int_to_ptr.vmem [resolvable:$true] %s28
      %31 = dma.hbm_to_vmem [thread:$0]  %s1, 128, %s29, [#allocation5]
    $region9: #{tpu_custom_call.1} parent=1 // pred_fallthru
      _
    // Predicated region
    $region10: #{tpu_custom_call.1} parent=1 // pred_check
      _
    $region11: #{tpu_custom_call.1} parent=1 // pred_check_branch
      %33 = sbr.rel (0) target = $region13
    $region12: #{tpu_custom_call.1} parent=1 // pred_region
      %s35 = ssub.s32 128, 128
      %36 = vsyncadd [#allocation5], %s35
      %s38 = sshll.u32 [#allocation6], 4
      %s39 = int_to_ptr.vmem [resolvable:$true] %s38
      %41 = dma.hbm_to_vmem [thread:$0]  %s2, 128, %s39, [#allocation5]
    $region13: #{tpu_custom_call.1} parent=1 // pred_fallthru
      _
    // Predicated region
    $region14: #{tpu_custom_call.1} parent=1 // pred_check
      _
    $region15: #{tpu_custom_call.1} parent=1 // pred_check_branch
      %43 = sbr.rel (0) target = $region17
    $region16: #{tpu_custom_call.1} parent=1 // pred_region
      %44 = dma.done [#allocation3], 128
    $region17: #{tpu_custom_call.1} parent=1 // pred_fallthru
      _
    // Predicated region
    $region18: #{tpu_custom_call.1} parent=1 // pred_check
      _
    $region19: #{tpu_custom_call.1} parent=1 // pred_check_branch
      %46 = sbr.rel (0) target = $region21
    $region20: #{tpu_custom_call.1} parent=1 // pred_region
      %47 = dma.done [#allocation5], 128
    $region21: #{tpu_custom_call.1} parent=1 // pred_fallthru
      _
    // Predicated region
    $region22: #{tpu_custom_call.1} parent=1 // pred_check
      _
    $region23: #{tpu_custom_call.1} parent=1 // pred_check_branch
      %49 = sbr.rel (0) target = $region25
    $region24: #{tpu_custom_call.1} parent=1 // pred_region
      %50 = dma.done [#allocation5], 128
    $region25: #{tpu_custom_call.1} parent=1 // pred_fallthru
      _
    %v51 = vld [vmem:[#allocation2] sm:$0xff]
    %v52 = vmul.f32 %v51, 1.3333334
    %v53 = vld [vmem:[#allocation4] sm:$0xff]
    %v54 = vld [vmem:[#allocation6] sm:$0xff]
    %vm55 = vcmp.gt.f32.partialorder %v54, 0.5
    %vm56 = vcmp.gt.f32.partialorder %v53, 0.0
    %vm57 = vmand %vm55, %vm56
    %v58 = vsel %vm57, 1.0, 0.0
    %v59 = vsel %vm57, %v52, -1e+09
    %60 = vmax.xlane.f32.xlu0 %v59
    %v61 = vpop.xlane.xlu0 %60
    %v62 = vsub.f32 %v59, %v61
    %v63 = vmul.f32 %v62, 1.442695
    %v64 = vpow.pop %v63
    %v65 = vsel %vm57, %v64, 0.0
    %66 = vadd.xlane.f32.xlu0 %v65
    %v67 = vpop.xlane.xlu0 %66
    %v68 = vmax.f32 %v67, 1e-30
    %v69 = vrcp.pop %v68
    %v70 = vmul.f32 %v65, %v69
    %v71 = vsel %vm57, %v70, 1.0
    %v72 = vlog2.pop %v71
    %v73 = vmul.f32 %v72, 0.6931472
    %v74 = vmul.f32 %v58, %v70
    %v75 = vmul.f32 %v74, %v73
    %76 = vadd.xlane.f32.xlu0 %v75
    %v77 = vpop.xlane.xlu0 %76
    %v78 = vlaneseq
    %v79 = vand.u32 %v78, 127
    %v80 = vcvt.s32.f32 %v79
    %v82 = vcombine.high %v58, %v58
    %v84 = vunpack.c.l.s4 1966171168
    %v85 = vunpack.c.0.s8 %v84
    %v86 = vlaneseq
    %v87 = vshrl.u32 %v86, 7
    %v88 = vsub.s32 %v85, %v87
    %v89 = vrot.slane %v58, %v88
    %v91 = vunpack.c.l.s4 1966171168
    %v92 = vunpack.c.0.s8 %v91
    %v93 = vlaneseq
    %v94 = vshrl.u32 %v93, 7
    %v95 = vsub.s32 %v92, %v94
    %v96 = vrot.slane %v82, %v95
    %v97 = vcombine.high %v89, %v89
    %v98 = vcombine.high %v96, %v96
    %v100 = vunpack.c.l.s4 1966171168
    %v101 = vunpack.c.0.s8 %v100
    %v102 = vlaneseq
    %v103 = vshrl.u32 %v102, 7
    %v104 = vsub.s32 %v101, %v103
    %v105 = vrot.slane %v89, %v104
    %v107 = vunpack.c.l.s4 1966171168
    %v108 = vunpack.c.0.s8 %v107
    %v109 = vlaneseq
    %v110 = vshrl.u32 %v109, 7
    %v111 = vsub.s32 %v108, %v110
    %v112 = vrot.slane %v96, %v111
    %v114 = vunpack.c.l.s4 1966171168
    %v115 = vunpack.c.0.s8 %v114
    %v116 = vlaneseq
    %v117 = vshrl.u32 %v116, 7
    %v118 = vsub.s32 %v115, %v117
    %v119 = vrot.slane %v97, %v118
    %v121 = vunpack.c.l.s4 1966171168
    %v122 = vunpack.c.0.s8 %v121
    %v123 = vlaneseq
    %v124 = vshrl.u32 %v123, 7
    %v125 = vsub.s32 %v122, %v124
    %v126 = vrot.slane %v98, %v125
    %v127 = vcombine.high %v105, %v105
    %v128 = vcombine.high %v112, %v112
    %v129 = vcombine.high %v119, %v119
    %v130 = vcombine.high %v126, %v126
    %v131 = vlaneseq
    %v132 = vshrl.u32 %v131, 7
    %v133 = vsub.s32 0, %v132
    %v134 = vrot.slane %v53, %v133
    %136 = vbcast.lane.b32.xlu0 %v134, 256
    %v137 = vpop.permute.xlu0 %136
    %s139 = sor.u32 256, 8
    %140 = vbcast.lane.b32.xlu0 %v134, %s139
    %v141 = vpop.permute.xlu0 %140
    %s143 = sor.u32 256, 16
    %144 = vbcast.lane.b32.xlu0 %v134, %s143
    %v145 = vpop.permute.xlu0 %144
    %s147 = sor.u32 256, 24
    %148 = vbcast.lane.b32.xlu0 %v134, %s147
    %v149 = vpop.permute.xlu0 %148
    %s151 = sor.u32 256, 32
    %152 = vbcast.lane.b32.xlu0 %v134, %s151
    %v153 = vpop.permute.xlu0 %152
    %s155 = sor.u32 256, 40
    %156 = vbcast.lane.b32.xlu0 %v134, %s155
    %v157 = vpop.permute.xlu0 %156
    %s159 = sor.u32 256, 48
    %160 = vbcast.lane.b32.xlu0 %v134, %s159
    %v161 = vpop.permute.xlu0 %160
    %s163 = sor.u32 256, 56
    %164 = vbcast.lane.b32.xlu0 %v134, %s163
    %v165 = vpop.permute.xlu0 %164
    %s167 = sor.u32 256, 64
    %168 = vbcast.lane.b32.xlu0 %v134, %s167
    %v169 = vpop.permute.xlu0 %168
    %s171 = sor.u32 256, 72
    %172 = vbcast.lane.b32.xlu0 %v134, %s171
    %v173 = vpop.permute.xlu0 %172
    %s175 = sor.u32 256, 80
    %176 = vbcast.lane.b32.xlu0 %v134, %s175
    %v177 = vpop.permute.xlu0 %176
    %s179 = sor.u32 256, 88
    %180 = vbcast.lane.b32.xlu0 %v134, %s179
    %v181 = vpop.permute.xlu0 %180
    %s183 = sor.u32 256, 96
    %184 = vbcast.lane.b32.xlu0 %v134, %s183
    %v185 = vpop.permute.xlu0 %184
    %s187 = sor.u32 256, 104
    %188 = vbcast.lane.b32.xlu0 %v134, %s187
    %v189 = vpop.permute.xlu0 %188
    %s191 = sor.u32 256, 112
    %192 = vbcast.lane.b32.xlu0 %v134, %s191
    %v193 = vpop.permute.xlu0 %192
    %s195 = sor.u32 256, 120
    %196 = vbcast.lane.b32.xlu0 %v134, %s195
    %v197 = vpop.permute.xlu0 %196
    %v198 = vlaneseq
    %v199 = vshrl.u32 %v198, 7
    %v200 = vsub.s32 1, %v199
    %v201 = vrot.slane %v53, %v200
    %203 = vbcast.lane.b32.xlu0 %v201, 256
    %v204 = vpop.permute.xlu0 %203
    %s206 = sor.u32 256, 8
    %207 = vbcast.lane.b32.xlu0 %v201, %s206
    %v208 = vpop.permute.xlu0 %207
    %s210 = sor.u32 256, 16
    %211 = vbcast.lane.b32.xlu0 %v201, %s210
    %v212 = vpop.permute.xlu0 %211
    %s214 = sor.u32 256, 24
    %215 = vbcast.lane.b32.xlu0 %v201, %s214
    %v216 = vpop.permute.xlu0 %215
    %s218 = sor.u32 256, 32
    %219 = vbcast.lane.b32.xlu0 %v201, %s218
    %v220 = vpop.permute.xlu0 %219
    %s222 = sor.u32 256, 40
    %223 = vbcast.lane.b32.xlu0 %v201, %s222
    %v224 = vpop.permute.xlu0 %223
    %s226 = sor.u32 256, 48
    %227 = vbcast.lane.b32.xlu0 %v201, %s226
    %v228 = vpop.permute.xlu0 %227
    %s230 = sor.u32 256, 56
    %231 = vbcast.lane.b32.xlu0 %v201, %s230
    %v232 = vpop.permute.xlu0 %231
    %s234 = sor.u32 256, 64
    %235 = vbcast.lane.b32.xlu0 %v201, %s234
    %v236 = vpop.permute.xlu0 %235
    %s238 = sor.u32 256, 72
    %239 = vbcast.lane.b32.xlu0 %v201, %s238
    %v240 = vpop.permute.xlu0 %239
    %s242 = sor.u32 256, 80
    %243 = vbcast.lane.b32.xlu0 %v201, %s242
    %v244 = vpop.permute.xlu0 %243
    %s246 = sor.u32 256, 88
    %247 = vbcast.lane.b32.xlu0 %v201, %s246
    %v248 = vpop.permute.xlu0 %247
    %s250 = sor.u32 256, 96
    %251 = vbcast.lane.b32.xlu0 %v201, %s250
    %v252 = vpop.permute.xlu0 %251
    %s254 = sor.u32 256, 104
    %255 = vbcast.lane.b32.xlu0 %v201, %s254
    %v256 = vpop.permute.xlu0 %255
    %s258 = sor.u32 256, 112
    %259 = vbcast.lane.b32.xlu0 %v201, %s258
    %v260 = vpop.permute.xlu0 %259
    %s262 = sor.u32 256, 120
    %263 = vbcast.lane.b32.xlu0 %v201, %s262
    %v264 = vpop.permute.xlu0 %263
    %v265 = vlaneseq
    %v266 = vshrl.u32 %v265, 7
    %v267 = vsub.s32 2, %v266
    %v268 = vrot.slane %v53, %v267
    %270 = vbcast.lane.b32.xlu0 %v268, 256
    %v271 = vpop.permute.xlu0 %270
    %s273 = sor.u32 256, 8
    %274 = vbcast.lane.b32.xlu0 %v268, %s273
    %v275 = vpop.permute.xlu0 %274
    %s277 = sor.u32 256, 16
    %278 = vbcast.lane.b32.xlu0 %v268, %s277
    %v279 = vpop.permute.xlu0 %278
    %s281 = sor.u32 256, 24
    %282 = vbcast.lane.b32.xlu0 %v268, %s281
    %v283 = vpop.permute.xlu0 %282
    %s285 = sor.u32 256, 32
    %286 = vbcast.lane.b32.xlu0 %v268, %s285
    %v287 = vpop.permute.xlu0 %286
    %s289 = sor.u32 256, 40
    %290 = vbcast.lane.b32.xlu0 %v268, %s289
    %v291 = vpop.permute.xlu0 %290
    %s293 = sor.u32 256, 48
    %294 = vbcast.lane.b32.xlu0 %v268, %s293
    %v295 = vpop.permute.xlu0 %294
    %s297 = sor.u32 256, 56
    %298 = vbcast.lane.b32.xlu0 %v268, %s297
    %v299 = vpop.permute.xlu0 %298
    %s301 = sor.u32 256, 64
    %302 = vbcast.lane.b32.xlu0 %v268, %s301
    %v303 = vpop.permute.xlu0 %302
    %s305 = sor.u32 256, 72
    %306 = vbcast.lane.b32.xlu0 %v268, %s305
    %v307 = vpop.permute.xlu0 %306
    %s309 = sor.u32 256, 80
    %310 = vbcast.lane.b32.xlu0 %v268, %s309
    %v311 = vpop.permute.xlu0 %310
    %s313 = sor.u32 256, 88
    %314 = vbcast.lane.b32.xlu0 %v268, %s313
    %v315 = vpop.permute.xlu0 %314
    %s317 = sor.u32 256, 96
    %318 = vbcast.lane.b32.xlu0 %v268, %s317
    %v319 = vpop.permute.xlu0 %318
    %s321 = sor.u32 256, 104
    %322 = vbcast.lane.b32.xlu0 %v268, %s321
    %v323 = vpop.permute.xlu0 %322
    %s325 = sor.u32 256, 112
    %326 = vbcast.lane.b32.xlu0 %v268, %s325
    %v327 = vpop.permute.xlu0 %326
    %s329 = sor.u32 256, 120
    %330 = vbcast.lane.b32.xlu0 %v268, %s329
    %v331 = vpop.permute.xlu0 %330
    %v332 = vlaneseq
    %v333 = vshrl.u32 %v332, 7
    %v334 = vsub.s32 3, %v333
    %v335 = vrot.slane %v53, %v334
    %337 = vbcast.lane.b32.xlu0 %v335, 256
    %v338 = vpop.permute.xlu0 %337
    %s340 = sor.u32 256, 8
    %341 = vbcast.lane.b32.xlu0 %v335, %s340
    %v342 = vpop.permute.xlu0 %341
    %s344 = sor.u32 256, 16
    %345 = vbcast.lane.b32.xlu0 %v335, %s344
    %v346 = vpop.permute.xlu0 %345
    %s348 = sor.u32 256, 24
    %349 = vbcast.lane.b32.xlu0 %v335, %s348
    %v350 = vpop.permute.xlu0 %349
    %s352 = sor.u32 256, 32
    %353 = vbcast.lane.b32.xlu0 %v335, %s352
    %v354 = vpop.permute.xlu0 %353
    %s356 = sor.u32 256, 40
    %357 = vbcast.lane.b32.xlu0 %v335, %s356
    %v358 = vpop.permute.xlu0 %357
    %s360 = sor.u32 256, 48
    %361 = vbcast.lane.b32.xlu0 %v335, %s360
    %v362 = vpop.permute.xlu0 %361
    %s364 = sor.u32 256, 56
    %365 = vbcast.lane.b32.xlu0 %v335, %s364
    %v366 = vpop.permute.xlu0 %365
    %s368 = sor.u32 256, 64
    %369 = vbcast.lane.b32.xlu0 %v335, %s368
    %v370 = vpop.permute.xlu0 %369
    %s372 = sor.u32 256, 72
    %373 = vbcast.lane.b32.xlu0 %v335, %s372
    %v374 = vpop.permute.xlu0 %373
    %s376 = sor.u32 256, 80
    %377 = vbcast.lane.b32.xlu0 %v335, %s376
    %v378 = vpop.permute.xlu0 %377
    %s380 = sor.u32 256, 88
    %381 = vbcast.lane.b32.xlu0 %v335, %s380
    %v382 = vpop.permute.xlu0 %381
    %s384 = sor.u32 256, 96
    %385 = vbcast.lane.b32.xlu0 %v335, %s384
    %v386 = vpop.permute.xlu0 %385
    %s388 = sor.u32 256, 104
    %389 = vbcast.lane.b32.xlu0 %v335, %s388
    %v390 = vpop.permute.xlu0 %389
    %s392 = sor.u32 256, 112
    %393 = vbcast.lane.b32.xlu0 %v335, %s392
    %v394 = vpop.permute.xlu0 %393
    %s396 = sor.u32 256, 120
    %397 = vbcast.lane.b32.xlu0 %v335, %s396
    %v398 = vpop.permute.xlu0 %397
    %v399 = vlaneseq
    %v400 = vshrl.u32 %v399, 7
    %v401 = vsub.s32 4, %v400
    %v402 = vrot.slane %v53, %v401
    %404 = vbcast.lane.b32.xlu0 %v402, 256
    %v405 = vpop.permute.xlu0 %404
    %s407 = sor.u32 256, 8
    %408 = vbcast.lane.b32.xlu0 %v402, %s407
    %v409 = vpop.permute.xlu0 %408
    %s411 = sor.u32 256, 16
    %412 = vbcast.lane.b32.xlu0 %v402, %s411
    %v413 = vpop.permute.xlu0 %412
    %s415 = sor.u32 256, 24
    %416 = vbcast.lane.b32.xlu0 %v402, %s415
    %v417 = vpop.permute.xlu0 %416
    %s419 = sor.u32 256, 32
    %420 = vbcast.lane.b32.xlu0 %v402, %s419
    %v421 = vpop.permute.xlu0 %420
    %s423 = sor.u32 256, 40
    %424 = vbcast.lane.b32.xlu0 %v402, %s423
    %v425 = vpop.permute.xlu0 %424
    %s427 = sor.u32 256, 48
    %428 = vbcast.lane.b32.xlu0 %v402, %s427
    %v429 = vpop.permute.xlu0 %428
    %s431 = sor.u32 256, 56
    %432 = vbcast.lane.b32.xlu0 %v402, %s431
    %v433 = vpop.permute.xlu0 %432
    %s435 = sor.u32 256, 64
    %436 = vbcast.lane.b32.xlu0 %v402, %s435
    %v437 = vpop.permute.xlu0 %436
    %s439 = sor.u32 256, 72
    %440 = vbcast.lane.b32.xlu0 %v402, %s439
    %v441 = vpop.permute.xlu0 %440
    %s443 = sor.u32 256, 80
    %444 = vbcast.lane.b32.xlu0 %v402, %s443
    %v445 = vpop.permute.xlu0 %444
    %s447 = sor.u32 256, 88
    %448 = vbcast.lane.b32.xlu0 %v402, %s447
    %v449 = vpop.permute.xlu0 %448
    %s451 = sor.u32 256, 96
    %452 = vbcast.lane.b32.xlu0 %v402, %s451
    %v453 = vpop.permute.xlu0 %452
    %s455 = sor.u32 256, 104
    %456 = vbcast.lane.b32.xlu0 %v402, %s455
    %v457 = vpop.permute.xlu0 %456
    %s459 = sor.u32 256, 112
    %460 = vbcast.lane.b32.xlu0 %v402, %s459
    %v461 = vpop.permute.xlu0 %460
    %s463 = sor.u32 256, 120
    %464 = vbcast.lane.b32.xlu0 %v402, %s463
    %v465 = vpop.permute.xlu0 %464
    %v466 = vlaneseq
    %v467 = vshrl.u32 %v466, 7
    %v468 = vsub.s32 5, %v467
    %v469 = vrot.slane %v53, %v468
    %471 = vbcast.lane.b32.xlu0 %v469, 256
    %v472 = vpop.permute.xlu0 %471
    %s474 = sor.u32 256, 8
    %475 = vbcast.lane.b32.xlu0 %v469, %s474
    %v476 = vpop.permute.xlu0 %475
    %s478 = sor.u32 256, 16
    %479 = vbcast.lane.b32.xlu0 %v469, %s478
    %v480 = vpop.permute.xlu0 %479
    %s482 = sor.u32 256, 24
    %483 = vbcast.lane.b32.xlu0 %v469, %s482
    %v484 = vpop.permute.xlu0 %483
    %s486 = sor.u32 256, 32
    %487 = vbcast.lane.b32.xlu0 %v469, %s486
    %v488 = vpop.permute.xlu0 %487
    %s490 = sor.u32 256, 40
    %491 = vbcast.lane.b32.xlu0 %v469, %s490
    %v492 = vpop.permute.xlu0 %491
    %s494 = sor.u32 256, 48
    %495 = vbcast.lane.b32.xlu0 %v469, %s494
    %v496 = vpop.permute.xlu0 %495
    %s498 = sor.u32 256, 56
    %499 = vbcast.lane.b32.xlu0 %v469, %s498
    %v500 = vpop.permute.xlu0 %499
    %s502 = sor.u32 256, 64
    %503 = vbcast.lane.b32.xlu0 %v469, %s502
    %v504 = vpop.permute.xlu0 %503
    %s506 = sor.u32 256, 72
    %507 = vbcast.lane.b32.xlu0 %v469, %s506
    %v508 = vpop.permute.xlu0 %507
    %s510 = sor.u32 256, 80
    %511 = vbcast.lane.b32.xlu0 %v469, %s510
    %v512 = vpop.permute.xlu0 %511
    %s514 = sor.u32 256, 88
    %515 = vbcast.lane.b32.xlu0 %v469, %s514
    %v516 = vpop.permute.xlu0 %515
    %s518 = sor.u32 256, 96
    %519 = vbcast.lane.b32.xlu0 %v469, %s518
    %v520 = vpop.permute.xlu0 %519
    %s522 = sor.u32 256, 104
    %523 = vbcast.lane.b32.xlu0 %v469, %s522
    %v524 = vpop.permute.xlu0 %523
    %s526 = sor.u32 256, 112
    %527 = vbcast.lane.b32.xlu0 %v469, %s526
    %v528 = vpop.permute.xlu0 %527
    %s530 = sor.u32 256, 120
    %531 = vbcast.lane.b32.xlu0 %v469, %s530
    %v532 = vpop.permute.xlu0 %531
    %v533 = vlaneseq
    %v534 = vshrl.u32 %v533, 7
    %v535 = vsub.s32 6, %v534
    %v536 = vrot.slane %v53, %v535
    %538 = vbcast.lane.b32.xlu0 %v536, 256
    %v539 = vpop.permute.xlu0 %538
    %s541 = sor.u32 256, 8
    %542 = vbcast.lane.b32.xlu0 %v536, %s541
    %v543 = vpop.permute.xlu0 %542
    %s545 = sor.u32 256, 16
    %546 = vbcast.lane.b32.xlu0 %v536, %s545
    %v547 = vpop.permute.xlu0 %546
    %s549 = sor.u32 256, 24
    %550 = vbcast.lane.b32.xlu0 %v536, %s549
    %v551 = vpop.permute.xlu0 %550
    %s553 = sor.u32 256, 32
    %554 = vbcast.lane.b32.xlu0 %v536, %s553
    %v555 = vpop.permute.xlu0 %554
    %s557 = sor.u32 256, 40
    %558 = vbcast.lane.b32.xlu0 %v536, %s557
    %v559 = vpop.permute.xlu0 %558
    %s561 = sor.u32 256, 48
    %562 = vbcast.lane.b32.xlu0 %v536, %s561
    %v563 = vpop.permute.xlu0 %562
    %s565 = sor.u32 256, 56
    %566 = vbcast.lane.b32.xlu0 %v536, %s565
    %v567 = vpop.permute.xlu0 %566
    %s569 = sor.u32 256, 64
    %570 = vbcast.lane.b32.xlu0 %v536, %s569
    %v571 = vpop.permute.xlu0 %570
    %s573 = sor.u32 256, 72
    %574 = vbcast.lane.b32.xlu0 %v536, %s573
    %v575 = vpop.permute.xlu0 %574
    %s577 = sor.u32 256, 80
    %578 = vbcast.lane.b32.xlu0 %v536, %s577
    %v579 = vpop.permute.xlu0 %578
    %s581 = sor.u32 256, 88
    %582 = vbcast.lane.b32.xlu0 %v536, %s581
    %v583 = vpop.permute.xlu0 %582
    %s585 = sor.u32 256, 96
    %586 = vbcast.lane.b32.xlu0 %v536, %s585
    %v587 = vpop.permute.xlu0 %586
    %s589 = sor.u32 256, 104
    %590 = vbcast.lane.b32.xlu0 %v536, %s589
    %v591 = vpop.permute.xlu0 %590
    %s593 = sor.u32 256, 112
    %594 = vbcast.lane.b32.xlu0 %v536, %s593
    %v595 = vpop.permute.xlu0 %594
    %s597 = sor.u32 256, 120
    %598 = vbcast.lane.b32.xlu0 %v536, %s597
    %v599 = vpop.permute.xlu0 %598
    %v600 = vlaneseq
    %v601 = vshrl.u32 %v600, 7
    %v602 = vsub.s32 7, %v601
    %v603 = vrot.slane %v53, %v602
    %605 = vbcast.lane.b32.xlu0 %v603, 256
    %v606 = vpop.permute.xlu0 %605
    %s608 = sor.u32 256, 8
    %609 = vbcast.lane.b32.xlu0 %v603, %s608
    %v610 = vpop.permute.xlu0 %609
    %s612 = sor.u32 256, 16
    %613 = vbcast.lane.b32.xlu0 %v603, %s612
    %v614 = vpop.permute.xlu0 %613
    %s616 = sor.u32 256, 24
    %617 = vbcast.lane.b32.xlu0 %v603, %s616
    %v618 = vpop.permute.xlu0 %617
    %s620 = sor.u32 256, 32
    %621 = vbcast.lane.b32.xlu0 %v603, %s620
    %v622 = vpop.permute.xlu0 %621
    %s624 = sor.u32 256, 40
    %625 = vbcast.lane.b32.xlu0 %v603, %s624
    %v626 = vpop.permute.xlu0 %625
    %s628 = sor.u32 256, 48
    %629 = vbcast.lane.b32.xlu0 %v603, %s628
    %v630 = vpop.permute.xlu0 %629
    %s632 = sor.u32 256, 56
    %633 = vbcast.lane.b32.xlu0 %v603, %s632
    %v634 = vpop.permute.xlu0 %633
    %s636 = sor.u32 256, 64
    %637 = vbcast.lane.b32.xlu0 %v603, %s636
    %v638 = vpop.permute.xlu0 %637
    %s640 = sor.u32 256, 72
    %641 = vbcast.lane.b32.xlu0 %v603, %s640
    %v642 = vpop.permute.xlu0 %641
    %s644 = sor.u32 256, 80
    %645 = vbcast.lane.b32.xlu0 %v603, %s644
    %v646 = vpop.permute.xlu0 %645
    %s648 = sor.u32 256, 88
    %649 = vbcast.lane.b32.xlu0 %v603, %s648
    %v650 = vpop.permute.xlu0 %649
    %s652 = sor.u32 256, 96
    %653 = vbcast.lane.b32.xlu0 %v603, %s652
    %v654 = vpop.permute.xlu0 %653
    %s656 = sor.u32 256, 104
    %657 = vbcast.lane.b32.xlu0 %v603, %s656
    %v658 = vpop.permute.xlu0 %657
    %s660 = sor.u32 256, 112
    %661 = vbcast.lane.b32.xlu0 %v603, %s660
    %v662 = vpop.permute.xlu0 %661
    %s664 = sor.u32 256, 120
    %665 = vbcast.lane.b32.xlu0 %v603, %s664
    %v666 = vpop.permute.xlu0 %665
    %v668 = vcombine.high %v53, %v53
    %v670 = vunpack.c.l.s4 1966171168
    %v671 = vunpack.c.0.s8 %v670
    %v672 = vlaneseq
    %v673 = vshrl.u32 %v672, 7
    %v674 = vsub.s32 %v671, %v673
    %v675 = vrot.slane %v53, %v674
    %v677 = vunpack.c.l.s4 1966171168
    %v678 = vunpack.c.0.s8 %v677
    %v679 = vlaneseq
    %v680 = vshrl.u32 %v679, 7
    %v681 = vsub.s32 %v678, %v680
    %v682 = vrot.slane %v668, %v681
    %v683 = vcombine.high %v675, %v675
    %v684 = vcombine.high %v682, %v682
    %v686 = vunpack.c.l.s4 1966171168
    %v687 = vunpack.c.0.s8 %v686
    %v688 = vlaneseq
    %v689 = vshrl.u32 %v688, 7
    %v690 = vsub.s32 %v687, %v689
    %v691 = vrot.slane %v675, %v690
    %v693 = vunpack.c.l.s4 1966171168
    %v694 = vunpack.c.0.s8 %v693
    %v695 = vlaneseq
    %v696 = vshrl.u32 %v695, 7
    %v697 = vsub.s32 %v694, %v696
    %v698 = vrot.slane %v682, %v697
    %v700 = vunpack.c.l.s4 1966171168
    %v701 = vunpack.c.0.s8 %v700
    %v702 = vlaneseq
    %v703 = vshrl.u32 %v702, 7
    %v704 = vsub.s32 %v701, %v703
    %v705 = vrot.slane %v683, %v704
    %v707 = vunpack.c.l.s4 1966171168
    %v708 = vunpack.c.0.s8 %v707
    %v709 = vlaneseq
    %v710 = vshrl.u32 %v709, 7
    %v711 = vsub.s32 %v708, %v710
    %v712 = vrot.slane %v684, %v711
    %v713 = vcombine.high %v691, %v691
    %v714 = vcombine.high %v698, %v698
    %v715 = vcombine.high %v705, %v705
    %v716 = vcombine.high %v712, %v712
    %718 = vbcast.lane.b32.xlu0 %v80, 256
    %v719 = vpop.permute.xlu0 %718
    %s721 = sor.u32 256, 8
    %722 = vbcast.lane.b32.xlu0 %v80, %s721
    %v723 = vpop.permute.xlu0 %722
    %s725 = sor.u32 256, 16
    %726 = vbcast.lane.b32.xlu0 %v80, %s725
    %v727 = vpop.permute.xlu0 %726
    %s729 = sor.u32 256, 24
    %730 = vbcast.lane.b32.xlu0 %v80, %s729
    %v731 = vpop.permute.xlu0 %730
    %s733 = sor.u32 256, 32
    %734 = vbcast.lane.b32.xlu0 %v80, %s733
    %v735 = vpop.permute.xlu0 %734
    %s737 = sor.u32 256, 40
    %738 = vbcast.lane.b32.xlu0 %v80, %s737
    %v739 = vpop.permute.xlu0 %738
    %s741 = sor.u32 256, 48
    %742 = vbcast.lane.b32.xlu0 %v80, %s741
    %v743 = vpop.permute.xlu0 %742
    %s745 = sor.u32 256, 56
    %746 = vbcast.lane.b32.xlu0 %v80, %s745
    %v747 = vpop.permute.xlu0 %746
    %s749 = sor.u32 256, 64
    %750 = vbcast.lane.b32.xlu0 %v80, %s749
    %v751 = vpop.permute.xlu0 %750
    %s753 = sor.u32 256, 72
    %754 = vbcast.lane.b32.xlu0 %v80, %s753
    %v755 = vpop.permute.xlu0 %754
    %s757 = sor.u32 256, 80
    %758 = vbcast.lane.b32.xlu0 %v80, %s757
    %v759 = vpop.permute.xlu0 %758
    %s761 = sor.u32 256, 88
    %762 = vbcast.lane.b32.xlu0 %v80, %s761
    %v763 = vpop.permute.xlu0 %762
    %s765 = sor.u32 256, 96
    %766 = vbcast.lane.b32.xlu0 %v80, %s765
    %v767 = vpop.permute.xlu0 %766
    %s769 = sor.u32 256, 104
    %770 = vbcast.lane.b32.xlu0 %v80, %s769
    %v771 = vpop.permute.xlu0 %770
    %s773 = sor.u32 256, 112
    %774 = vbcast.lane.b32.xlu0 %v80, %s773
    %v775 = vpop.permute.xlu0 %774
    %s777 = sor.u32 256, 120
    %778 = vbcast.lane.b32.xlu0 %v80, %s777
    %v779 = vpop.permute.xlu0 %778
    %v781 = vcombine.high %v80, %v80
    %v783 = vunpack.c.l.s4 1966171168
    %v784 = vunpack.c.0.s8 %v783
    %v785 = vlaneseq
    %v786 = vshrl.u32 %v785, 7
    %v787 = vsub.s32 %v784, %v786
    %v788 = vrot.slane %v80, %v787
    %v790 = vunpack.c.l.s4 1966171168
    %v791 = vunpack.c.0.s8 %v790
    %v792 = vlaneseq
    %v793 = vshrl.u32 %v792, 7
    %v794 = vsub.s32 %v791, %v793
    %v795 = vrot.slane %v781, %v794
    %v796 = vcombine.high %v788, %v788
    %v797 = vcombine.high %v795, %v795
    %v799 = vunpack.c.l.s4 1966171168
    %v800 = vunpack.c.0.s8 %v799
    %v801 = vlaneseq
    %v802 = vshrl.u32 %v801, 7
    %v803 = vsub.s32 %v800, %v802
    %v804 = vrot.slane %v788, %v803
    %v806 = vunpack.c.l.s4 1966171168
    %v807 = vunpack.c.0.s8 %v806
    %v808 = vlaneseq
    %v809 = vshrl.u32 %v808, 7
    %v810 = vsub.s32 %v807, %v809
    %v811 = vrot.slane %v795, %v810
    %v813 = vunpack.c.l.s4 1966171168
    %v814 = vunpack.c.0.s8 %v813
    %v815 = vlaneseq
    %v816 = vshrl.u32 %v815, 7
    %v817 = vsub.s32 %v814, %v816
    %v818 = vrot.slane %v796, %v817
    %v820 = vunpack.c.l.s4 1966171168
    %v821 = vunpack.c.0.s8 %v820
    %v822 = vlaneseq
    %v823 = vshrl.u32 %v822, 7
    %v824 = vsub.s32 %v821, %v823
    %v825 = vrot.slane %v797, %v824
    %v826 = vcombine.high %v804, %v804
    %v827 = vcombine.high %v811, %v811
    %v828 = vcombine.high %v818, %v818
    %v829 = vcombine.high %v825, %v825
    %v830 = vlaneseq
    %v831 = vshrl.u32 %v830, 7
    %v832 = vsub.s32 0, %v831
    %v833 = vrot.slane %v691, %v832
    %v834 = vlaneseq
    %v835 = vshrl.u32 %v834, 7
    %v836 = vsub.s32 0, %v835
    %v837 = vrot.slane %v705, %v836
    %v838 = vlaneseq
    %v839 = vshrl.u32 %v838, 7
    %v840 = vsub.s32 0, %v839
    %v841 = vrot.slane %v713, %v840
    %v842 = vlaneseq
    %v843 = vshrl.u32 %v842, 7
    %v844 = vsub.s32 0, %v843
    %v845 = vrot.slane %v715, %v844
    %v846 = vlaneseq
    %v847 = vshrl.u32 %v846, 7
    %v848 = vsub.s32 0, %v847
    %v849 = vrot.slane %v698, %v848
    %v850 = vlaneseq
    %v851 = vshrl.u32 %v850, 7
    %v852 = vsub.s32 0, %v851
    %v853 = vrot.slane %v712, %v852
    %v854 = vlaneseq
    %v855 = vshrl.u32 %v854, 7
    %v856 = vsub.s32 0, %v855
    %v857 = vrot.slane %v714, %v856
    %v858 = vlaneseq
    %v859 = vshrl.u32 %v858, 7
    %v860 = vsub.s32 0, %v859
    %v861 = vrot.slane %v716, %v860
    %vm870 = vcmp.lt.f32.partialorder %v833, %v137
    %vm871 = vcmp.lt.f32.partialorder %v833, %v141
    %vm872 = vcmp.lt.f32.partialorder %v833, %v145
    %vm873 = vcmp.lt.f32.partialorder %v833, %v149
    %vm874 = vcmp.lt.f32.partialorder %v833, %v153
    %vm875 = vcmp.lt.f32.partialorder %v833, %v157
    %vm876 = vcmp.lt.f32.partialorder %v833, %v161
    %vm877 = vcmp.lt.f32.partialorder %v833, %v165
    %vm878 = vcmp.lt.f32.partialorder %v833, %v169
    %vm879 = vcmp.lt.f32.partialorder %v833, %v173
    %vm880 = vcmp.lt.f32.partialorder %v833, %v177
    %vm881 = vcmp.lt.f32.partialorder %v833, %v181
    %vm882 = vcmp.lt.f32.partialorder %v833, %v185
    %vm883 = vcmp.lt.f32.partialorder %v833, %v189
    %vm884 = vcmp.lt.f32.partialorder %v833, %v193
    %vm885 = vcmp.lt.f32.partialorder %v833, %v197
    %vm886 = vcmp.lt.f32.partialorder %v837, %v204
    %vm887 = vcmp.lt.f32.partialorder %v837, %v208
    %vm888 = vcmp.lt.f32.partialorder %v837, %v212
    %vm889 = vcmp.lt.f32.partialorder %v837, %v216
    %vm890 = vcmp.lt.f32.partialorder %v837, %v220
    %vm891 = vcmp.lt.f32.partialorder %v837, %v224
    %vm892 = vcmp.lt.f32.partialorder %v837, %v228
    %vm893 = vcmp.lt.f32.partialorder %v837, %v232
    %vm894 = vcmp.lt.f32.partialorder %v837, %v236
    %vm895 = vcmp.lt.f32.partialorder %v837, %v240
    %vm896 = vcmp.lt.f32.partialorder %v837, %v244
    %vm897 = vcmp.lt.f32.partialorder %v837, %v248
    %vm898 = vcmp.lt.f32.partialorder %v837, %v252
    %vm899 = vcmp.lt.f32.partialorder %v837, %v256
    %vm900 = vcmp.lt.f32.partialorder %v837, %v260
    %vm901 = vcmp.lt.f32.partialorder %v837, %v264
    %vm902 = vcmp.lt.f32.partialorder %v841, %v271
    %vm903 = vcmp.lt.f32.partialorder %v841, %v275
    %vm904 = vcmp.lt.f32.partialorder %v841, %v279
    %vm905 = vcmp.lt.f32.partialorder %v841, %v283
    %vm906 = vcmp.lt.f32.partialorder %v841, %v287
    %vm907 = vcmp.lt.f32.partialorder %v841, %v291
    %vm908 = vcmp.lt.f32.partialorder %v841, %v295
    %vm909 = vcmp.lt.f32.partialorder %v841, %v299
    %vm910 = vcmp.lt.f32.partialorder %v841, %v303
    %vm911 = vcmp.lt.f32.partialorder %v841, %v307
    %vm912 = vcmp.lt.f32.partialorder %v841, %v311
    %vm913 = vcmp.lt.f32.partialorder %v841, %v315
    %vm914 = vcmp.lt.f32.partialorder %v841, %v319
    %vm915 = vcmp.lt.f32.partialorder %v841, %v323
    %vm916 = vcmp.lt.f32.partialorder %v841, %v327
    %vm917 = vcmp.lt.f32.partialorder %v841, %v331
    %vm918 = vcmp.lt.f32.partialorder %v845, %v338
    %vm919 = vcmp.lt.f32.partialorder %v845, %v342
    %vm920 = vcmp.lt.f32.partialorder %v845, %v346
    %vm921 = vcmp.lt.f32.partialorder %v845, %v350
    %vm922 = vcmp.lt.f32.partialorder %v845, %v354
    %vm923 = vcmp.lt.f32.partialorder %v845, %v358
    %vm924 = vcmp.lt.f32.partialorder %v845, %v362
    %vm925 = vcmp.lt.f32.partialorder %v845, %v366
    %vm926 = vcmp.lt.f32.partialorder %v845, %v370
    %vm927 = vcmp.lt.f32.partialorder %v845, %v374
    %vm928 = vcmp.lt.f32.partialorder %v845, %v378
    %vm929 = vcmp.lt.f32.partialorder %v845, %v382
    %vm930 = vcmp.lt.f32.partialorder %v845, %v386
    %vm931 = vcmp.lt.f32.partialorder %v845, %v390
    %vm932 = vcmp.lt.f32.partialorder %v845, %v394
    %vm933 = vcmp.lt.f32.partialorder %v845, %v398
    %vm934 = vcmp.lt.f32.partialorder %v849, %v405
    %vm935 = vcmp.lt.f32.partialorder %v849, %v409
    %vm936 = vcmp.lt.f32.partialorder %v849, %v413
    %vm937 = vcmp.lt.f32.partialorder %v849, %v417
    %vm938 = vcmp.lt.f32.partialorder %v849, %v421
    %vm939 = vcmp.lt.f32.partialorder %v849, %v425
    %vm940 = vcmp.lt.f32.partialorder %v849, %v429
    %vm941 = vcmp.lt.f32.partialorder %v849, %v433
    %vm942 = vcmp.lt.f32.partialorder %v849, %v437
    %vm943 = vcmp.lt.f32.partialorder %v849, %v441
    %vm944 = vcmp.lt.f32.partialorder %v849, %v445
    %vm945 = vcmp.lt.f32.partialorder %v849, %v449
    %vm946 = vcmp.lt.f32.partialorder %v849, %v453
    %vm947 = vcmp.lt.f32.partialorder %v849, %v457
    %vm948 = vcmp.lt.f32.partialorder %v849, %v461
    %vm949 = vcmp.lt.f32.partialorder %v849, %v465
    %vm950 = vcmp.lt.f32.partialorder %v853, %v472
    %vm951 = vcmp.lt.f32.partialorder %v853, %v476
    %vm952 = vcmp.lt.f32.partialorder %v853, %v480
    %vm953 = vcmp.lt.f32.partialorder %v853, %v484
    %vm954 = vcmp.lt.f32.partialorder %v853, %v488
    %vm955 = vcmp.lt.f32.partialorder %v853, %v492
    %vm956 = vcmp.lt.f32.partialorder %v853, %v496
    %vm957 = vcmp.lt.f32.partialorder %v853, %v500
    %vm958 = vcmp.lt.f32.partialorder %v853, %v504
    %vm959 = vcmp.lt.f32.partialorder %v853, %v508
    %vm960 = vcmp.lt.f32.partialorder %v853, %v512
    %vm961 = vcmp.lt.f32.partialorder %v853, %v516
    %vm962 = vcmp.lt.f32.partialorder %v853, %v520
    %vm963 = vcmp.lt.f32.partialorder %v853, %v524
    %vm964 = vcmp.lt.f32.partialorder %v853, %v528
    %vm965 = vcmp.lt.f32.partialorder %v853, %v532
    %vm966 = vcmp.lt.f32.partialorder %v857, %v539
    %vm967 = vcmp.lt.f32.partialorder %v857, %v543
    %vm968 = vcmp.lt.f32.partialorder %v857, %v547
    %vm969 = vcmp.lt.f32.partialorder %v857, %v551
    %vm970 = vcmp.lt.f32.partialorder %v857, %v555
    %vm971 = vcmp.lt.f32.partialorder %v857, %v559
    %vm972 = vcmp.lt.f32.partialorder %v857, %v563
    %vm973 = vcmp.lt.f32.partialorder %v857, %v567
    %vm974 = vcmp.lt.f32.partialorder %v857, %v571
    %vm975 = vcmp.lt.f32.partialorder %v857, %v575
    %vm976 = vcmp.lt.f32.partialorder %v857, %v579
    %vm977 = vcmp.lt.f32.partialorder %v857, %v583
    %vm978 = vcmp.lt.f32.partialorder %v857, %v587
    %vm979 = vcmp.lt.f32.partialorder %v857, %v591
    %vm980 = vcmp.lt.f32.partialorder %v857, %v595
    %vm981 = vcmp.lt.f32.partialorder %v857, %v599
    %vm982 = vcmp.lt.f32.partialorder %v861, %v606
    %vm983 = vcmp.lt.f32.partialorder %v861, %v610
    %vm984 = vcmp.lt.f32.partialorder %v861, %v614
    %vm985 = vcmp.lt.f32.partialorder %v861, %v618
    %vm986 = vcmp.lt.f32.partialorder %v861, %v622
    %vm987 = vcmp.lt.f32.partialorder %v861, %v626
    %vm988 = vcmp.lt.f32.partialorder %v861, %v630
    %vm989 = vcmp.lt.f32.partialorder %v861, %v634
    %vm990 = vcmp.lt.f32.partialorder %v861, %v638
    %vm991 = vcmp.lt.f32.partialorder %v861, %v642
    %vm992 = vcmp.lt.f32.partialorder %v861, %v646
    %vm993 = vcmp.lt.f32.partialorder %v861, %v650
    %vm994 = vcmp.lt.f32.partialorder %v861, %v654
    %vm995 = vcmp.lt.f32.partialorder %v861, %v658
    %vm996 = vcmp.lt.f32.partialorder %v861, %v662
    %vm997 = vcmp.lt.f32.partialorder %v861, %v666
    %vm998 = vcmp.eq.f32.partialorder %v833, %v137
    %vm999 = vcmp.eq.f32.partialorder %v833, %v141
    %vm1000 = vcmp.eq.f32.partialorder %v833, %v145
    %vm1001 = vcmp.eq.f32.partialorder %v833, %v149
    %vm1002 = vcmp.eq.f32.partialorder %v833, %v153
    %vm1003 = vcmp.eq.f32.partialorder %v833, %v157
    %vm1004 = vcmp.eq.f32.partialorder %v833, %v161
    %vm1005 = vcmp.eq.f32.partialorder %v833, %v165
    %vm1006 = vcmp.eq.f32.partialorder %v833, %v169
    %vm1007 = vcmp.eq.f32.partialorder %v833, %v173
    %vm1008 = vcmp.eq.f32.partialorder %v833, %v177
    %vm1009 = vcmp.eq.f32.partialorder %v833, %v181
    %vm1010 = vcmp.eq.f32.partialorder %v833, %v185
    %vm1011 = vcmp.eq.f32.partialorder %v833, %v189
    %vm1012 = vcmp.eq.f32.partialorder %v833, %v193
    %vm1013 = vcmp.eq.f32.partialorder %v833, %v197
    %vm1014 = vcmp.eq.f32.partialorder %v837, %v204
    %vm1015 = vcmp.eq.f32.partialorder %v837, %v208
    %vm1016 = vcmp.eq.f32.partialorder %v837, %v212
    %vm1017 = vcmp.eq.f32.partialorder %v837, %v216
    %vm1018 = vcmp.eq.f32.partialorder %v837, %v220
    %vm1019 = vcmp.eq.f32.partialorder %v837, %v224
    %vm1020 = vcmp.eq.f32.partialorder %v837, %v228
    %vm1021 = vcmp.eq.f32.partialorder %v837, %v232
    %vm1022 = vcmp.eq.f32.partialorder %v837, %v236
    %vm1023 = vcmp.eq.f32.partialorder %v837, %v240
    %vm1024 = vcmp.eq.f32.partialorder %v837, %v244
    %vm1025 = vcmp.eq.f32.partialorder %v837, %v248
    %vm1026 = vcmp.eq.f32.partialorder %v837, %v252
    %vm1027 = vcmp.eq.f32.partialorder %v837, %v256
    %vm1028 = vcmp.eq.f32.partialorder %v837, %v260
    %vm1029 = vcmp.eq.f32.partialorder %v837, %v264
    %vm1030 = vcmp.eq.f32.partialorder %v841, %v271
    %vm1031 = vcmp.eq.f32.partialorder %v841, %v275
    %vm1032 = vcmp.eq.f32.partialorder %v841, %v279
    %vm1033 = vcmp.eq.f32.partialorder %v841, %v283
    %vm1034 = vcmp.eq.f32.partialorder %v841, %v287
    %vm1035 = vcmp.eq.f32.partialorder %v841, %v291
    %vm1036 = vcmp.eq.f32.partialorder %v841, %v295
    %vm1037 = vcmp.eq.f32.partialorder %v841, %v299
    %vm1038 = vcmp.eq.f32.partialorder %v841, %v303
    %vm1039 = vcmp.eq.f32.partialorder %v841, %v307
    %vm1040 = vcmp.eq.f32.partialorder %v841, %v311
    %vm1041 = vcmp.eq.f32.partialorder %v841, %v315
    %vm1042 = vcmp.eq.f32.partialorder %v841, %v319
    %vm1043 = vcmp.eq.f32.partialorder %v841, %v323
    %vm1044 = vcmp.eq.f32.partialorder %v841, %v327
    %vm1045 = vcmp.eq.f32.partialorder %v841, %v331
    %vm1046 = vcmp.eq.f32.partialorder %v845, %v338
    %vm1047 = vcmp.eq.f32.partialorder %v845, %v342
    %vm1048 = vcmp.eq.f32.partialorder %v845, %v346
    %vm1049 = vcmp.eq.f32.partialorder %v845, %v350
    %vm1050 = vcmp.eq.f32.partialorder %v845, %v354
    %vm1051 = vcmp.eq.f32.partialorder %v845, %v358
    %vm1052 = vcmp.eq.f32.partialorder %v845, %v362
    %vm1053 = vcmp.eq.f32.partialorder %v845, %v366
    %vm1054 = vcmp.eq.f32.partialorder %v845, %v370
    %vm1055 = vcmp.eq.f32.partialorder %v845, %v374
    %vm1056 = vcmp.eq.f32.partialorder %v845, %v378
    %vm1057 = vcmp.eq.f32.partialorder %v845, %v382
    %vm1058 = vcmp.eq.f32.partialorder %v845, %v386
    %vm1059 = vcmp.eq.f32.partialorder %v845, %v390
    %vm1060 = vcmp.eq.f32.partialorder %v845, %v394
    %vm1061 = vcmp.eq.f32.partialorder %v845, %v398
    %vm1062 = vcmp.eq.f32.partialorder %v849, %v405
    %vm1063 = vcmp.eq.f32.partialorder %v849, %v409
    %vm1064 = vcmp.eq.f32.partialorder %v849, %v413
    %vm1065 = vcmp.eq.f32.partialorder %v849, %v417
    %vm1066 = vcmp.eq.f32.partialorder %v849, %v421
    %vm1067 = vcmp.eq.f32.partialorder %v849, %v425
    %vm1068 = vcmp.eq.f32.partialorder %v849, %v429
    %vm1069 = vcmp.eq.f32.partialorder %v849, %v433
    %vm1070 = vcmp.eq.f32.partialorder %v849, %v437
    %vm1071 = vcmp.eq.f32.partialorder %v849, %v441
    %vm1072 = vcmp.eq.f32.partialorder %v849, %v445
    %vm1073 = vcmp.eq.f32.partialorder %v849, %v449
    %vm1074 = vcmp.eq.f32.partialorder %v849, %v453
    %vm1075 = vcmp.eq.f32.partialorder %v849, %v457
    %vm1076 = vcmp.eq.f32.partialorder %v849, %v461
    %vm1077 = vcmp.eq.f32.partialorder %v849, %v465
    %vm1078 = vcmp.eq.f32.partialorder %v853, %v472
    %vm1079 = vcmp.eq.f32.partialorder %v853, %v476
    %vm1080 = vcmp.eq.f32.partialorder %v853, %v480
    %vm1081 = vcmp.eq.f32.partialorder %v853, %v484
    %vm1082 = vcmp.eq.f32.partialorder %v853, %v488
    %vm1083 = vcmp.eq.f32.partialorder %v853, %v492
    %vm1084 = vcmp.eq.f32.partialorder %v853, %v496
    %vm1085 = vcmp.eq.f32.partialorder %v853, %v500
    %vm1086 = vcmp.eq.f32.partialorder %v853, %v504
    %vm1087 = vcmp.eq.f32.partialorder %v853, %v508
    %vm1088 = vcmp.eq.f32.partialorder %v853, %v512
    %vm1089 = vcmp.eq.f32.partialorder %v853, %v516
    %vm1090 = vcmp.eq.f32.partialorder %v853, %v520
    %vm1091 = vcmp.eq.f32.partialorder %v853, %v524
    %vm1092 = vcmp.eq.f32.partialorder %v853, %v528
    %vm1093 = vcmp.eq.f32.partialorder %v853, %v532
    %vm1094 = vcmp.eq.f32.partialorder %v857, %v539
    %vm1095 = vcmp.eq.f32.partialorder %v857, %v543
    %vm1096 = vcmp.eq.f32.partialorder %v857, %v547
    %vm1097 = vcmp.eq.f32.partialorder %v857, %v551
    %vm1098 = vcmp.eq.f32.partialorder %v857, %v555
    %vm1099 = vcmp.eq.f32.partialorder %v857, %v559
    %vm1100 = vcmp.eq.f32.partialorder %v857, %v563
    %vm1101 = vcmp.eq.f32.partialorder %v857, %v567
    %vm1102 = vcmp.eq.f32.partialorder %v857, %v571
    %vm1103 = vcmp.eq.f32.partialorder %v857, %v575
    %vm1104 = vcmp.eq.f32.partialorder %v857, %v579
    %vm1105 = vcmp.eq.f32.partialorder %v857, %v583
    %vm1106 = vcmp.eq.f32.partialorder %v857, %v587
    %vm1107 = vcmp.eq.f32.partialorder %v857, %v591
    %vm1108 = vcmp.eq.f32.partialorder %v857, %v595
    %vm1109 = vcmp.eq.f32.partialorder %v857, %v599
    %vm1110 = vcmp.eq.f32.partialorder %v861, %v606
    %vm1111 = vcmp.eq.f32.partialorder %v861, %v610
    %vm1112 = vcmp.eq.f32.partialorder %v861, %v614
    %vm1113 = vcmp.eq.f32.partialorder %v861, %v618
    %vm1114 = vcmp.eq.f32.partialorder %v861, %v622
    %vm1115 = vcmp.eq.f32.partialorder %v861, %v626
    %vm1116 = vcmp.eq.f32.partialorder %v861, %v630
    %vm1117 = vcmp.eq.f32.partialorder %v861, %v634
    %vm1118 = vcmp.eq.f32.partialorder %v861, %v638
    %vm1119 = vcmp.eq.f32.partialorder %v861, %v642
    %vm1120 = vcmp.eq.f32.partialorder %v861, %v646
    %vm1121 = vcmp.eq.f32.partialorder %v861, %v650
    %vm1122 = vcmp.eq.f32.partialorder %v861, %v654
    %vm1123 = vcmp.eq.f32.partialorder %v861, %v658
    %vm1124 = vcmp.eq.f32.partialorder %v861, %v662
    %vm1125 = vcmp.eq.f32.partialorder %v861, %v666
    %v1126 = vlaneseq
    %v1127 = vshrl.u32 %v1126, 7
    %v1128 = vsub.s32 0, %v1127
    %v1129 = vrot.slane %v804, %v1128
    %v1130 = vlaneseq
    %v1131 = vshrl.u32 %v1130, 7
    %v1132 = vsub.s32 0, %v1131
    %v1133 = vrot.slane %v818, %v1132
    %v1134 = vlaneseq
    %v1135 = vshrl.u32 %v1134, 7
    %v1136 = vsub.s32 0, %v1135
    %v1137 = vrot.slane %v826, %v1136
    %v1138 = vlaneseq
    %v1139 = vshrl.u32 %v1138, 7
    %v1140 = vsub.s32 0, %v1139
    %v1141 = vrot.slane %v828, %v1140
    %v1142 = vlaneseq
    %v1143 = vshrl.u32 %v1142, 7
    %v1144 = vsub.s32 0, %v1143
    %v1145 = vrot.slane %v811, %v1144
    %v1146 = vlaneseq
    %v1147 = vshrl.u32 %v1146, 7
    %v1148 = vsub.s32 0, %v1147
    %v1149 = vrot.slane %v825, %v1148
    %v1150 = vlaneseq
    %v1151 = vshrl.u32 %v1150, 7
    %v1152 = vsub.s32 0, %v1151
    %v1153 = vrot.slane %v827, %v1152
    %v1154 = vlaneseq
    %v1155 = vshrl.u32 %v1154, 7
    %v1156 = vsub.s32 0, %v1155
    %v1157 = vrot.slane %v829, %v1156
    %vm1166 = vcmp.lt.f32.partialorder %v1129, %v719
    %vm1167 = vcmp.lt.f32.partialorder %v1129, %v723
    %vm1168 = vcmp.lt.f32.partialorder %v1129, %v727
    %vm1169 = vcmp.lt.f32.partialorder %v1129, %v731
    %vm1170 = vcmp.lt.f32.partialorder %v1129, %v735
    %vm1171 = vcmp.lt.f32.partialorder %v1129, %v739
    %vm1172 = vcmp.lt.f32.partialorder %v1129, %v743
    %vm1173 = vcmp.lt.f32.partialorder %v1129, %v747
    %vm1174 = vcmp.lt.f32.partialorder %v1129, %v751
    %vm1175 = vcmp.lt.f32.partialorder %v1129, %v755
    %vm1176 = vcmp.lt.f32.partialorder %v1129, %v759
    %vm1177 = vcmp.lt.f32.partialorder %v1129, %v763
    %vm1178 = vcmp.lt.f32.partialorder %v1129, %v767
    %vm1179 = vcmp.lt.f32.partialorder %v1129, %v771
    %vm1180 = vcmp.lt.f32.partialorder %v1129, %v775
    %vm1181 = vcmp.lt.f32.partialorder %v1129, %v779
    %vm1182 = vcmp.lt.f32.partialorder %v1133, %v719
    %vm1183 = vcmp.lt.f32.partialorder %v1133, %v723
    %vm1184 = vcmp.lt.f32.partialorder %v1133, %v727
    %vm1185 = vcmp.lt.f32.partialorder %v1133, %v731
    %vm1186 = vcmp.lt.f32.partialorder %v1133, %v735
    %vm1187 = vcmp.lt.f32.partialorder %v1133, %v739
    %vm1188 = vcmp.lt.f32.partialorder %v1133, %v743
    %vm1189 = vcmp.lt.f32.partialorder %v1133, %v747
    %vm1190 = vcmp.lt.f32.partialorder %v1133, %v751
    %vm1191 = vcmp.lt.f32.partialorder %v1133, %v755
    %vm1192 = vcmp.lt.f32.partialorder %v1133, %v759
    %vm1193 = vcmp.lt.f32.partialorder %v1133, %v763
    %vm1194 = vcmp.lt.f32.partialorder %v1133, %v767
    %vm1195 = vcmp.lt.f32.partialorder %v1133, %v771
    %vm1196 = vcmp.lt.f32.partialorder %v1133, %v775
    %vm1197 = vcmp.lt.f32.partialorder %v1133, %v779
    %vm1198 = vcmp.lt.f32.partialorder %v1137, %v719
    %vm1199 = vcmp.lt.f32.partialorder %v1137, %v723
    %vm1200 = vcmp.lt.f32.partialorder %v1137, %v727
    %vm1201 = vcmp.lt.f32.partialorder %v1137, %v731
    %vm1202 = vcmp.lt.f32.partialorder %v1137, %v735
    %vm1203 = vcmp.lt.f32.partialorder %v1137, %v739
    %vm1204 = vcmp.lt.f32.partialorder %v1137, %v743
    %vm1205 = vcmp.lt.f32.partialorder %v1137, %v747
    %vm1206 = vcmp.lt.f32.partialorder %v1137, %v751
    %vm1207 = vcmp.lt.f32.partialorder %v1137, %v755
    %vm1208 = vcmp.lt.f32.partialorder %v1137, %v759
    %vm1209 = vcmp.lt.f32.partialorder %v1137, %v763
    %vm1210 = vcmp.lt.f32.partialorder %v1137, %v767
    %vm1211 = vcmp.lt.f32.partialorder %v1137, %v771
    %vm1212 = vcmp.lt.f32.partialorder %v1137, %v775
    %vm1213 = vcmp.lt.f32.partialorder %v1137, %v779
    %vm1214 = vcmp.lt.f32.partialorder %v1141, %v719
    %vm1215 = vcmp.lt.f32.partialorder %v1141, %v723
    %vm1216 = vcmp.lt.f32.partialorder %v1141, %v727
    %vm1217 = vcmp.lt.f32.partialorder %v1141, %v731
    %vm1218 = vcmp.lt.f32.partialorder %v1141, %v735
    %vm1219 = vcmp.lt.f32.partialorder %v1141, %v739
    %vm1220 = vcmp.lt.f32.partialorder %v1141, %v743
    %vm1221 = vcmp.lt.f32.partialorder %v1141, %v747
    %vm1222 = vcmp.lt.f32.partialorder %v1141, %v751
    %vm1223 = vcmp.lt.f32.partialorder %v1141, %v755
    %vm1224 = vcmp.lt.f32.partialorder %v1141, %v759
    %vm1225 = vcmp.lt.f32.partialorder %v1141, %v763
    %vm1226 = vcmp.lt.f32.partialorder %v1141, %v767
    %vm1227 = vcmp.lt.f32.partialorder %v1141, %v771
    %vm1228 = vcmp.lt.f32.partialorder %v1141, %v775
    %vm1229 = vcmp.lt.f32.partialorder %v1141, %v779
    %vm1230 = vcmp.lt.f32.partialorder %v1145, %v719
    %vm1231 = vcmp.lt.f32.partialorder %v1145, %v723
    %vm1232 = vcmp.lt.f32.partialorder %v1145, %v727
    %vm1233 = vcmp.lt.f32.partialorder %v1145, %v731
    %vm1234 = vcmp.lt.f32.partialorder %v1145, %v735
    %vm1235 = vcmp.lt.f32.partialorder %v1145, %v739
    %vm1236 = vcmp.lt.f32.partialorder %v1145, %v743
    %vm1237 = vcmp.lt.f32.partialorder %v1145, %v747
    %vm1238 = vcmp.lt.f32.partialorder %v1145, %v751
    %vm1239 = vcmp.lt.f32.partialorder %v1145, %v755
    %vm1240 = vcmp.lt.f32.partialorder %v1145, %v759
    %vm1241 = vcmp.lt.f32.partialorder %v1145, %v763
    %vm1242 = vcmp.lt.f32.partialorder %v1145, %v767
    %vm1243 = vcmp.lt.f32.partialorder %v1145, %v771
    %vm1244 = vcmp.lt.f32.partialorder %v1145, %v775
    %vm1245 = vcmp.lt.f32.partialorder %v1145, %v779
    %vm1246 = vcmp.lt.f32.partialorder %v1149, %v719
    %vm1247 = vcmp.lt.f32.partialorder %v1149, %v723
    %vm1248 = vcmp.lt.f32.partialorder %v1149, %v727
    %vm1249 = vcmp.lt.f32.partialorder %v1149, %v731
    %vm1250 = vcmp.lt.f32.partialorder %v1149, %v735
    %vm1251 = vcmp.lt.f32.partialorder %v1149, %v739
    %vm1252 = vcmp.lt.f32.partialorder %v1149, %v743
    %vm1253 = vcmp.lt.f32.partialorder %v1149, %v747
    %vm1254 = vcmp.lt.f32.partialorder %v1149, %v751
    %vm1255 = vcmp.lt.f32.partialorder %v1149, %v755
    %vm1256 = vcmp.lt.f32.partialorder %v1149, %v759
    %vm1257 = vcmp.lt.f32.partialorder %v1149, %v763
    %vm1258 = vcmp.lt.f32.partialorder %v1149, %v767
    %vm1259 = vcmp.lt.f32.partialorder %v1149, %v771
    %vm1260 = vcmp.lt.f32.partialorder %v1149, %v775
    %vm1261 = vcmp.lt.f32.partialorder %v1149, %v779
    %vm1262 = vcmp.lt.f32.partialorder %v1153, %v719
    %vm1263 = vcmp.lt.f32.partialorder %v1153, %v723
    %vm1264 = vcmp.lt.f32.partialorder %v1153, %v727
    %vm1265 = vcmp.lt.f32.partialorder %v1153, %v731
    %vm1266 = vcmp.lt.f32.partialorder %v1153, %v735
    %vm1267 = vcmp.lt.f32.partialorder %v1153, %v739
    %vm1268 = vcmp.lt.f32.partialorder %v1153, %v743
    %vm1269 = vcmp.lt.f32.partialorder %v1153, %v747
    %vm1270 = vcmp.lt.f32.partialorder %v1153, %v751
    %vm1271 = vcmp.lt.f32.partialorder %v1153, %v755
    %vm1272 = vcmp.lt.f32.partialorder %v1153, %v759
    %vm1273 = vcmp.lt.f32.partialorder %v1153, %v763
    %vm1274 = vcmp.lt.f32.partialorder %v1153, %v767
    %vm1275 = vcmp.lt.f32.partialorder %v1153, %v771
    %vm1276 = vcmp.lt.f32.partialorder %v1153, %v775
    %vm1277 = vcmp.lt.f32.partialorder %v1153, %v779
    %vm1278 = vcmp.lt.f32.partialorder %v1157, %v719
    %vm1279 = vcmp.lt.f32.partialorder %v1157, %v723
    %vm1280 = vcmp.lt.f32.partialorder %v1157, %v727
    %vm1281 = vcmp.lt.f32.partialorder %v1157, %v731
    %vm1282 = vcmp.lt.f32.partialorder %v1157, %v735
    %vm1283 = vcmp.lt.f32.partialorder %v1157, %v739
    %vm1284 = vcmp.lt.f32.partialorder %v1157, %v743
    %vm1285 = vcmp.lt.f32.partialorder %v1157, %v747
    %vm1286 = vcmp.lt.f32.partialorder %v1157, %v751
    %vm1287 = vcmp.lt.f32.partialorder %v1157, %v755
    %vm1288 = vcmp.lt.f32.partialorder %v1157, %v759
    %vm1289 = vcmp.lt.f32.partialorder %v1157, %v763
    %vm1290 = vcmp.lt.f32.partialorder %v1157, %v767
    %vm1291 = vcmp.lt.f32.partialorder %v1157, %v771
    %vm1292 = vcmp.lt.f32.partialorder %v1157, %v775
    %vm1293 = vcmp.lt.f32.partialorder %v1157, %v779
    %vm1294 = vmand %vm998, %vm1166
    %vm1295 = vmand %vm999, %vm1167
    %vm1296 = vmand %vm1000, %vm1168
    %vm1297 = vmand %vm1001, %vm1169
    %vm1298 = vmand %vm1002, %vm1170
    %vm1299 = vmand %vm1003, %vm1171
    %vm1300 = vmand %vm1004, %vm1172
    %vm1301 = vmand %vm1005, %vm1173
    %vm1302 = vmand %vm1006, %vm1174
    %vm1303 = vmand %vm1007, %vm1175
    %vm1304 = vmand %vm1008, %vm1176
    %vm1305 = vmand %vm1009, %vm1177
    %vm1306 = vmand %vm1010, %vm1178
    %vm1307 = vmand %vm1011, %vm1179
    %vm1308 = vmand %vm1012, %vm1180
    %vm1309 = vmand %vm1013, %vm1181
    %vm1310 = vmand %vm1014, %vm1182
    %vm1311 = vmand %vm1015, %vm1183
    %vm1312 = vmand %vm1016, %vm1184
    %vm1313 = vmand %vm1017, %vm1185
    %vm1314 = vmand %vm1018, %vm1186
    %vm1315 = vmand %vm1019, %vm1187
    %vm1316 = vmand %vm1020, %vm1188
    %vm1317 = vmand %vm1021, %vm1189
    %vm1318 = vmand %vm1022, %vm1190
    %vm1319 = vmand %vm1023, %vm1191
    %vm1320 = vmand %vm1024, %vm1192
    %vm1321 = vmand %vm1025, %vm1193
    %vm1322 = vmand %vm1026, %vm1194
    %vm1323 = vmand %vm1027, %vm1195
    %vm1324 = vmand %vm1028, %vm1196
    %vm1325 = vmand %vm1029, %vm1197
    %vm1326 = vmand %vm1030, %vm1198
    %vm1327 = vmand %vm1031, %vm1199
    %vm1328 = vmand %vm1032, %vm1200
    %vm1329 = vmand %vm1033, %vm1201
    %vm1330 = vmand %vm1034, %vm1202
    %vm1331 = vmand %vm1035, %vm1203
    %vm1332 = vmand %vm1036, %vm1204
    %vm1333 = vmand %vm1037, %vm1205
    %vm1334 = vmand %vm1038, %vm1206
    %vm1335 = vmand %vm1039, %vm1207
    %vm1336 = vmand %vm1040, %vm1208
    %vm1337 = vmand %vm1041, %vm1209
    %vm1338 = vmand %vm1042, %vm1210
    %vm1339 = vmand %vm1043, %vm1211
    %vm1340 = vmand %vm1044, %vm1212
    %vm1341 = vmand %vm1045, %vm1213
    %vm1342 = vmand %vm1046, %vm1214
    %vm1343 = vmand %vm1047, %vm1215
    %vm1344 = vmand %vm1048, %vm1216
    %vm1345 = vmand %vm1049, %vm1217
    %vm1346 = vmand %vm1050, %vm1218
    %vm1347 = vmand %vm1051, %vm1219
    %vm1348 = vmand %vm1052, %vm1220
    %vm1349 = vmand %vm1053, %vm1221
    %vm1350 = vmand %vm1054, %vm1222
    %vm1351 = vmand %vm1055, %vm1223
    %vm1352 = vmand %vm1056, %vm1224
    %vm1353 = vmand %vm1057, %vm1225
    %vm1354 = vmand %vm1058, %vm1226
    %vm1355 = vmand %vm1059, %vm1227
    %vm1356 = vmand %vm1060, %vm1228
    %vm1357 = vmand %vm1061, %vm1229
    %vm1358 = vmand %vm1062, %vm1230
    %vm1359 = vmand %vm1063, %vm1231
    %vm1360 = vmand %vm1064, %vm1232
    %vm1361 = vmand %vm1065, %vm1233
    %vm1362 = vmand %vm1066, %vm1234
    %vm1363 = vmand %vm1067, %vm1235
    %vm1364 = vmand %vm1068, %vm1236
    %vm1365 = vmand %vm1069, %vm1237
    %vm1366 = vmand %vm1070, %vm1238
    %vm1367 = vmand %vm1071, %vm1239
    %vm1368 = vmand %vm1072, %vm1240
    %vm1369 = vmand %vm1073, %vm1241
    %vm1370 = vmand %vm1074, %vm1242
    %vm1371 = vmand %vm1075, %vm1243
    %vm1372 = vmand %vm1076, %vm1244
    %vm1373 = vmand %vm1077, %vm1245
    %vm1374 = vmand %vm1078, %vm1246
    %vm1375 = vmand %vm1079, %vm1247
    %vm1376 = vmand %vm1080, %vm1248
    %vm1377 = vmand %vm1081, %vm1249
    %vm1378 = vmand %vm1082, %vm1250
    %vm1379 = vmand %vm1083, %vm1251
    %vm1380 = vmand %vm1084, %vm1252
    %vm1381 = vmand %vm1085, %vm1253
    %vm1382 = vmand %vm1086, %vm1254
    %vm1383 = vmand %vm1087, %vm1255
    %vm1384 = vmand %vm1088, %vm1256
    %vm1385 = vmand %vm1089, %vm1257
    %vm1386 = vmand %vm1090, %vm1258
    %vm1387 = vmand %vm1091, %vm1259
    %vm1388 = vmand %vm1092, %vm1260
    %vm1389 = vmand %vm1093, %vm1261
    %vm1390 = vmand %vm1094, %vm1262
    %vm1391 = vmand %vm1095, %vm1263
    %vm1392 = vmand %vm1096, %vm1264
    %vm1393 = vmand %vm1097, %vm1265
    %vm1394 = vmand %vm1098, %vm1266
    %vm1395 = vmand %vm1099, %vm1267
    %vm1396 = vmand %vm1100, %vm1268
    %vm1397 = vmand %vm1101, %vm1269
    %vm1398 = vmand %vm1102, %vm1270
    %vm1399 = vmand %vm1103, %vm1271
    %vm1400 = vmand %vm1104, %vm1272
    %vm1401 = vmand %vm1105, %vm1273
    %vm1402 = vmand %vm1106, %vm1274
    %vm1403 = vmand %vm1107, %vm1275
    %vm1404 = vmand %vm1108, %vm1276
    %vm1405 = vmand %vm1109, %vm1277
    %vm1406 = vmand %vm1110, %vm1278
    %vm1407 = vmand %vm1111, %vm1279
    %vm1408 = vmand %vm1112, %vm1280
    %vm1409 = vmand %vm1113, %vm1281
    %vm1410 = vmand %vm1114, %vm1282
    %vm1411 = vmand %vm1115, %vm1283
    %vm1412 = vmand %vm1116, %vm1284
    %vm1413 = vmand %vm1117, %vm1285
    %vm1414 = vmand %vm1118, %vm1286
    %vm1415 = vmand %vm1119, %vm1287
    %vm1416 = vmand %vm1120, %vm1288
    %vm1417 = vmand %vm1121, %vm1289
    %vm1418 = vmand %vm1122, %vm1290
    %vm1419 = vmand %vm1123, %vm1291
    %vm1420 = vmand %vm1124, %vm1292
    %vm1421 = vmand %vm1125, %vm1293
    %vm1422 = vmor %vm870, %vm1294
    %vm1423 = vmor %vm871, %vm1295
    %vm1424 = vmor %vm872, %vm1296
    %vm1425 = vmor %vm873, %vm1297
    %vm1426 = vmor %vm874, %vm1298
    %vm1427 = vmor %vm875, %vm1299
    %vm1428 = vmor %vm876, %vm1300
    %vm1429 = vmor %vm877, %vm1301
    %vm1430 = vmor %vm878, %vm1302
    %vm1431 = vmor %vm879, %vm1303
    %vm1432 = vmor %vm880, %vm1304
    %vm1433 = vmor %vm881, %vm1305
    %vm1434 = vmor %vm882, %vm1306
    %vm1435 = vmor %vm883, %vm1307
    %vm1436 = vmor %vm884, %vm1308
    %vm1437 = vmor %vm885, %vm1309
    %vm1438 = vmor %vm886, %vm1310
    %vm1439 = vmor %vm887, %vm1311
    %vm1440 = vmor %vm888, %vm1312
    %vm1441 = vmor %vm889, %vm1313
    %vm1442 = vmor %vm890, %vm1314
    %vm1443 = vmor %vm891, %vm1315
    %vm1444 = vmor %vm892, %vm1316
    %vm1445 = vmor %vm893, %vm1317
    %vm1446 = vmor %vm894, %vm1318
    %vm1447 = vmor %vm895, %vm1319
    %vm1448 = vmor %vm896, %vm1320
    %vm1449 = vmor %vm897, %vm1321
    %vm1450 = vmor %vm898, %vm1322
    %vm1451 = vmor %vm899, %vm1323
    %vm1452 = vmor %vm900, %vm1324
    %vm1453 = vmor %vm901, %vm1325
    %vm1454 = vmor %vm902, %vm1326
    %vm1455 = vmor %vm903, %vm1327
    %vm1456 = vmor %vm904, %vm1328
    %vm1457 = vmor %vm905, %vm1329
    %vm1458 = vmor %vm906, %vm1330
    %vm1459 = vmor %vm907, %vm1331
    %vm1460 = vmor %vm908, %vm1332
    %vm1461 = vmor %vm909, %vm1333
    %vm1462 = vmor %vm910, %vm1334
    %vm1463 = vmor %vm911, %vm1335
    %vm1464 = vmor %vm912, %vm1336
    %vm1465 = vmor %vm913, %vm1337
    %vm1466 = vmor %vm914, %vm1338
    %vm1467 = vmor %vm915, %vm1339
    %vm1468 = vmor %vm916, %vm1340
    %vm1469 = vmor %vm917, %vm1341
    %vm1470 = vmor %vm918, %vm1342
    %vm1471 = vmor %vm919, %vm1343
    %vm1472 = vmor %vm920, %vm1344
    %vm1473 = vmor %vm921, %vm1345
    %vm1474 = vmor %vm922, %vm1346
    %vm1475 = vmor %vm923, %vm1347
    %vm1476 = vmor %vm924, %vm1348
    %vm1477 = vmor %vm925, %vm1349
    %vm1478 = vmor %vm926, %vm1350
    %vm1479 = vmor %vm927, %vm1351
    %vm1480 = vmor %vm928, %vm1352
    %vm1481 = vmor %vm929, %vm1353
    %vm1482 = vmor %vm930, %vm1354
    %vm1483 = vmor %vm931, %vm1355
    %vm1484 = vmor %vm932, %vm1356
    %vm1485 = vmor %vm933, %vm1357
    %vm1486 = vmor %vm934, %vm1358
    %vm1487 = vmor %vm935, %vm1359
    %vm1488 = vmor %vm936, %vm1360
    %vm1489 = vmor %vm937, %vm1361
    %vm1490 = vmor %vm938, %vm1362
    %vm1491 = vmor %vm939, %vm1363
    %vm1492 = vmor %vm940, %vm1364
    %vm1493 = vmor %vm941, %vm1365
    %vm1494 = vmor %vm942, %vm1366
    %vm1495 = vmor %vm943, %vm1367
    %vm1496 = vmor %vm944, %vm1368
    %vm1497 = vmor %vm945, %vm1369
    %vm1498 = vmor %vm946, %vm1370
    %vm1499 = vmor %vm947, %vm1371
    %vm1500 = vmor %vm948, %vm1372
    %vm1501 = vmor %vm949, %vm1373
    %vm1502 = vmor %vm950, %vm1374
    %vm1503 = vmor %vm951, %vm1375
    %vm1504 = vmor %vm952, %vm1376
    %vm1505 = vmor %vm953, %vm1377
    %vm1506 = vmor %vm954, %vm1378
    %vm1507 = vmor %vm955, %vm1379
    %vm1508 = vmor %vm956, %vm1380
    %vm1509 = vmor %vm957, %vm1381
    %vm1510 = vmor %vm958, %vm1382
    %vm1511 = vmor %vm959, %vm1383
    %vm1512 = vmor %vm960, %vm1384
    %vm1513 = vmor %vm961, %vm1385
    %vm1514 = vmor %vm962, %vm1386
    %vm1515 = vmor %vm963, %vm1387
    %vm1516 = vmor %vm964, %vm1388
    %vm1517 = vmor %vm965, %vm1389
    %vm1518 = vmor %vm966, %vm1390
    %vm1519 = vmor %vm967, %vm1391
    %vm1520 = vmor %vm968, %vm1392
    %vm1521 = vmor %vm969, %vm1393
    %vm1522 = vmor %vm970, %vm1394
    %vm1523 = vmor %vm971, %vm1395
    %vm1524 = vmor %vm972, %vm1396
    %vm1525 = vmor %vm973, %vm1397
    %vm1526 = vmor %vm974, %vm1398
    %vm1527 = vmor %vm975, %vm1399
    %vm1528 = vmor %vm976, %vm1400
    %vm1529 = vmor %vm977, %vm1401
    %vm1530 = vmor %vm978, %vm1402
    %vm1531 = vmor %vm979, %vm1403
    %vm1532 = vmor %vm980, %vm1404
    %vm1533 = vmor %vm981, %vm1405
    %vm1534 = vmor %vm982, %vm1406
    %vm1535 = vmor %vm983, %vm1407
    %vm1536 = vmor %vm984, %vm1408
    %vm1537 = vmor %vm985, %vm1409
    %vm1538 = vmor %vm986, %vm1410
    %vm1539 = vmor %vm987, %vm1411
    %vm1540 = vmor %vm988, %vm1412
    %vm1541 = vmor %vm989, %vm1413
    %vm1542 = vmor %vm990, %vm1414
    %vm1543 = vmor %vm991, %vm1415
    %vm1544 = vmor %vm992, %vm1416
    %vm1545 = vmor %vm993, %vm1417
    %vm1546 = vmor %vm994, %vm1418
    %vm1547 = vmor %vm995, %vm1419
    %vm1548 = vmor %vm996, %vm1420
    %vm1549 = vmor %vm997, %vm1421
    %v1550 = vsel %vm1422, 1.0, 0.0
    %v1551 = vsel %vm1423, 1.0, 0.0
    %v1552 = vsel %vm1424, 1.0, 0.0
    %v1553 = vsel %vm1425, 1.0, 0.0
    %v1554 = vsel %vm1426, 1.0, 0.0
    %v1555 = vsel %vm1427, 1.0, 0.0
    %v1556 = vsel %vm1428, 1.0, 0.0
    %v1557 = vsel %vm1429, 1.0, 0.0
    %v1558 = vsel %vm1430, 1.0, 0.0
    %v1559 = vsel %vm1431, 1.0, 0.0
    %v1560 = vsel %vm1432, 1.0, 0.0
    %v1561 = vsel %vm1433, 1.0, 0.0
    %v1562 = vsel %vm1434, 1.0, 0.0
    %v1563 = vsel %vm1435, 1.0, 0.0
    %v1564 = vsel %vm1436, 1.0, 0.0
    %v1565 = vsel %vm1437, 1.0, 0.0
    %v1566 = vsel %vm1438, 1.0, 0.0
    %v1567 = vsel %vm1439, 1.0, 0.0
    %v1568 = vsel %vm1440, 1.0, 0.0
    %v1569 = vsel %vm1441, 1.0, 0.0
    %v1570 = vsel %vm1442, 1.0, 0.0
    %v1571 = vsel %vm1443, 1.0, 0.0
    %v1572 = vsel %vm1444, 1.0, 0.0
    %v1573 = vsel %vm1445, 1.0, 0.0
    %v1574 = vsel %vm1446, 1.0, 0.0
    %v1575 = vsel %vm1447, 1.0, 0.0
    %v1576 = vsel %vm1448, 1.0, 0.0
    %v1577 = vsel %vm1449, 1.0, 0.0
    %v1578 = vsel %vm1450, 1.0, 0.0
    %v1579 = vsel %vm1451, 1.0, 0.0
    %v1580 = vsel %vm1452, 1.0, 0.0
    %v1581 = vsel %vm1453, 1.0, 0.0
    %v1582 = vsel %vm1454, 1.0, 0.0
    %v1583 = vsel %vm1455, 1.0, 0.0
    %v1584 = vsel %vm1456, 1.0, 0.0
    %v1585 = vsel %vm1457, 1.0, 0.0
    %v1586 = vsel %vm1458, 1.0, 0.0
    %v1587 = vsel %vm1459, 1.0, 0.0
    %v1588 = vsel %vm1460, 1.0, 0.0
    %v1589 = vsel %vm1461, 1.0, 0.0
    %v1590 = vsel %vm1462, 1.0, 0.0
    %v1591 = vsel %vm1463, 1.0, 0.0
    %v1592 = vsel %vm1464, 1.0, 0.0
    %v1593 = vsel %vm1465, 1.0, 0.0
    %v1594 = vsel %vm1466, 1.0, 0.0
    %v1595 = vsel %vm1467, 1.0, 0.0
    %v1596 = vsel %vm1468, 1.0, 0.0
    %v1597 = vsel %vm1469, 1.0, 0.0
    %v1598 = vsel %vm1470, 1.0, 0.0
    %v1599 = vsel %vm1471, 1.0, 0.0
    %v1600 = vsel %vm1472, 1.0, 0.0
    %v1601 = vsel %vm1473, 1.0, 0.0
    %v1602 = vsel %vm1474, 1.0, 0.0
    %v1603 = vsel %vm1475, 1.0, 0.0
    %v1604 = vsel %vm1476, 1.0, 0.0
    %v1605 = vsel %vm1477, 1.0, 0.0
    %v1606 = vsel %vm1478, 1.0, 0.0
    %v1607 = vsel %vm1479, 1.0, 0.0
    %v1608 = vsel %vm1480, 1.0, 0.0
    %v1609 = vsel %vm1481, 1.0, 0.0
    %v1610 = vsel %vm1482, 1.0, 0.0
    %v1611 = vsel %vm1483, 1.0, 0.0
    %v1612 = vsel %vm1484, 1.0, 0.0
    %v1613 = vsel %vm1485, 1.0, 0.0
    %v1614 = vsel %vm1486, 1.0, 0.0
    %v1615 = vsel %vm1487, 1.0, 0.0
    %v1616 = vsel %vm1488, 1.0, 0.0
    %v1617 = vsel %vm1489, 1.0, 0.0
    %v1618 = vsel %vm1490, 1.0, 0.0
    %v1619 = vsel %vm1491, 1.0, 0.0
    %v1620 = vsel %vm1492, 1.0, 0.0
    %v1621 = vsel %vm1493, 1.0, 0.0
    %v1622 = vsel %vm1494, 1.0, 0.0
    %v1623 = vsel %vm1495, 1.0, 0.0
    %v1624 = vsel %vm1496, 1.0, 0.0
    %v1625 = vsel %vm1497, 1.0, 0.0
    %v1626 = vsel %vm1498, 1.0, 0.0
    %v1627 = vsel %vm1499, 1.0, 0.0
    %v1628 = vsel %vm1500, 1.0, 0.0
    %v1629 = vsel %vm1501, 1.0, 0.0
    %v1630 = vsel %vm1502, 1.0, 0.0
    %v1631 = vsel %vm1503, 1.0, 0.0
    %v1632 = vsel %vm1504, 1.0, 0.0
    %v1633 = vsel %vm1505, 1.0, 0.0
    %v1634 = vsel %vm1506, 1.0, 0.0
    %v1635 = vsel %vm1507, 1.0, 0.0
    %v1636 = vsel %vm1508, 1.0, 0.0
    %v1637 = vsel %vm1509, 1.0, 0.0
    %v1638 = vsel %vm1510, 1.0, 0.0
    %v1639 = vsel %vm1511, 1.0, 0.0
    %v1640 = vsel %vm1512, 1.0, 0.0
    %v1641 = vsel %vm1513, 1.0, 0.0
    %v1642 = vsel %vm1514, 1.0, 0.0
    %v1643 = vsel %vm1515, 1.0, 0.0
    %v1644 = vsel %vm1516, 1.0, 0.0
    %v1645 = vsel %vm1517, 1.0, 0.0
    %v1646 = vsel %vm1518, 1.0, 0.0
    %v1647 = vsel %vm1519, 1.0, 0.0
    %v1648 = vsel %vm1520, 1.0, 0.0
    %v1649 = vsel %vm1521, 1.0, 0.0
    %v1650 = vsel %vm1522, 1.0, 0.0
    %v1651 = vsel %vm1523, 1.0, 0.0
    %v1652 = vsel %vm1524, 1.0, 0.0
    %v1653 = vsel %vm1525, 1.0, 0.0
    %v1654 = vsel %vm1526, 1.0, 0.0
    %v1655 = vsel %vm1527, 1.0, 0.0
    %v1656 = vsel %vm1528, 1.0, 0.0
    %v1657 = vsel %vm1529, 1.0, 0.0
    %v1658 = vsel %vm1530, 1.0, 0.0
    %v1659 = vsel %vm1531, 1.0, 0.0
    %v1660 = vsel %vm1532, 1.0, 0.0
    %v1661 = vsel %vm1533, 1.0, 0.0
    %v1662 = vsel %vm1534, 1.0, 0.0
    %v1663 = vsel %vm1535, 1.0, 0.0
    %v1664 = vsel %vm1536, 1.0, 0.0
    %v1665 = vsel %vm1537, 1.0, 0.0
    %v1666 = vsel %vm1538, 1.0, 0.0
    %v1667 = vsel %vm1539, 1.0, 0.0
    %v1668 = vsel %vm1540, 1.0, 0.0
    %v1669 = vsel %vm1541, 1.0, 0.0
    %v1670 = vsel %vm1542, 1.0, 0.0
    %v1671 = vsel %vm1543, 1.0, 0.0
    %v1672 = vsel %vm1544, 1.0, 0.0
    %v1673 = vsel %vm1545, 1.0, 0.0
    %v1674 = vsel %vm1546, 1.0, 0.0
    %v1675 = vsel %vm1547, 1.0, 0.0
    %v1676 = vsel %vm1548, 1.0, 0.0
    %v1677 = vsel %vm1549, 1.0, 0.0
    %v1678 = vlaneseq
    %v1679 = vshrl.u32 %v1678, 7
    %v1680 = vsub.s32 0, %v1679
    %v1681 = vrot.slane %v105, %v1680
    %v1682 = vlaneseq
    %v1683 = vshrl.u32 %v1682, 7
    %v1684 = vsub.s32 0, %v1683
    %v1685 = vrot.slane %v119, %v1684
    %v1686 = vlaneseq
    %v1687 = vshrl.u32 %v1686, 7
    %v1688 = vsub.s32 0, %v1687
    %v1689 = vrot.slane %v127, %v1688
    %v1690 = vlaneseq
    %v1691 = vshrl.u32 %v1690, 7
    %v1692 = vsub.s32 0, %v1691
    %v1693 = vrot.slane %v129, %v1692
    %v1694 = vlaneseq
    %v1695 = vshrl.u32 %v1694, 7
    %v1696 = vsub.s32 0, %v1695
    %v1697 = vrot.slane %v112, %v1696
    %v1698 = vlaneseq
    %v1699 = vshrl.u32 %v1698, 7
    %v1700 = vsub.s32 0, %v1699
    %v1701 = vrot.slane %v126, %v1700
    %v1702 = vlaneseq
    %v1703 = vshrl.u32 %v1702, 7
    %v1704 = vsub.s32 0, %v1703
    %v1705 = vrot.slane %v128, %v1704
    %v1706 = vlaneseq
    %v1707 = vshrl.u32 %v1706, 7
    %v1708 = vsub.s32 0, %v1707
    %v1709 = vrot.slane %v130, %v1708
    %v1718 = vmul.f32 %v1681, %v1550
    %v1719 = vmul.f32 %v1681, %v1551
    %v1720 = vmul.f32 %v1681, %v1552
    %v1721 = vmul.f32 %v1681, %v1553
    %v1722 = vmul.f32 %v1681, %v1554
    %v1723 = vmul.f32 %v1681, %v1555
    %v1724 = vmul.f32 %v1681, %v1556
    %v1725 = vmul.f32 %v1681, %v1557
    %v1726 = vmul.f32 %v1681, %v1558
    %v1727 = vmul.f32 %v1681, %v1559
    %v1728 = vmul.f32 %v1681, %v1560
    %v1729 = vmul.f32 %v1681, %v1561
    %v1730 = vmul.f32 %v1681, %v1562
    %v1731 = vmul.f32 %v1681, %v1563
    %v1732 = vmul.f32 %v1681, %v1564
    %v1733 = vmul.f32 %v1681, %v1565
    %v1734 = vmul.f32 %v1685, %v1566
    %v1735 = vmul.f32 %v1685, %v1567
    %v1736 = vmul.f32 %v1685, %v1568
    %v1737 = vmul.f32 %v1685, %v1569
    %v1738 = vmul.f32 %v1685, %v1570
    %v1739 = vmul.f32 %v1685, %v1571
    %v1740 = vmul.f32 %v1685, %v1572
    %v1741 = vmul.f32 %v1685, %v1573
    %v1742 = vmul.f32 %v1685, %v1574
    %v1743 = vmul.f32 %v1685, %v1575
    %v1744 = vmul.f32 %v1685, %v1576
    %v1745 = vmul.f32 %v1685, %v1577
    %v1746 = vmul.f32 %v1685, %v1578
    %v1747 = vmul.f32 %v1685, %v1579
    %v1748 = vmul.f32 %v1685, %v1580
    %v1749 = vmul.f32 %v1685, %v1581
    %v1750 = vmul.f32 %v1689, %v1582
    %v1751 = vmul.f32 %v1689, %v1583
    %v1752 = vmul.f32 %v1689, %v1584
    %v1753 = vmul.f32 %v1689, %v1585
    %v1754 = vmul.f32 %v1689, %v1586
    %v1755 = vmul.f32 %v1689, %v1587
    %v1756 = vmul.f32 %v1689, %v1588
    %v1757 = vmul.f32 %v1689, %v1589
    %v1758 = vmul.f32 %v1689, %v1590
    %v1759 = vmul.f32 %v1689, %v1591
    %v1760 = vmul.f32 %v1689, %v1592
    %v1761 = vmul.f32 %v1689, %v1593
    %v1762 = vmul.f32 %v1689, %v1594
    %v1763 = vmul.f32 %v1689, %v1595
    %v1764 = vmul.f32 %v1689, %v1596
    %v1765 = vmul.f32 %v1689, %v1597
    %v1766 = vmul.f32 %v1693, %v1598
    %v1767 = vmul.f32 %v1693, %v1599
    %v1768 = vmul.f32 %v1693, %v1600
    %v1769 = vmul.f32 %v1693, %v1601
    %v1770 = vmul.f32 %v1693, %v1602
    %v1771 = vmul.f32 %v1693, %v1603
    %v1772 = vmul.f32 %v1693, %v1604
    %v1773 = vmul.f32 %v1693, %v1605
    %v1774 = vmul.f32 %v1693, %v1606
    %v1775 = vmul.f32 %v1693, %v1607
    %v1776 = vmul.f32 %v1693, %v1608
    %v1777 = vmul.f32 %v1693, %v1609
    %v1778 = vmul.f32 %v1693, %v1610
    %v1779 = vmul.f32 %v1693, %v1611
    %v1780 = vmul.f32 %v1693, %v1612
    %v1781 = vmul.f32 %v1693, %v1613
    %v1782 = vmul.f32 %v1697, %v1614
    %v1783 = vmul.f32 %v1697, %v1615
    %v1784 = vmul.f32 %v1697, %v1616
    %v1785 = vmul.f32 %v1697, %v1617
    %v1786 = vmul.f32 %v1697, %v1618
    %v1787 = vmul.f32 %v1697, %v1619
    %v1788 = vmul.f32 %v1697, %v1620
    %v1789 = vmul.f32 %v1697, %v1621
    %v1790 = vmul.f32 %v1697, %v1622
    %v1791 = vmul.f32 %v1697, %v1623
    %v1792 = vmul.f32 %v1697, %v1624
    %v1793 = vmul.f32 %v1697, %v1625
    %v1794 = vmul.f32 %v1697, %v1626
    %v1795 = vmul.f32 %v1697, %v1627
    %v1796 = vmul.f32 %v1697, %v1628
    %v1797 = vmul.f32 %v1697, %v1629
    %v1798 = vmul.f32 %v1701, %v1630
    %v1799 = vmul.f32 %v1701, %v1631
    %v1800 = vmul.f32 %v1701, %v1632
    %v1801 = vmul.f32 %v1701, %v1633
    %v1802 = vmul.f32 %v1701, %v1634
    %v1803 = vmul.f32 %v1701, %v1635
    %v1804 = vmul.f32 %v1701, %v1636
    %v1805 = vmul.f32 %v1701, %v1637
    %v1806 = vmul.f32 %v1701, %v1638
    %v1807 = vmul.f32 %v1701, %v1639
    %v1808 = vmul.f32 %v1701, %v1640
    %v1809 = vmul.f32 %v1701, %v1641
    %v1810 = vmul.f32 %v1701, %v1642
    %v1811 = vmul.f32 %v1701, %v1643
    %v1812 = vmul.f32 %v1701, %v1644
    %v1813 = vmul.f32 %v1701, %v1645
    %v1814 = vmul.f32 %v1705, %v1646
    %v1815 = vmul.f32 %v1705, %v1647
    %v1816 = vmul.f32 %v1705, %v1648
    %v1817 = vmul.f32 %v1705, %v1649
    %v1818 = vmul.f32 %v1705, %v1650
    %v1819 = vmul.f32 %v1705, %v1651
    %v1820 = vmul.f32 %v1705, %v1652
    %v1821 = vmul.f32 %v1705, %v1653
    %v1822 = vmul.f32 %v1705, %v1654
    %v1823 = vmul.f32 %v1705, %v1655
    %v1824 = vmul.f32 %v1705, %v1656
    %v1825 = vmul.f32 %v1705, %v1657
    %v1826 = vmul.f32 %v1705, %v1658
    %v1827 = vmul.f32 %v1705, %v1659
    %v1828 = vmul.f32 %v1705, %v1660
    %v1829 = vmul.f32 %v1705, %v1661
    %v1830 = vmul.f32 %v1709, %v1662
    %v1831 = vmul.f32 %v1709, %v1663
    %v1832 = vmul.f32 %v1709, %v1664
    %v1833 = vmul.f32 %v1709, %v1665
    %v1834 = vmul.f32 %v1709, %v1666
    %v1835 = vmul.f32 %v1709, %v1667
    %v1836 = vmul.f32 %v1709, %v1668
    %v1837 = vmul.f32 %v1709, %v1669
    %v1838 = vmul.f32 %v1709, %v1670
    %v1839 = vmul.f32 %v1709, %v1671
    %v1840 = vmul.f32 %v1709, %v1672
    %v1841 = vmul.f32 %v1709, %v1673
    %v1842 = vmul.f32 %v1709, %v1674
    %v1843 = vmul.f32 %v1709, %v1675
    %v1844 = vmul.f32 %v1709, %v1676
    %v1845 = vmul.f32 %v1709, %v1677
    %1846 = vadd.xlane.f32.xlu0 %v1718
    %v1847 = vpop.xlane.xlu0 %1846
    %1848 = vadd.xlane.f32.xlu0 %v1719
    %v1849 = vpop.xlane.xlu0 %1848
    %1850 = vadd.xlane.f32.xlu0 %v1720
    %v1851 = vpop.xlane.xlu0 %1850
    %1852 = vadd.xlane.f32.xlu0 %v1721
    %v1853 = vpop.xlane.xlu0 %1852
    %1854 = vadd.xlane.f32.xlu0 %v1722
    %v1855 = vpop.xlane.xlu0 %1854
    %1856 = vadd.xlane.f32.xlu0 %v1723
    %v1857 = vpop.xlane.xlu0 %1856
    %1858 = vadd.xlane.f32.xlu0 %v1724
    %v1859 = vpop.xlane.xlu0 %1858
    %1860 = vadd.xlane.f32.xlu0 %v1725
    %v1861 = vpop.xlane.xlu0 %1860
    %1862 = vadd.xlane.f32.xlu0 %v1726
    %v1863 = vpop.xlane.xlu0 %1862
    %1864 = vadd.xlane.f32.xlu0 %v1727
    %v1865 = vpop.xlane.xlu0 %1864
    %1866 = vadd.xlane.f32.xlu0 %v1728
    %v1867 = vpop.xlane.xlu0 %1866
    %1868 = vadd.xlane.f32.xlu0 %v1729
    %v1869 = vpop.xlane.xlu0 %1868
    %1870 = vadd.xlane.f32.xlu0 %v1730
    %v1871 = vpop.xlane.xlu0 %1870
    %1872 = vadd.xlane.f32.xlu0 %v1731
    %v1873 = vpop.xlane.xlu0 %1872
    %1874 = vadd.xlane.f32.xlu0 %v1732
    %v1875 = vpop.xlane.xlu0 %1874
    %1876 = vadd.xlane.f32.xlu0 %v1733
    %v1877 = vpop.xlane.xlu0 %1876
    %1878 = vadd.xlane.f32.xlu0 %v1734
    %v1879 = vpop.xlane.xlu0 %1878
    %1880 = vadd.xlane.f32.xlu0 %v1735
    %v1881 = vpop.xlane.xlu0 %1880
    %1882 = vadd.xlane.f32.xlu0 %v1736
    %v1883 = vpop.xlane.xlu0 %1882
    %1884 = vadd.xlane.f32.xlu0 %v1737
    %v1885 = vpop.xlane.xlu0 %1884
    %1886 = vadd.xlane.f32.xlu0 %v1738
    %v1887 = vpop.xlane.xlu0 %1886
    %1888 = vadd.xlane.f32.xlu0 %v1739
    %v1889 = vpop.xlane.xlu0 %1888
    %1890 = vadd.xlane.f32.xlu0 %v1740
    %v1891 = vpop.xlane.xlu0 %1890
    %1892 = vadd.xlane.f32.xlu0 %v1741
    %v1893 = vpop.xlane.xlu0 %1892
    %1894 = vadd.xlane.f32.xlu0 %v1742
    %v1895 = vpop.xlane.xlu0 %1894
    %1896 = vadd.xlane.f32.xlu0 %v1743
    %v1897 = vpop.xlane.xlu0 %1896
    %1898 = vadd.xlane.f32.xlu0 %v1744
    %v1899 = vpop.xlane.xlu0 %1898
    %1900 = vadd.xlane.f32.xlu0 %v1745
    %v1901 = vpop.xlane.xlu0 %1900
    %1902 = vadd.xlane.f32.xlu0 %v1746
    %v1903 = vpop.xlane.xlu0 %1902
    %1904 = vadd.xlane.f32.xlu0 %v1747
    %v1905 = vpop.xlane.xlu0 %1904
    %1906 = vadd.xlane.f32.xlu0 %v1748
    %v1907 = vpop.xlane.xlu0 %1906
    %1908 = vadd.xlane.f32.xlu0 %v1749
    %v1909 = vpop.xlane.xlu0 %1908
    %1910 = vadd.xlane.f32.xlu0 %v1750
    %v1911 = vpop.xlane.xlu0 %1910
    %1912 = vadd.xlane.f32.xlu0 %v1751
    %v1913 = vpop.xlane.xlu0 %1912
    %1914 = vadd.xlane.f32.xlu0 %v1752
    %v1915 = vpop.xlane.xlu0 %1914
    %1916 = vadd.xlane.f32.xlu0 %v1753
    %v1917 = vpop.xlane.xlu0 %1916
    %1918 = vadd.xlane.f32.xlu0 %v1754
    %v1919 = vpop.xlane.xlu0 %1918
    %1920 = vadd.xlane.f32.xlu0 %v1755
    %v1921 = vpop.xlane.xlu0 %1920
    %1922 = vadd.xlane.f32.xlu0 %v1756
    %v1923 = vpop.xlane.xlu0 %1922
    %1924 = vadd.xlane.f32.xlu0 %v1757
    %v1925 = vpop.xlane.xlu0 %1924
    %1926 = vadd.xlane.f32.xlu0 %v1758
    %v1927 = vpop.xlane.xlu0 %1926
    %1928 = vadd.xlane.f32.xlu0 %v1759
    %v1929 = vpop.xlane.xlu0 %1928
    %1930 = vadd.xlane.f32.xlu0 %v1760
    %v1931 = vpop.xlane.xlu0 %1930
    %1932 = vadd.xlane.f32.xlu0 %v1761
    %v1933 = vpop.xlane.xlu0 %1932
    %1934 = vadd.xlane.f32.xlu0 %v1762
    %v1935 = vpop.xlane.xlu0 %1934
    %1936 = vadd.xlane.f32.xlu0 %v1763
    %v1937 = vpop.xlane.xlu0 %1936
    %1938 = vadd.xlane.f32.xlu0 %v1764
    %v1939 = vpop.xlane.xlu0 %1938
    %1940 = vadd.xlane.f32.xlu0 %v1765
    %v1941 = vpop.xlane.xlu0 %1940
    %1942 = vadd.xlane.f32.xlu0 %v1766
    %v1943 = vpop.xlane.xlu0 %1942
    %1944 = vadd.xlane.f32.xlu0 %v1767
    %v1945 = vpop.xlane.xlu0 %1944
    %1946 = vadd.xlane.f32.xlu0 %v1768
    %v1947 = vpop.xlane.xlu0 %1946
    %1948 = vadd.xlane.f32.xlu0 %v1769
    %v1949 = vpop.xlane.xlu0 %1948
    %1950 = vadd.xlane.f32.xlu0 %v1770
    %v1951 = vpop.xlane.xlu0 %1950
    %1952 = vadd.xlane.f32.xlu0 %v1771
    %v1953 = vpop.xlane.xlu0 %1952
    %1954 = vadd.xlane.f32.xlu0 %v1772
    %v1955 = vpop.xlane.xlu0 %1954
    %1956 = vadd.xlane.f32.xlu0 %v1773
    %v1957 = vpop.xlane.xlu0 %1956
    %1958 = vadd.xlane.f32.xlu0 %v1774
    %v1959 = vpop.xlane.xlu0 %1958
    %1960 = vadd.xlane.f32.xlu0 %v1775
    %v1961 = vpop.xlane.xlu0 %1960
    %1962 = vadd.xlane.f32.xlu0 %v1776
    %v1963 = vpop.xlane.xlu0 %1962
    %1964 = vadd.xlane.f32.xlu0 %v1777
    %v1965 = vpop.xlane.xlu0 %1964
    %1966 = vadd.xlane.f32.xlu0 %v1778
    %v1967 = vpop.xlane.xlu0 %1966
    %1968 = vadd.xlane.f32.xlu0 %v1779
    %v1969 = vpop.xlane.xlu0 %1968
    %1970 = vadd.xlane.f32.xlu0 %v1780
    %v1971 = vpop.xlane.xlu0 %1970
    %1972 = vadd.xlane.f32.xlu0 %v1781
    %v1973 = vpop.xlane.xlu0 %1972
    %1974 = vadd.xlane.f32.xlu0 %v1782
    %v1975 = vpop.xlane.xlu0 %1974
    %1976 = vadd.xlane.f32.xlu0 %v1783
    %v1977 = vpop.xlane.xlu0 %1976
    %1978 = vadd.xlane.f32.xlu0 %v1784
    %v1979 = vpop.xlane.xlu0 %1978
    %1980 = vadd.xlane.f32.xlu0 %v1785
    %v1981 = vpop.xlane.xlu0 %1980
    %1982 = vadd.xlane.f32.xlu0 %v1786
    %v1983 = vpop.xlane.xlu0 %1982
    %1984 = vadd.xlane.f32.xlu0 %v1787
    %v1985 = vpop.xlane.xlu0 %1984
    %1986 = vadd.xlane.f32.xlu0 %v1788
    %v1987 = vpop.xlane.xlu0 %1986
    %1988 = vadd.xlane.f32.xlu0 %v1789
    %v1989 = vpop.xlane.xlu0 %1988
    %1990 = vadd.xlane.f32.xlu0 %v1790
    %v1991 = vpop.xlane.xlu0 %1990
    %1992 = vadd.xlane.f32.xlu0 %v1791
    %v1993 = vpop.xlane.xlu0 %1992
    %1994 = vadd.xlane.f32.xlu0 %v1792
    %v1995 = vpop.xlane.xlu0 %1994
    %1996 = vadd.xlane.f32.xlu0 %v1793
    %v1997 = vpop.xlane.xlu0 %1996
    %1998 = vadd.xlane.f32.xlu0 %v1794
    %v1999 = vpop.xlane.xlu0 %1998
    %2000 = vadd.xlane.f32.xlu0 %v1795
    %v2001 = vpop.xlane.xlu0 %2000
    %2002 = vadd.xlane.f32.xlu0 %v1796
    %v2003 = vpop.xlane.xlu0 %2002
    %2004 = vadd.xlane.f32.xlu0 %v1797
    %v2005 = vpop.xlane.xlu0 %2004
    %2006 = vadd.xlane.f32.xlu0 %v1798
    %v2007 = vpop.xlane.xlu0 %2006
    %2008 = vadd.xlane.f32.xlu0 %v1799
    %v2009 = vpop.xlane.xlu0 %2008
    %2010 = vadd.xlane.f32.xlu0 %v1800
    %v2011 = vpop.xlane.xlu0 %2010
    %2012 = vadd.xlane.f32.xlu0 %v1801
    %v2013 = vpop.xlane.xlu0 %2012
    %2014 = vadd.xlane.f32.xlu0 %v1802
    %v2015 = vpop.xlane.xlu0 %2014
    %2016 = vadd.xlane.f32.xlu0 %v1803
    %v2017 = vpop.xlane.xlu0 %2016
    %2018 = vadd.xlane.f32.xlu0 %v1804
    %v2019 = vpop.xlane.xlu0 %2018
    %2020 = vadd.xlane.f32.xlu0 %v1805
    %v2021 = vpop.xlane.xlu0 %2020
    %2022 = vadd.xlane.f32.xlu0 %v1806
    %v2023 = vpop.xlane.xlu0 %2022
    %2024 = vadd.xlane.f32.xlu0 %v1807
    %v2025 = vpop.xlane.xlu0 %2024
    %2026 = vadd.xlane.f32.xlu0 %v1808
    %v2027 = vpop.xlane.xlu0 %2026
    %2028 = vadd.xlane.f32.xlu0 %v1809
    %v2029 = vpop.xlane.xlu0 %2028
    %2030 = vadd.xlane.f32.xlu0 %v1810
    %v2031 = vpop.xlane.xlu0 %2030
    %2032 = vadd.xlane.f32.xlu0 %v1811
    %v2033 = vpop.xlane.xlu0 %2032
    %2034 = vadd.xlane.f32.xlu0 %v1812
    %v2035 = vpop.xlane.xlu0 %2034
    %2036 = vadd.xlane.f32.xlu0 %v1813
    %v2037 = vpop.xlane.xlu0 %2036
    %2038 = vadd.xlane.f32.xlu0 %v1814
    %v2039 = vpop.xlane.xlu0 %2038
    %2040 = vadd.xlane.f32.xlu0 %v1815
    %v2041 = vpop.xlane.xlu0 %2040
    %2042 = vadd.xlane.f32.xlu0 %v1816
    %v2043 = vpop.xlane.xlu0 %2042
    %2044 = vadd.xlane.f32.xlu0 %v1817
    %v2045 = vpop.xlane.xlu0 %2044
    %2046 = vadd.xlane.f32.xlu0 %v1818
    %v2047 = vpop.xlane.xlu0 %2046
    %2048 = vadd.xlane.f32.xlu0 %v1819
    %v2049 = vpop.xlane.xlu0 %2048
    %2050 = vadd.xlane.f32.xlu0 %v1820
    %v2051 = vpop.xlane.xlu0 %2050
    %2052 = vadd.xlane.f32.xlu0 %v1821
    %v2053 = vpop.xlane.xlu0 %2052
    %2054 = vadd.xlane.f32.xlu0 %v1822
    %v2055 = vpop.xlane.xlu0 %2054
    %2056 = vadd.xlane.f32.xlu0 %v1823
    %v2057 = vpop.xlane.xlu0 %2056
    %2058 = vadd.xlane.f32.xlu0 %v1824
    %v2059 = vpop.xlane.xlu0 %2058
    %2060 = vadd.xlane.f32.xlu0 %v1825
    %v2061 = vpop.xlane.xlu0 %2060
    %2062 = vadd.xlane.f32.xlu0 %v1826
    %v2063 = vpop.xlane.xlu0 %2062
    %2064 = vadd.xlane.f32.xlu0 %v1827
    %v2065 = vpop.xlane.xlu0 %2064
    %2066 = vadd.xlane.f32.xlu0 %v1828
    %v2067 = vpop.xlane.xlu0 %2066
    %2068 = vadd.xlane.f32.xlu0 %v1829
    %v2069 = vpop.xlane.xlu0 %2068
    %2070 = vadd.xlane.f32.xlu0 %v1830
    %v2071 = vpop.xlane.xlu0 %2070
    %2072 = vadd.xlane.f32.xlu0 %v1831
    %v2073 = vpop.xlane.xlu0 %2072
    %2074 = vadd.xlane.f32.xlu0 %v1832
    %v2075 = vpop.xlane.xlu0 %2074
    %2076 = vadd.xlane.f32.xlu0 %v1833
    %v2077 = vpop.xlane.xlu0 %2076
    %2078 = vadd.xlane.f32.xlu0 %v1834
    %v2079 = vpop.xlane.xlu0 %2078
    %2080 = vadd.xlane.f32.xlu0 %v1835
    %v2081 = vpop.xlane.xlu0 %2080
    %2082 = vadd.xlane.f32.xlu0 %v1836
    %v2083 = vpop.xlane.xlu0 %2082
    %2084 = vadd.xlane.f32.xlu0 %v1837
    %v2085 = vpop.xlane.xlu0 %2084
    %2086 = vadd.xlane.f32.xlu0 %v1838
    %v2087 = vpop.xlane.xlu0 %2086
    %2088 = vadd.xlane.f32.xlu0 %v1839
    %v2089 = vpop.xlane.xlu0 %2088
    %2090 = vadd.xlane.f32.xlu0 %v1840
    %v2091 = vpop.xlane.xlu0 %2090
    %2092 = vadd.xlane.f32.xlu0 %v1841
    %v2093 = vpop.xlane.xlu0 %2092
    %2094 = vadd.xlane.f32.xlu0 %v1842
    %v2095 = vpop.xlane.xlu0 %2094
    %2096 = vadd.xlane.f32.xlu0 %v1843
    %v2097 = vpop.xlane.xlu0 %2096
    %2098 = vadd.xlane.f32.xlu0 %v1844
    %v2099 = vpop.xlane.xlu0 %2098
    %2100 = vadd.xlane.f32.xlu0 %v1845
    %v2101 = vpop.xlane.xlu0 %2100
    %v2102 = vsel %vm1166, 1.0, 0.0
    %v2103 = vsel %vm1167, 1.0, 0.0
    %v2104 = vsel %vm1168, 1.0, 0.0
    %v2105 = vsel %vm1169, 1.0, 0.0
    %v2106 = vsel %vm1170, 1.0, 0.0
    %v2107 = vsel %vm1171, 1.0, 0.0
    %v2108 = vsel %vm1172, 1.0, 0.0
    %v2109 = vsel %vm1173, 1.0, 0.0
    %v2110 = vsel %vm1174, 1.0, 0.0
    %v2111 = vsel %vm1175, 1.0, 0.0
    %v2112 = vsel %vm1176, 1.0, 0.0
    %v2113 = vsel %vm1177, 1.0, 0.0
    %v2114 = vsel %vm1178, 1.0, 0.0
    %v2115 = vsel %vm1179, 1.0, 0.0
    %v2116 = vsel %vm1180, 1.0, 0.0
    %v2117 = vsel %vm1181, 1.0, 0.0
    %v2118 = vsel %vm1182, 1.0, 0.0
    %v2119 = vsel %vm1183, 1.0, 0.0
    %v2120 = vsel %vm1184, 1.0, 0.0
    %v2121 = vsel %vm1185, 1.0, 0.0
    %v2122 = vsel %vm1186, 1.0, 0.0
    %v2123 = vsel %vm1187, 1.0, 0.0
    %v2124 = vsel %vm1188, 1.0, 0.0
    %v2125 = vsel %vm1189, 1.0, 0.0
    %v2126 = vsel %vm1190, 1.0, 0.0
    %v2127 = vsel %vm1191, 1.0, 0.0
    %v2128 = vsel %vm1192, 1.0, 0.0
    %v2129 = vsel %vm1193, 1.0, 0.0
    %v2130 = vsel %vm1194, 1.0, 0.0
    %v2131 = vsel %vm1195, 1.0, 0.0
    %v2132 = vsel %vm1196, 1.0, 0.0
    %v2133 = vsel %vm1197, 1.0, 0.0
    %v2134 = vsel %vm1198, 1.0, 0.0
    %v2135 = vsel %vm1199, 1.0, 0.0
    %v2136 = vsel %vm1200, 1.0, 0.0
    %v2137 = vsel %vm1201, 1.0, 0.0
    %v2138 = vsel %vm1202, 1.0, 0.0
    %v2139 = vsel %vm1203, 1.0, 0.0
    %v2140 = vsel %vm1204, 1.0, 0.0
    %v2141 = vsel %vm1205, 1.0, 0.0
    %v2142 = vsel %vm1206, 1.0, 0.0
    %v2143 = vsel %vm1207, 1.0, 0.0
    %v2144 = vsel %vm1208, 1.0, 0.0
    %v2145 = vsel %vm1209, 1.0, 0.0
    %v2146 = vsel %vm1210, 1.0, 0.0
    %v2147 = vsel %vm1211, 1.0, 0.0
    %v2148 = vsel %vm1212, 1.0, 0.0
    %v2149 = vsel %vm1213, 1.0, 0.0
    %v2150 = vsel %vm1214, 1.0, 0.0
    %v2151 = vsel %vm1215, 1.0, 0.0
    %v2152 = vsel %vm1216, 1.0, 0.0
    %v2153 = vsel %vm1217, 1.0, 0.0
    %v2154 = vsel %vm1218, 1.0, 0.0
    %v2155 = vsel %vm1219, 1.0, 0.0
    %v2156 = vsel %vm1220, 1.0, 0.0
    %v2157 = vsel %vm1221, 1.0, 0.0
    %v2158 = vsel %vm1222, 1.0, 0.0
    %v2159 = vsel %vm1223, 1.0, 0.0
    %v2160 = vsel %vm1224, 1.0, 0.0
    %v2161 = vsel %vm1225, 1.0, 0.0
    %v2162 = vsel %vm1226, 1.0, 0.0
    %v2163 = vsel %vm1227, 1.0, 0.0
    %v2164 = vsel %vm1228, 1.0, 0.0
    %v2165 = vsel %vm1229, 1.0, 0.0
    %v2166 = vsel %vm1230, 1.0, 0.0
    %v2167 = vsel %vm1231, 1.0, 0.0
    %v2168 = vsel %vm1232, 1.0, 0.0
    %v2169 = vsel %vm1233, 1.0, 0.0
    %v2170 = vsel %vm1234, 1.0, 0.0
    %v2171 = vsel %vm1235, 1.0, 0.0
    %v2172 = vsel %vm1236, 1.0, 0.0
    %v2173 = vsel %vm1237, 1.0, 0.0
    %v2174 = vsel %vm1238, 1.0, 0.0
    %v2175 = vsel %vm1239, 1.0, 0.0
    %v2176 = vsel %vm1240, 1.0, 0.0
    %v2177 = vsel %vm1241, 1.0, 0.0
    %v2178 = vsel %vm1242, 1.0, 0.0
    %v2179 = vsel %vm1243, 1.0, 0.0
    %v2180 = vsel %vm1244, 1.0, 0.0
    %v2181 = vsel %vm1245, 1.0, 0.0
    %v2182 = vsel %vm1246, 1.0, 0.0
    %v2183 = vsel %vm1247, 1.0, 0.0
    %v2184 = vsel %vm1248, 1.0, 0.0
    %v2185 = vsel %vm1249, 1.0, 0.0
    %v2186 = vsel %vm1250, 1.0, 0.0
    %v2187 = vsel %vm1251, 1.0, 0.0
    %v2188 = vsel %vm1252, 1.0, 0.0
    %v2189 = vsel %vm1253, 1.0, 0.0
    %v2190 = vsel %vm1254, 1.0, 0.0
    %v2191 = vsel %vm1255, 1.0, 0.0
    %v2192 = vsel %vm1256, 1.0, 0.0
    %v2193 = vsel %vm1257, 1.0, 0.0
    %v2194 = vsel %vm1258, 1.0, 0.0
    %v2195 = vsel %vm1259, 1.0, 0.0
    %v2196 = vsel %vm1260, 1.0, 0.0
    %v2197 = vsel %vm1261, 1.0, 0.0
    %v2198 = vsel %vm1262, 1.0, 0.0
    %v2199 = vsel %vm1263, 1.0, 0.0
    %v2200 = vsel %vm1264, 1.0, 0.0
    %v2201 = vsel %vm1265, 1.0, 0.0
    %v2202 = vsel %vm1266, 1.0, 0.0
    %v2203 = vsel %vm1267, 1.0, 0.0
    %v2204 = vsel %vm1268, 1.0, 0.0
    %v2205 = vsel %vm1269, 1.0, 0.0
    %v2206 = vsel %vm1270, 1.0, 0.0
    %v2207 = vsel %vm1271, 1.0, 0.0
    %v2208 = vsel %vm1272, 1.0, 0.0
    %v2209 = vsel %vm1273, 1.0, 0.0
    %v2210 = vsel %vm1274, 1.0, 0.0
    %v2211 = vsel %vm1275, 1.0, 0.0
    %v2212 = vsel %vm1276, 1.0, 0.0
    %v2213 = vsel %vm1277, 1.0, 0.0
    %v2214 = vsel %vm1278, 1.0, 0.0
    %v2215 = vsel %vm1279, 1.0, 0.0
    %v2216 = vsel %vm1280, 1.0, 0.0
    %v2217 = vsel %vm1281, 1.0, 0.0
    %v2218 = vsel %vm1282, 1.0, 0.0
    %v2219 = vsel %vm1283, 1.0, 0.0
    %v2220 = vsel %vm1284, 1.0, 0.0
    %v2221 = vsel %vm1285, 1.0, 0.0
    %v2222 = vsel %vm1286, 1.0, 0.0
    %v2223 = vsel %vm1287, 1.0, 0.0
    %v2224 = vsel %vm1288, 1.0, 0.0
    %v2225 = vsel %vm1289, 1.0, 0.0
    %v2226 = vsel %vm1290, 1.0, 0.0
    %v2227 = vsel %vm1291, 1.0, 0.0
    %v2228 = vsel %vm1292, 1.0, 0.0
    %v2229 = vsel %vm1293, 1.0, 0.0
    %v2230 = vmul.f32 %v1681, %v2102
    %v2231 = vmul.f32 %v1681, %v2103
    %v2232 = vmul.f32 %v1681, %v2104
    %v2233 = vmul.f32 %v1681, %v2105
    %v2234 = vmul.f32 %v1681, %v2106
    %v2235 = vmul.f32 %v1681, %v2107
    %v2236 = vmul.f32 %v1681, %v2108
    %v2237 = vmul.f32 %v1681, %v2109
    %v2238 = vmul.f32 %v1681, %v2110
    %v2239 = vmul.f32 %v1681, %v2111
    %v2240 = vmul.f32 %v1681, %v2112
    %v2241 = vmul.f32 %v1681, %v2113
    %v2242 = vmul.f32 %v1681, %v2114
    %v2243 = vmul.f32 %v1681, %v2115
    %v2244 = vmul.f32 %v1681, %v2116
    %v2245 = vmul.f32 %v1681, %v2117
    %v2246 = vmul.f32 %v1685, %v2118
    %v2247 = vmul.f32 %v1685, %v2119
    %v2248 = vmul.f32 %v1685, %v2120
    %v2249 = vmul.f32 %v1685, %v2121
    %v2250 = vmul.f32 %v1685, %v2122
    %v2251 = vmul.f32 %v1685, %v2123
    %v2252 = vmul.f32 %v1685, %v2124
    %v2253 = vmul.f32 %v1685, %v2125
    %v2254 = vmul.f32 %v1685, %v2126
    %v2255 = vmul.f32 %v1685, %v2127
    %v2256 = vmul.f32 %v1685, %v2128
    %v2257 = vmul.f32 %v1685, %v2129
    %v2258 = vmul.f32 %v1685, %v2130
    %v2259 = vmul.f32 %v1685, %v2131
    %v2260 = vmul.f32 %v1685, %v2132
    %v2261 = vmul.f32 %v1685, %v2133
    %v2262 = vmul.f32 %v1689, %v2134
    %v2263 = vmul.f32 %v1689, %v2135
    %v2264 = vmul.f32 %v1689, %v2136
    %v2265 = vmul.f32 %v1689, %v2137
    %v2266 = vmul.f32 %v1689, %v2138
    %v2267 = vmul.f32 %v1689, %v2139
    %v2268 = vmul.f32 %v1689, %v2140
    %v2269 = vmul.f32 %v1689, %v2141
    %v2270 = vmul.f32 %v1689, %v2142
    %v2271 = vmul.f32 %v1689, %v2143
    %v2272 = vmul.f32 %v1689, %v2144
    %v2273 = vmul.f32 %v1689, %v2145
    %v2274 = vmul.f32 %v1689, %v2146
    %v2275 = vmul.f32 %v1689, %v2147
    %v2276 = vmul.f32 %v1689, %v2148
    %v2277 = vmul.f32 %v1689, %v2149
    %v2278 = vmul.f32 %v1693, %v2150
    %v2279 = vmul.f32 %v1693, %v2151
    %v2280 = vmul.f32 %v1693, %v2152
    %v2281 = vmul.f32 %v1693, %v2153
    %v2282 = vmul.f32 %v1693, %v2154
    %v2283 = vmul.f32 %v1693, %v2155
    %v2284 = vmul.f32 %v1693, %v2156
    %v2285 = vmul.f32 %v1693, %v2157
    %v2286 = vmul.f32 %v1693, %v2158
    %v2287 = vmul.f32 %v1693, %v2159
    %v2288 = vmul.f32 %v1693, %v2160
    %v2289 = vmul.f32 %v1693, %v2161
    %v2290 = vmul.f32 %v1693, %v2162
    %v2291 = vmul.f32 %v1693, %v2163
    %v2292 = vmul.f32 %v1693, %v2164
    %v2293 = vmul.f32 %v1693, %v2165
    %v2294 = vmul.f32 %v1697, %v2166
    %v2295 = vmul.f32 %v1697, %v2167
    %v2296 = vmul.f32 %v1697, %v2168
    %v2297 = vmul.f32 %v1697, %v2169
    %v2298 = vmul.f32 %v1697, %v2170
    %v2299 = vmul.f32 %v1697, %v2171
    %v2300 = vmul.f32 %v1697, %v2172
    %v2301 = vmul.f32 %v1697, %v2173
    %v2302 = vmul.f32 %v1697, %v2174
    %v2303 = vmul.f32 %v1697, %v2175
    %v2304 = vmul.f32 %v1697, %v2176
    %v2305 = vmul.f32 %v1697, %v2177
    %v2306 = vmul.f32 %v1697, %v2178
    %v2307 = vmul.f32 %v1697, %v2179
    %v2308 = vmul.f32 %v1697, %v2180
    %v2309 = vmul.f32 %v1697, %v2181
    %v2310 = vmul.f32 %v1701, %v2182
    %v2311 = vmul.f32 %v1701, %v2183
    %v2312 = vmul.f32 %v1701, %v2184
    %v2313 = vmul.f32 %v1701, %v2185
    %v2314 = vmul.f32 %v1701, %v2186
    %v2315 = vmul.f32 %v1701, %v2187
    %v2316 = vmul.f32 %v1701, %v2188
    %v2317 = vmul.f32 %v1701, %v2189
    %v2318 = vmul.f32 %v1701, %v2190
    %v2319 = vmul.f32 %v1701, %v2191
    %v2320 = vmul.f32 %v1701, %v2192
    %v2321 = vmul.f32 %v1701, %v2193
    %v2322 = vmul.f32 %v1701, %v2194
    %v2323 = vmul.f32 %v1701, %v2195
    %v2324 = vmul.f32 %v1701, %v2196
    %v2325 = vmul.f32 %v1701, %v2197
    %v2326 = vmul.f32 %v1705, %v2198
    %v2327 = vmul.f32 %v1705, %v2199
    %v2328 = vmul.f32 %v1705, %v2200
    %v2329 = vmul.f32 %v1705, %v2201
    %v2330 = vmul.f32 %v1705, %v2202
    %v2331 = vmul.f32 %v1705, %v2203
    %v2332 = vmul.f32 %v1705, %v2204
    %v2333 = vmul.f32 %v1705, %v2205
    %v2334 = vmul.f32 %v1705, %v2206
    %v2335 = vmul.f32 %v1705, %v2207
    %v2336 = vmul.f32 %v1705, %v2208
    %v2337 = vmul.f32 %v1705, %v2209
    %v2338 = vmul.f32 %v1705, %v2210
    %v2339 = vmul.f32 %v1705, %v2211
    %v2340 = vmul.f32 %v1705, %v2212
    %v2341 = vmul.f32 %v1705, %v2213
    %v2342 = vmul.f32 %v1709, %v2214
    %v2343 = vmul.f32 %v1709, %v2215
    %v2344 = vmul.f32 %v1709, %v2216
    %v2345 = vmul.f32 %v1709, %v2217
    %v2346 = vmul.f32 %v1709, %v2218
    %v2347 = vmul.f32 %v1709, %v2219
    %v2348 = vmul.f32 %v1709, %v2220
    %v2349 = vmul.f32 %v1709, %v2221
    %v2350 = vmul.f32 %v1709, %v2222
    %v2351 = vmul.f32 %v1709, %v2223
    %v2352 = vmul.f32 %v1709, %v2224
    %v2353 = vmul.f32 %v1709, %v2225
    %v2354 = vmul.f32 %v1709, %v2226
    %v2355 = vmul.f32 %v1709, %v2227
    %v2356 = vmul.f32 %v1709, %v2228
    %v2357 = vmul.f32 %v1709, %v2229
    %2358 = vadd.xlane.f32.xlu0 %v2230
    %v2359 = vpop.xlane.xlu0 %2358
    %2360 = vadd.xlane.f32.xlu0 %v2231
    %v2361 = vpop.xlane.xlu0 %2360
    %2362 = vadd.xlane.f32.xlu0 %v2232
    %v2363 = vpop.xlane.xlu0 %2362
    %2364 = vadd.xlane.f32.xlu0 %v2233
    %v2365 = vpop.xlane.xlu0 %2364
    %2366 = vadd.xlane.f32.xlu0 %v2234
    %v2367 = vpop.xlane.xlu0 %2366
    %2368 = vadd.xlane.f32.xlu0 %v2235
    %v2369 = vpop.xlane.xlu0 %2368
    %2370 = vadd.xlane.f32.xlu0 %v2236
    %v2371 = vpop.xlane.xlu0 %2370
    %2372 = vadd.xlane.f32.xlu0 %v2237
    %v2373 = vpop.xlane.xlu0 %2372
    %2374 = vadd.xlane.f32.xlu0 %v2238
    %v2375 = vpop.xlane.xlu0 %2374
    %2376 = vadd.xlane.f32.xlu0 %v2239
    %v2377 = vpop.xlane.xlu0 %2376
    %2378 = vadd.xlane.f32.xlu0 %v2240
    %v2379 = vpop.xlane.xlu0 %2378
    %2380 = vadd.xlane.f32.xlu0 %v2241
    %v2381 = vpop.xlane.xlu0 %2380
    %2382 = vadd.xlane.f32.xlu0 %v2242
    %v2383 = vpop.xlane.xlu0 %2382
    %2384 = vadd.xlane.f32.xlu0 %v2243
    %v2385 = vpop.xlane.xlu0 %2384
    %2386 = vadd.xlane.f32.xlu0 %v2244
    %v2387 = vpop.xlane.xlu0 %2386
    %2388 = vadd.xlane.f32.xlu0 %v2245
    %v2389 = vpop.xlane.xlu0 %2388
    %2390 = vadd.xlane.f32.xlu0 %v2246
    %v2391 = vpop.xlane.xlu0 %2390
    %2392 = vadd.xlane.f32.xlu0 %v2247
    %v2393 = vpop.xlane.xlu0 %2392
    %2394 = vadd.xlane.f32.xlu0 %v2248
    %v2395 = vpop.xlane.xlu0 %2394
    %2396 = vadd.xlane.f32.xlu0 %v2249
    %v2397 = vpop.xlane.xlu0 %2396
    %2398 = vadd.xlane.f32.xlu0 %v2250
    %v2399 = vpop.xlane.xlu0 %2398
    %2400 = vadd.xlane.f32.xlu0 %v2251
    %v2401 = vpop.xlane.xlu0 %2400
    %2402 = vadd.xlane.f32.xlu0 %v2252
    %v2403 = vpop.xlane.xlu0 %2402
    %2404 = vadd.xlane.f32.xlu0 %v2253
    %v2405 = vpop.xlane.xlu0 %2404
    %2406 = vadd.xlane.f32.xlu0 %v2254
    %v2407 = vpop.xlane.xlu0 %2406
    %2408 = vadd.xlane.f32.xlu0 %v2255
    %v2409 = vpop.xlane.xlu0 %2408
    %2410 = vadd.xlane.f32.xlu0 %v2256
    %v2411 = vpop.xlane.xlu0 %2410
    %2412 = vadd.xlane.f32.xlu0 %v2257
    %v2413 = vpop.xlane.xlu0 %2412
    %2414 = vadd.xlane.f32.xlu0 %v2258
    %v2415 = vpop.xlane.xlu0 %2414
    %2416 = vadd.xlane.f32.xlu0 %v2259
    %v2417 = vpop.xlane.xlu0 %2416
    %2418 = vadd.xlane.f32.xlu0 %v2260
    %v2419 = vpop.xlane.xlu0 %2418
    %2420 = vadd.xlane.f32.xlu0 %v2261
    %v2421 = vpop.xlane.xlu0 %2420
    %2422 = vadd.xlane.f32.xlu0 %v2262
    %v2423 = vpop.xlane.xlu0 %2422
    %2424 = vadd.xlane.f32.xlu0 %v2263
    %v2425 = vpop.xlane.xlu0 %2424
    %2426 = vadd.xlane.f32.xlu0 %v2264
    %v2427 = vpop.xlane.xlu0 %2426
    %2428 = vadd.xlane.f32.xlu0 %v2265
    %v2429 = vpop.xlane.xlu0 %2428
    %2430 = vadd.xlane.f32.xlu0 %v2266
    %v2431 = vpop.xlane.xlu0 %2430
    %2432 = vadd.xlane.f32.xlu0 %v2267
    %v2433 = vpop.xlane.xlu0 %2432
    %2434 = vadd.xlane.f32.xlu0 %v2268
    %v2435 = vpop.xlane.xlu0 %2434
    %2436 = vadd.xlane.f32.xlu0 %v2269
    %v2437 = vpop.xlane.xlu0 %2436
    %2438 = vadd.xlane.f32.xlu0 %v2270
    %v2439 = vpop.xlane.xlu0 %2438
    %2440 = vadd.xlane.f32.xlu0 %v2271
    %v2441 = vpop.xlane.xlu0 %2440
    %2442 = vadd.xlane.f32.xlu0 %v2272
    %v2443 = vpop.xlane.xlu0 %2442
    %2444 = vadd.xlane.f32.xlu0 %v2273
    %v2445 = vpop.xlane.xlu0 %2444
    %2446 = vadd.xlane.f32.xlu0 %v2274
    %v2447 = vpop.xlane.xlu0 %2446
    %2448 = vadd.xlane.f32.xlu0 %v2275
    %v2449 = vpop.xlane.xlu0 %2448
    %2450 = vadd.xlane.f32.xlu0 %v2276
    %v2451 = vpop.xlane.xlu0 %2450
    %2452 = vadd.xlane.f32.xlu0 %v2277
    %v2453 = vpop.xlane.xlu0 %2452
    %2454 = vadd.xlane.f32.xlu0 %v2278
    %v2455 = vpop.xlane.xlu0 %2454
    %2456 = vadd.xlane.f32.xlu0 %v2279
    %v2457 = vpop.xlane.xlu0 %2456
    %2458 = vadd.xlane.f32.xlu0 %v2280
    %v2459 = vpop.xlane.xlu0 %2458
    %2460 = vadd.xlane.f32.xlu0 %v2281
    %v2461 = vpop.xlane.xlu0 %2460
    %2462 = vadd.xlane.f32.xlu0 %v2282
    %v2463 = vpop.xlane.xlu0 %2462
    %2464 = vadd.xlane.f32.xlu0 %v2283
    %v2465 = vpop.xlane.xlu0 %2464
    %2466 = vadd.xlane.f32.xlu0 %v2284
    %v2467 = vpop.xlane.xlu0 %2466
    %2468 = vadd.xlane.f32.xlu0 %v2285
    %v2469 = vpop.xlane.xlu0 %2468
    %2470 = vadd.xlane.f32.xlu0 %v2286
    %v2471 = vpop.xlane.xlu0 %2470
    %2472 = vadd.xlane.f32.xlu0 %v2287
    %v2473 = vpop.xlane.xlu0 %2472
    %2474 = vadd.xlane.f32.xlu0 %v2288
    %v2475 = vpop.xlane.xlu0 %2474
    %2476 = vadd.xlane.f32.xlu0 %v2289
    %v2477 = vpop.xlane.xlu0 %2476
    %2478 = vadd.xlane.f32.xlu0 %v2290
    %v2479 = vpop.xlane.xlu0 %2478
    %2480 = vadd.xlane.f32.xlu0 %v2291
    %v2481 = vpop.xlane.xlu0 %2480
    %2482 = vadd.xlane.f32.xlu0 %v2292
    %v2483 = vpop.xlane.xlu0 %2482
    %2484 = vadd.xlane.f32.xlu0 %v2293
    %v2485 = vpop.xlane.xlu0 %2484
    %2486 = vadd.xlane.f32.xlu0 %v2294
    %v2487 = vpop.xlane.xlu0 %2486
    %2488 = vadd.xlane.f32.xlu0 %v2295
    %v2489 = vpop.xlane.xlu0 %2488
    %2490 = vadd.xlane.f32.xlu0 %v2296
    %v2491 = vpop.xlane.xlu0 %2490
    %2492 = vadd.xlane.f32.xlu0 %v2297
    %v2493 = vpop.xlane.xlu0 %2492
    %2494 = vadd.xlane.f32.xlu0 %v2298
    %v2495 = vpop.xlane.xlu0 %2494
    %2496 = vadd.xlane.f32.xlu0 %v2299
    %v2497 = vpop.xlane.xlu0 %2496
    %2498 = vadd.xlane.f32.xlu0 %v2300
    %v2499 = vpop.xlane.xlu0 %2498
    %2500 = vadd.xlane.f32.xlu0 %v2301
    %v2501 = vpop.xlane.xlu0 %2500
    %2502 = vadd.xlane.f32.xlu0 %v2302
    %v2503 = vpop.xlane.xlu0 %2502
    %2504 = vadd.xlane.f32.xlu0 %v2303
    %v2505 = vpop.xlane.xlu0 %2504
    %2506 = vadd.xlane.f32.xlu0 %v2304
    %v2507 = vpop.xlane.xlu0 %2506
    %2508 = vadd.xlane.f32.xlu0 %v2305
    %v2509 = vpop.xlane.xlu0 %2508
    %2510 = vadd.xlane.f32.xlu0 %v2306
    %v2511 = vpop.xlane.xlu0 %2510
    %2512 = vadd.xlane.f32.xlu0 %v2307
    %v2513 = vpop.xlane.xlu0 %2512
    %2514 = vadd.xlane.f32.xlu0 %v2308
    %v2515 = vpop.xlane.xlu0 %2514
    %2516 = vadd.xlane.f32.xlu0 %v2309
    %v2517 = vpop.xlane.xlu0 %2516
    %2518 = vadd.xlane.f32.xlu0 %v2310
    %v2519 = vpop.xlane.xlu0 %2518
    %2520 = vadd.xlane.f32.xlu0 %v2311
    %v2521 = vpop.xlane.xlu0 %2520
    %2522 = vadd.xlane.f32.xlu0 %v2312
    %v2523 = vpop.xlane.xlu0 %2522
    %2524 = vadd.xlane.f32.xlu0 %v2313
    %v2525 = vpop.xlane.xlu0 %2524
    %2526 = vadd.xlane.f32.xlu0 %v2314
    %v2527 = vpop.xlane.xlu0 %2526
    %2528 = vadd.xlane.f32.xlu0 %v2315
    %v2529 = vpop.xlane.xlu0 %2528
    %2530 = vadd.xlane.f32.xlu0 %v2316
    %v2531 = vpop.xlane.xlu0 %2530
    %2532 = vadd.xlane.f32.xlu0 %v2317
    %v2533 = vpop.xlane.xlu0 %2532
    %2534 = vadd.xlane.f32.xlu0 %v2318
    %v2535 = vpop.xlane.xlu0 %2534
    %2536 = vadd.xlane.f32.xlu0 %v2319
    %v2537 = vpop.xlane.xlu0 %2536
    %2538 = vadd.xlane.f32.xlu0 %v2320
    %v2539 = vpop.xlane.xlu0 %2538
    %2540 = vadd.xlane.f32.xlu0 %v2321
    %v2541 = vpop.xlane.xlu0 %2540
    %2542 = vadd.xlane.f32.xlu0 %v2322
    %v2543 = vpop.xlane.xlu0 %2542
    %2544 = vadd.xlane.f32.xlu0 %v2323
    %v2545 = vpop.xlane.xlu0 %2544
    %2546 = vadd.xlane.f32.xlu0 %v2324
    %v2547 = vpop.xlane.xlu0 %2546
    %2548 = vadd.xlane.f32.xlu0 %v2325
    %v2549 = vpop.xlane.xlu0 %2548
    %2550 = vadd.xlane.f32.xlu0 %v2326
    %v2551 = vpop.xlane.xlu0 %2550
    %2552 = vadd.xlane.f32.xlu0 %v2327
    %v2553 = vpop.xlane.xlu0 %2552
    %2554 = vadd.xlane.f32.xlu0 %v2328
    %v2555 = vpop.xlane.xlu0 %2554
    %2556 = vadd.xlane.f32.xlu0 %v2329
    %v2557 = vpop.xlane.xlu0 %2556
    %2558 = vadd.xlane.f32.xlu0 %v2330
    %v2559 = vpop.xlane.xlu0 %2558
    %2560 = vadd.xlane.f32.xlu0 %v2331
    %v2561 = vpop.xlane.xlu0 %2560
    %2562 = vadd.xlane.f32.xlu0 %v2332
    %v2563 = vpop.xlane.xlu0 %2562
    %2564 = vadd.xlane.f32.xlu0 %v2333
    %v2565 = vpop.xlane.xlu0 %2564
    %2566 = vadd.xlane.f32.xlu0 %v2334
    %v2567 = vpop.xlane.xlu0 %2566
    %2568 = vadd.xlane.f32.xlu0 %v2335
    %v2569 = vpop.xlane.xlu0 %2568
    %2570 = vadd.xlane.f32.xlu0 %v2336
    %v2571 = vpop.xlane.xlu0 %2570
    %2572 = vadd.xlane.f32.xlu0 %v2337
    %v2573 = vpop.xlane.xlu0 %2572
    %2574 = vadd.xlane.f32.xlu0 %v2338
    %v2575 = vpop.xlane.xlu0 %2574
    %2576 = vadd.xlane.f32.xlu0 %v2339
    %v2577 = vpop.xlane.xlu0 %2576
    %2578 = vadd.xlane.f32.xlu0 %v2340
    %v2579 = vpop.xlane.xlu0 %2578
    %2580 = vadd.xlane.f32.xlu0 %v2341
    %v2581 = vpop.xlane.xlu0 %2580
    %2582 = vadd.xlane.f32.xlu0 %v2342
    %v2583 = vpop.xlane.xlu0 %2582
    %2584 = vadd.xlane.f32.xlu0 %v2343
    %v2585 = vpop.xlane.xlu0 %2584
    %2586 = vadd.xlane.f32.xlu0 %v2344
    %v2587 = vpop.xlane.xlu0 %2586
    %2588 = vadd.xlane.f32.xlu0 %v2345
    %v2589 = vpop.xlane.xlu0 %2588
    %2590 = vadd.xlane.f32.xlu0 %v2346
    %v2591 = vpop.xlane.xlu0 %2590
    %2592 = vadd.xlane.f32.xlu0 %v2347
    %v2593 = vpop.xlane.xlu0 %2592
    %2594 = vadd.xlane.f32.xlu0 %v2348
    %v2595 = vpop.xlane.xlu0 %2594
    %2596 = vadd.xlane.f32.xlu0 %v2349
    %v2597 = vpop.xlane.xlu0 %2596
    %2598 = vadd.xlane.f32.xlu0 %v2350
    %v2599 = vpop.xlane.xlu0 %2598
    %2600 = vadd.xlane.f32.xlu0 %v2351
    %v2601 = vpop.xlane.xlu0 %2600
    %2602 = vadd.xlane.f32.xlu0 %v2352
    %v2603 = vpop.xlane.xlu0 %2602
    %2604 = vadd.xlane.f32.xlu0 %v2353
    %v2605 = vpop.xlane.xlu0 %2604
    %2606 = vadd.xlane.f32.xlu0 %v2354
    %v2607 = vpop.xlane.xlu0 %2606
    %2608 = vadd.xlane.f32.xlu0 %v2355
    %v2609 = vpop.xlane.xlu0 %2608
    %2610 = vadd.xlane.f32.xlu0 %v2356
    %v2611 = vpop.xlane.xlu0 %2610
    %2612 = vadd.xlane.f32.xlu0 %v2357
    %v2613 = vpop.xlane.xlu0 %2612
    %v2614 = vadd.f32 %v70, 1e-08
    %v2615 = vlog2.pop %v2614
    %v2616 = vmul.f32 %v2615, 0.6931472
    %v2745 = vlaneseq
    %v2746 = vshrl.u32 %v2745, 7
    %v2747 = vsub.s32 %v79, %v2746
    %v2748 = vrot.slane %v2359, %v2747
    %v2749 = vadd.s32 %v79, 4294967288
    %v2750 = vlaneseq
    %v2751 = vshrl.u32 %v2750, 7
    %v2752 = vsub.s32 %v2749, %v2751
    %v2753 = vrot.slane %v2361, %v2752
    %vm2754 = vcmask 130112
    %v2755 = vsel %vm2754, %v2753, %v2748
    %v2756 = vadd.s32 %v79, 4294967280
    %v2757 = vlaneseq
    %v2758 = vshrl.u32 %v2757, 7
    %v2759 = vsub.s32 %v2756, %v2758
    %v2760 = vrot.slane %v2363, %v2759
    %vm2761 = vcmask 195712
    %v2762 = vsel %vm2761, %v2760, %v2755
    %v2763 = vadd.s32 %v79, 4294967272
    %v2764 = vlaneseq
    %v2765 = vshrl.u32 %v2764, 7
    %v2766 = vsub.s32 %v2763, %v2765
    %v2767 = vrot.slane %v2365, %v2766
    %vm2768 = vcmask 261312
    %v2769 = vsel %vm2768, %v2767, %v2762
    %v2770 = vadd.s32 %v79, 4294967264
    %v2771 = vlaneseq
    %v2772 = vshrl.u32 %v2771, 7
    %v2773 = vsub.s32 %v2770, %v2772
    %v2774 = vrot.slane %v2367, %v2773
    %vm2775 = vcmask 326912
    %v2776 = vsel %vm2775, %v2774, %v2769
    %v2777 = vadd.s32 %v79, 4294967256
    %v2778 = vlaneseq
    %v2779 = vshrl.u32 %v2778, 7
    %v2780 = vsub.s32 %v2777, %v2779
    %v2781 = vrot.slane %v2369, %v2780
    %vm2782 = vcmask 392512
    %v2783 = vsel %vm2782, %v2781, %v2776
    %v2784 = vadd.s32 %v79, 4294967248
    %v2785 = vlaneseq
    %v2786 = vshrl.u32 %v2785, 7
    %v2787 = vsub.s32 %v2784, %v2786
    %v2788 = vrot.slane %v2371, %v2787
    %vm2789 = vcmask 458112
    %v2790 = vsel %vm2789, %v2788, %v2783
    %v2791 = vadd.s32 %v79, 4294967240
    %v2792 = vlaneseq
    %v2793 = vshrl.u32 %v2792, 7
    %v2794 = vsub.s32 %v2791, %v2793
    %v2795 = vrot.slane %v2373, %v2794
    %vm2796 = vcmask 523712
    %v2797 = vsel %vm2796, %v2795, %v2790
    %v2798 = vadd.s32 %v79, 4294967232
    %v2799 = vlaneseq
    %v2800 = vshrl.u32 %v2799, 7
    %v2801 = vsub.s32 %v2798, %v2800
    %v2802 = vrot.slane %v2375, %v2801
    %vm2803 = vcmask 589312
    %v2804 = vsel %vm2803, %v2802, %v2797
    %v2805 = vadd.s32 %v79, 4294967224
    %v2806 = vlaneseq
    %v2807 = vshrl.u32 %v2806, 7
    %v2808 = vsub.s32 %v2805, %v2807
    %v2809 = vrot.slane %v2377, %v2808
    %vm2810 = vcmask 654912
    %v2811 = vsel %vm2810, %v2809, %v2804
    %v2812 = vadd.s32 %v79, 4294967216
    %v2813 = vlaneseq
    %v2814 = vshrl.u32 %v2813, 7
    %v2815 = vsub.s32 %v2812, %v2814
    %v2816 = vrot.slane %v2379, %v2815
    %vm2817 = vcmask 720512
    %v2818 = vsel %vm2817, %v2816, %v2811
    %v2819 = vadd.s32 %v79, 4294967208
    %v2820 = vlaneseq
    %v2821 = vshrl.u32 %v2820, 7
    %v2822 = vsub.s32 %v2819, %v2821
    %v2823 = vrot.slane %v2381, %v2822
    %vm2824 = vcmask 786112
    %v2825 = vsel %vm2824, %v2823, %v2818
    %v2826 = vadd.s32 %v79, 4294967200
    %v2827 = vlaneseq
    %v2828 = vshrl.u32 %v2827, 7
    %v2829 = vsub.s32 %v2826, %v2828
    %v2830 = vrot.slane %v2383, %v2829
    %vm2831 = vcmask 851712
    %v2832 = vsel %vm2831, %v2830, %v2825
    %v2833 = vadd.s32 %v79, 4294967192
    %v2834 = vlaneseq
    %v2835 = vshrl.u32 %v2834, 7
    %v2836 = vsub.s32 %v2833, %v2835
    %v2837 = vrot.slane %v2385, %v2836
    %vm2838 = vcmask 917312
    %v2839 = vsel %vm2838, %v2837, %v2832
    %v2840 = vadd.s32 %v79, 4294967184
    %v2841 = vlaneseq
    %v2842 = vshrl.u32 %v2841, 7
    %v2843 = vsub.s32 %v2840, %v2842
    %v2844 = vrot.slane %v2387, %v2843
    %vm2845 = vcmask 982912
    %v2846 = vsel %vm2845, %v2844, %v2839
    %v2847 = vadd.s32 %v79, 4294967176
    %v2848 = vlaneseq
    %v2849 = vshrl.u32 %v2848, 7
    %v2850 = vsub.s32 %v2847, %v2849
    %v2851 = vrot.slane %v2389, %v2850
    %vm2852 = vcmask 1048512
    %v2853 = vsel %vm2852, %v2851, %v2846
    %v2854 = vlaneseq
    %v2855 = vshrl.u32 %v2854, 7
    %v2856 = vsub.s32 %v79, %v2855
    %v2857 = vrot.slane %v2391, %v2856
    %v2858 = vlaneseq
    %v2859 = vshrl.u32 %v2858, 7
    %v2860 = vsub.s32 %v2749, %v2859
    %v2861 = vrot.slane %v2393, %v2860
    %v2862 = vsel %vm2754, %v2861, %v2857
    %v2863 = vlaneseq
    %v2864 = vshrl.u32 %v2863, 7
    %v2865 = vsub.s32 %v2756, %v2864
    %v2866 = vrot.slane %v2395, %v2865
    %v2867 = vsel %vm2761, %v2866, %v2862
    %v2868 = vlaneseq
    %v2869 = vshrl.u32 %v2868, 7
    %v2870 = vsub.s32 %v2763, %v2869
    %v2871 = vrot.slane %v2397, %v2870
    %v2872 = vsel %vm2768, %v2871, %v2867
    %v2873 = vlaneseq
    %v2874 = vshrl.u32 %v2873, 7
    %v2875 = vsub.s32 %v2770, %v2874
    %v2876 = vrot.slane %v2399, %v2875
    %v2877 = vsel %vm2775, %v2876, %v2872
    %v2878 = vlaneseq
    %v2879 = vshrl.u32 %v2878, 7
    %v2880 = vsub.s32 %v2777, %v2879
    %v2881 = vrot.slane %v2401, %v2880
    %v2882 = vsel %vm2782, %v2881, %v2877
    %v2883 = vlaneseq
    %v2884 = vshrl.u32 %v2883, 7
    %v2885 = vsub.s32 %v2784, %v2884
    %v2886 = vrot.slane %v2403, %v2885
    %v2887 = vsel %vm2789, %v2886, %v2882
    %v2888 = vlaneseq
    %v2889 = vshrl.u32 %v2888, 7
    %v2890 = vsub.s32 %v2791, %v2889
    %v2891 = vrot.slane %v2405, %v2890
    %v2892 = vsel %vm2796, %v2891, %v2887
    %v2893 = vlaneseq
    %v2894 = vshrl.u32 %v2893, 7
    %v2895 = vsub.s32 %v2798, %v2894
    %v2896 = vrot.slane %v2407, %v2895
    %v2897 = vsel %vm2803, %v2896, %v2892
    %v2898 = vlaneseq
    %v2899 = vshrl.u32 %v2898, 7
    %v2900 = vsub.s32 %v2805, %v2899
    %v2901 = vrot.slane %v2409, %v2900
    %v2902 = vsel %vm2810, %v2901, %v2897
    %v2903 = vlaneseq
    %v2904 = vshrl.u32 %v2903, 7
    %v2905 = vsub.s32 %v2812, %v2904
    %v2906 = vrot.slane %v2411, %v2905
    %v2907 = vsel %vm2817, %v2906, %v2902
    %v2908 = vlaneseq
    %v2909 = vshrl.u32 %v2908, 7
    %v2910 = vsub.s32 %v2819, %v2909
    %v2911 = vrot.slane %v2413, %v2910
    %v2912 = vsel %vm2824, %v2911, %v2907
    %v2913 = vlaneseq
    %v2914 = vshrl.u32 %v2913, 7
    %v2915 = vsub.s32 %v2826, %v2914
    %v2916 = vrot.slane %v2415, %v2915
    %v2917 = vsel %vm2831, %v2916, %v2912
    %v2918 = vlaneseq
    %v2919 = vshrl.u32 %v2918, 7
    %v2920 = vsub.s32 %v2833, %v2919
    %v2921 = vrot.slane %v2417, %v2920
    %v2922 = vsel %vm2838, %v2921, %v2917
    %v2923 = vlaneseq
    %v2924 = vshrl.u32 %v2923, 7
    %v2925 = vsub.s32 %v2840, %v2924
    %v2926 = vrot.slane %v2419, %v2925
    %v2927 = vsel %vm2845, %v2926, %v2922
    %v2928 = vlaneseq
    %v2929 = vshrl.u32 %v2928, 7
    %v2930 = vsub.s32 %v2847, %v2929
    %v2931 = vrot.slane %v2421, %v2930
    %v2932 = vsel %vm2852, %v2931, %v2927
    %v2933 = vlaneseq
    %v2934 = vshrl.u32 %v2933, 7
    %v2935 = vsub.s32 %v79, %v2934
    %v2936 = vrot.slane %v2423, %v2935
    %v2937 = vlaneseq
    %v2938 = vshrl.u32 %v2937, 7
    %v2939 = vsub.s32 %v2749, %v2938
    %v2940 = vrot.slane %v2425, %v2939
    %v2941 = vsel %vm2754, %v2940, %v2936
    %v2942 = vlaneseq
    %v2943 = vshrl.u32 %v2942, 7
    %v2944 = vsub.s32 %v2756, %v2943
    %v2945 = vrot.slane %v2427, %v2944
    %v2946 = vsel %vm2761, %v2945, %v2941
    %v2947 = vlaneseq
    %v2948 = vshrl.u32 %v2947, 7
    %v2949 = vsub.s32 %v2763, %v2948
    %v2950 = vrot.slane %v2429, %v2949
    %v2951 = vsel %vm2768, %v2950, %v2946
    %v2952 = vlaneseq
    %v2953 = vshrl.u32 %v2952, 7
    %v2954 = vsub.s32 %v2770, %v2953
    %v2955 = vrot.slane %v2431, %v2954
    %v2956 = vsel %vm2775, %v2955, %v2951
    %v2957 = vlaneseq
    %v2958 = vshrl.u32 %v2957, 7
    %v2959 = vsub.s32 %v2777, %v2958
    %v2960 = vrot.slane %v2433, %v2959
    %v2961 = vsel %vm2782, %v2960, %v2956
    %v2962 = vlaneseq
    %v2963 = vshrl.u32 %v2962, 7
    %v2964 = vsub.s32 %v2784, %v2963
    %v2965 = vrot.slane %v2435, %v2964
    %v2966 = vsel %vm2789, %v2965, %v2961
    %v2967 = vlaneseq
    %v2968 = vshrl.u32 %v2967, 7
    %v2969 = vsub.s32 %v2791, %v2968
    %v2970 = vrot.slane %v2437, %v2969
    %v2971 = vsel %vm2796, %v2970, %v2966
    %v2972 = vlaneseq
    %v2973 = vshrl.u32 %v2972, 7
    %v2974 = vsub.s32 %v2798, %v2973
    %v2975 = vrot.slane %v2439, %v2974
    %v2976 = vsel %vm2803, %v2975, %v2971
    %v2977 = vlaneseq
    %v2978 = vshrl.u32 %v2977, 7
    %v2979 = vsub.s32 %v2805, %v2978
    %v2980 = vrot.slane %v2441, %v2979
    %v2981 = vsel %vm2810, %v2980, %v2976
    %v2982 = vlaneseq
    %v2983 = vshrl.u32 %v2982, 7
    %v2984 = vsub.s32 %v2812, %v2983
    %v2985 = vrot.slane %v2443, %v2984
    %v2986 = vsel %vm2817, %v2985, %v2981
    %v2987 = vlaneseq
    %v2988 = vshrl.u32 %v2987, 7
    %v2989 = vsub.s32 %v2819, %v2988
    %v2990 = vrot.slane %v2445, %v2989
    %v2991 = vsel %vm2824, %v2990, %v2986
    %v2992 = vlaneseq
    %v2993 = vshrl.u32 %v2992, 7
    %v2994 = vsub.s32 %v2826, %v2993
    %v2995 = vrot.slane %v2447, %v2994
    %v2996 = vsel %vm2831, %v2995, %v2991
    %v2997 = vlaneseq
    %v2998 = vshrl.u32 %v2997, 7
    %v2999 = vsub.s32 %v2833, %v2998
    %v3000 = vrot.slane %v2449, %v2999
    %v3001 = vsel %vm2838, %v3000, %v2996
    %v3002 = vlaneseq
    %v3003 = vshrl.u32 %v3002, 7
    %v3004 = vsub.s32 %v2840, %v3003
    %v3005 = vrot.slane %v2451, %v3004
    %v3006 = vsel %vm2845, %v3005, %v3001
    %v3007 = vlaneseq
    %v3008 = vshrl.u32 %v3007, 7
    %v3009 = vsub.s32 %v2847, %v3008
    %v3010 = vrot.slane %v2453, %v3009
    %v3011 = vsel %vm2852, %v3010, %v3006
    %v3012 = vlaneseq
    %v3013 = vshrl.u32 %v3012, 7
    %v3014 = vsub.s32 %v79, %v3013
    %v3015 = vrot.slane %v2455, %v3014
    %v3016 = vlaneseq
    %v3017 = vshrl.u32 %v3016, 7
    %v3018 = vsub.s32 %v2749, %v3017
    %v3019 = vrot.slane %v2457, %v3018
    %v3020 = vsel %vm2754, %v3019, %v3015
    %v3021 = vlaneseq
    %v3022 = vshrl.u32 %v3021, 7
    %v3023 = vsub.s32 %v2756, %v3022
    %v3024 = vrot.slane %v2459, %v3023
    %v3025 = vsel %vm2761, %v3024, %v3020
    %v3026 = vlaneseq
    %v3027 = vshrl.u32 %v3026, 7
    %v3028 = vsub.s32 %v2763, %v3027
    %v3029 = vrot.slane %v2461, %v3028
    %v3030 = vsel %vm2768, %v3029, %v3025
    %v3031 = vlaneseq
    %v3032 = vshrl.u32 %v3031, 7
    %v3033 = vsub.s32 %v2770, %v3032
    %v3034 = vrot.slane %v2463, %v3033
    %v3035 = vsel %vm2775, %v3034, %v3030
    %v3036 = vlaneseq
    %v3037 = vshrl.u32 %v3036, 7
    %v3038 = vsub.s32 %v2777, %v3037
    %v3039 = vrot.slane %v2465, %v3038
    %v3040 = vsel %vm2782, %v3039, %v3035
    %v3041 = vlaneseq
    %v3042 = vshrl.u32 %v3041, 7
    %v3043 = vsub.s32 %v2784, %v3042
    %v3044 = vrot.slane %v2467, %v3043
    %v3045 = vsel %vm2789, %v3044, %v3040
    %v3046 = vlaneseq
    %v3047 = vshrl.u32 %v3046, 7
    %v3048 = vsub.s32 %v2791, %v3047
    %v3049 = vrot.slane %v2469, %v3048
    %v3050 = vsel %vm2796, %v3049, %v3045
    %v3051 = vlaneseq
    %v3052 = vshrl.u32 %v3051, 7
    %v3053 = vsub.s32 %v2798, %v3052
    %v3054 = vrot.slane %v2471, %v3053
    %v3055 = vsel %vm2803, %v3054, %v3050
    %v3056 = vlaneseq
    %v3057 = vshrl.u32 %v3056, 7
    %v3058 = vsub.s32 %v2805, %v3057
    %v3059 = vrot.slane %v2473, %v3058
    %v3060 = vsel %vm2810, %v3059, %v3055
    %v3061 = vlaneseq
    %v3062 = vshrl.u32 %v3061, 7
    %v3063 = vsub.s32 %v2812, %v3062
    %v3064 = vrot.slane %v2475, %v3063
    %v3065 = vsel %vm2817, %v3064, %v3060
    %v3066 = vlaneseq
    %v3067 = vshrl.u32 %v3066, 7
    %v3068 = vsub.s32 %v2819, %v3067
    %v3069 = vrot.slane %v2477, %v3068
    %v3070 = vsel %vm2824, %v3069, %v3065
    %v3071 = vlaneseq
    %v3072 = vshrl.u32 %v3071, 7
    %v3073 = vsub.s32 %v2826, %v3072
    %v3074 = vrot.slane %v2479, %v3073
    %v3075 = vsel %vm2831, %v3074, %v3070
    %v3076 = vlaneseq
    %v3077 = vshrl.u32 %v3076, 7
    %v3078 = vsub.s32 %v2833, %v3077
    %v3079 = vrot.slane %v2481, %v3078
    %v3080 = vsel %vm2838, %v3079, %v3075
    %v3081 = vlaneseq
    %v3082 = vshrl.u32 %v3081, 7
    %v3083 = vsub.s32 %v2840, %v3082
    %v3084 = vrot.slane %v2483, %v3083
    %v3085 = vsel %vm2845, %v3084, %v3080
    %v3086 = vlaneseq
    %v3087 = vshrl.u32 %v3086, 7
    %v3088 = vsub.s32 %v2847, %v3087
    %v3089 = vrot.slane %v2485, %v3088
    %v3090 = vsel %vm2852, %v3089, %v3085
    %v3091 = vlaneseq
    %v3092 = vshrl.u32 %v3091, 7
    %v3093 = vsub.s32 %v79, %v3092
    %v3094 = vrot.slane %v2487, %v3093
    %v3095 = vlaneseq
    %v3096 = vshrl.u32 %v3095, 7
    %v3097 = vsub.s32 %v2749, %v3096
    %v3098 = vrot.slane %v2489, %v3097
    %v3099 = vsel %vm2754, %v3098, %v3094
    %v3100 = vlaneseq
    %v3101 = vshrl.u32 %v3100, 7
    %v3102 = vsub.s32 %v2756, %v3101
    %v3103 = vrot.slane %v2491, %v3102
    %v3104 = vsel %vm2761, %v3103, %v3099
    %v3105 = vlaneseq
    %v3106 = vshrl.u32 %v3105, 7
    %v3107 = vsub.s32 %v2763, %v3106
    %v3108 = vrot.slane %v2493, %v3107
    %v3109 = vsel %vm2768, %v3108, %v3104
    %v3110 = vlaneseq
    %v3111 = vshrl.u32 %v3110, 7
    %v3112 = vsub.s32 %v2770, %v3111
    %v3113 = vrot.slane %v2495, %v3112
    %v3114 = vsel %vm2775, %v3113, %v3109
    %v3115 = vlaneseq
    %v3116 = vshrl.u32 %v3115, 7
    %v3117 = vsub.s32 %v2777, %v3116
    %v3118 = vrot.slane %v2497, %v3117
    %v3119 = vsel %vm2782, %v3118, %v3114
    %v3120 = vlaneseq
    %v3121 = vshrl.u32 %v3120, 7
    %v3122 = vsub.s32 %v2784, %v3121
    %v3123 = vrot.slane %v2499, %v3122
    %v3124 = vsel %vm2789, %v3123, %v3119
    %v3125 = vlaneseq
    %v3126 = vshrl.u32 %v3125, 7
    %v3127 = vsub.s32 %v2791, %v3126
    %v3128 = vrot.slane %v2501, %v3127
    %v3129 = vsel %vm2796, %v3128, %v3124
    %v3130 = vlaneseq
    %v3131 = vshrl.u32 %v3130, 7
    %v3132 = vsub.s32 %v2798, %v3131
    %v3133 = vrot.slane %v2503, %v3132
    %v3134 = vsel %vm2803, %v3133, %v3129
    %v3135 = vlaneseq
    %v3136 = vshrl.u32 %v3135, 7
    %v3137 = vsub.s32 %v2805, %v3136
    %v3138 = vrot.slane %v2505, %v3137
    %v3139 = vsel %vm2810, %v3138, %v3134
    %v3140 = vlaneseq
    %v3141 = vshrl.u32 %v3140, 7
    %v3142 = vsub.s32 %v2812, %v3141
    %v3143 = vrot.slane %v2507, %v3142
    %v3144 = vsel %vm2817, %v3143, %v3139
    %v3145 = vlaneseq
    %v3146 = vshrl.u32 %v3145, 7
    %v3147 = vsub.s32 %v2819, %v3146
    %v3148 = vrot.slane %v2509, %v3147
    %v3149 = vsel %vm2824, %v3148, %v3144
    %v3150 = vlaneseq
    %v3151 = vshrl.u32 %v3150, 7
    %v3152 = vsub.s32 %v2826, %v3151
    %v3153 = vrot.slane %v2511, %v3152
    %v3154 = vsel %vm2831, %v3153, %v3149
    %v3155 = vlaneseq
    %v3156 = vshrl.u32 %v3155, 7
    %v3157 = vsub.s32 %v2833, %v3156
    %v3158 = vrot.slane %v2513, %v3157
    %v3159 = vsel %vm2838, %v3158, %v3154
    %v3160 = vlaneseq
    %v3161 = vshrl.u32 %v3160, 7
    %v3162 = vsub.s32 %v2840, %v3161
    %v3163 = vrot.slane %v2515, %v3162
    %v3164 = vsel %vm2845, %v3163, %v3159
    %v3165 = vlaneseq
    %v3166 = vshrl.u32 %v3165, 7
    %v3167 = vsub.s32 %v2847, %v3166
    %v3168 = vrot.slane %v2517, %v3167
    %v3169 = vsel %vm2852, %v3168, %v3164
    %v3170 = vlaneseq
    %v3171 = vshrl.u32 %v3170, 7
    %v3172 = vsub.s32 %v79, %v3171
    %v3173 = vrot.slane %v2519, %v3172
    %v3174 = vlaneseq
    %v3175 = vshrl.u32 %v3174, 7
    %v3176 = vsub.s32 %v2749, %v3175
    %v3177 = vrot.slane %v2521, %v3176
    %v3178 = vsel %vm2754, %v3177, %v3173
    %v3179 = vlaneseq
    %v3180 = vshrl.u32 %v3179, 7
    %v3181 = vsub.s32 %v2756, %v3180
    %v3182 = vrot.slane %v2523, %v3181
    %v3183 = vsel %vm2761, %v3182, %v3178
    %v3184 = vlaneseq
    %v3185 = vshrl.u32 %v3184, 7
    %v3186 = vsub.s32 %v2763, %v3185
    %v3187 = vrot.slane %v2525, %v3186
    %v3188 = vsel %vm2768, %v3187, %v3183
    %v3189 = vlaneseq
    %v3190 = vshrl.u32 %v3189, 7
    %v3191 = vsub.s32 %v2770, %v3190
    %v3192 = vrot.slane %v2527, %v3191
    %v3193 = vsel %vm2775, %v3192, %v3188
    %v3194 = vlaneseq
    %v3195 = vshrl.u32 %v3194, 7
    %v3196 = vsub.s32 %v2777, %v3195
    %v3197 = vrot.slane %v2529, %v3196
    %v3198 = vsel %vm2782, %v3197, %v3193
    %v3199 = vlaneseq
    %v3200 = vshrl.u32 %v3199, 7
    %v3201 = vsub.s32 %v2784, %v3200
    %v3202 = vrot.slane %v2531, %v3201
    %v3203 = vsel %vm2789, %v3202, %v3198
    %v3204 = vlaneseq
    %v3205 = vshrl.u32 %v3204, 7
    %v3206 = vsub.s32 %v2791, %v3205
    %v3207 = vrot.slane %v2533, %v3206
    %v3208 = vsel %vm2796, %v3207, %v3203
    %v3209 = vlaneseq
    %v3210 = vshrl.u32 %v3209, 7
    %v3211 = vsub.s32 %v2798, %v3210
    %v3212 = vrot.slane %v2535, %v3211
    %v3213 = vsel %vm2803, %v3212, %v3208
    %v3214 = vlaneseq
    %v3215 = vshrl.u32 %v3214, 7
    %v3216 = vsub.s32 %v2805, %v3215
    %v3217 = vrot.slane %v2537, %v3216
    %v3218 = vsel %vm2810, %v3217, %v3213
    %v3219 = vlaneseq
    %v3220 = vshrl.u32 %v3219, 7
    %v3221 = vsub.s32 %v2812, %v3220
    %v3222 = vrot.slane %v2539, %v3221
    %v3223 = vsel %vm2817, %v3222, %v3218
    %v3224 = vlaneseq
    %v3225 = vshrl.u32 %v3224, 7
    %v3226 = vsub.s32 %v2819, %v3225
    %v3227 = vrot.slane %v2541, %v3226
    %v3228 = vsel %vm2824, %v3227, %v3223
    %v3229 = vlaneseq
    %v3230 = vshrl.u32 %v3229, 7
    %v3231 = vsub.s32 %v2826, %v3230
    %v3232 = vrot.slane %v2543, %v3231
    %v3233 = vsel %vm2831, %v3232, %v3228
    %v3234 = vlaneseq
    %v3235 = vshrl.u32 %v3234, 7
    %v3236 = vsub.s32 %v2833, %v3235
    %v3237 = vrot.slane %v2545, %v3236
    %v3238 = vsel %vm2838, %v3237, %v3233
    %v3239 = vlaneseq
    %v3240 = vshrl.u32 %v3239, 7
    %v3241 = vsub.s32 %v2840, %v3240
    %v3242 = vrot.slane %v2547, %v3241
    %v3243 = vsel %vm2845, %v3242, %v3238
    %v3244 = vlaneseq
    %v3245 = vshrl.u32 %v3244, 7
    %v3246 = vsub.s32 %v2847, %v3245
    %v3247 = vrot.slane %v2549, %v3246
    %v3248 = vsel %vm2852, %v3247, %v3243
    %v3249 = vlaneseq
    %v3250 = vshrl.u32 %v3249, 7
    %v3251 = vsub.s32 %v79, %v3250
    %v3252 = vrot.slane %v2551, %v3251
    %v3253 = vlaneseq
    %v3254 = vshrl.u32 %v3253, 7
    %v3255 = vsub.s32 %v2749, %v3254
    %v3256 = vrot.slane %v2553, %v3255
    %v3257 = vsel %vm2754, %v3256, %v3252
    %v3258 = vlaneseq
    %v3259 = vshrl.u32 %v3258, 7
    %v3260 = vsub.s32 %v2756, %v3259
    %v3261 = vrot.slane %v2555, %v3260
    %v3262 = vsel %vm2761, %v3261, %v3257
    %v3263 = vlaneseq
    %v3264 = vshrl.u32 %v3263, 7
    %v3265 = vsub.s32 %v2763, %v3264
    %v3266 = vrot.slane %v2557, %v3265
    %v3267 = vsel %vm2768, %v3266, %v3262
    %v3268 = vlaneseq
    %v3269 = vshrl.u32 %v3268, 7
    %v3270 = vsub.s32 %v2770, %v3269
    %v3271 = vrot.slane %v2559, %v3270
    %v3272 = vsel %vm2775, %v3271, %v3267
    %v3273 = vlaneseq
    %v3274 = vshrl.u32 %v3273, 7
    %v3275 = vsub.s32 %v2777, %v3274
    %v3276 = vrot.slane %v2561, %v3275
    %v3277 = vsel %vm2782, %v3276, %v3272
    %v3278 = vlaneseq
    %v3279 = vshrl.u32 %v3278, 7
    %v3280 = vsub.s32 %v2784, %v3279
    %v3281 = vrot.slane %v2563, %v3280
    %v3282 = vsel %vm2789, %v3281, %v3277
    %v3283 = vlaneseq
    %v3284 = vshrl.u32 %v3283, 7
    %v3285 = vsub.s32 %v2791, %v3284
    %v3286 = vrot.slane %v2565, %v3285
    %v3287 = vsel %vm2796, %v3286, %v3282
    %v3288 = vlaneseq
    %v3289 = vshrl.u32 %v3288, 7
    %v3290 = vsub.s32 %v2798, %v3289
    %v3291 = vrot.slane %v2567, %v3290
    %v3292 = vsel %vm2803, %v3291, %v3287
    %v3293 = vlaneseq
    %v3294 = vshrl.u32 %v3293, 7
    %v3295 = vsub.s32 %v2805, %v3294
    %v3296 = vrot.slane %v2569, %v3295
    %v3297 = vsel %vm2810, %v3296, %v3292
    %v3298 = vlaneseq
    %v3299 = vshrl.u32 %v3298, 7
    %v3300 = vsub.s32 %v2812, %v3299
    %v3301 = vrot.slane %v2571, %v3300
    %v3302 = vsel %vm2817, %v3301, %v3297
    %v3303 = vlaneseq
    %v3304 = vshrl.u32 %v3303, 7
    %v3305 = vsub.s32 %v2819, %v3304
    %v3306 = vrot.slane %v2573, %v3305
    %v3307 = vsel %vm2824, %v3306, %v3302
    %v3308 = vlaneseq
    %v3309 = vshrl.u32 %v3308, 7
    %v3310 = vsub.s32 %v2826, %v3309
    %v3311 = vrot.slane %v2575, %v3310
    %v3312 = vsel %vm2831, %v3311, %v3307
    %v3313 = vlaneseq
    %v3314 = vshrl.u32 %v3313, 7
    %v3315 = vsub.s32 %v2833, %v3314
    %v3316 = vrot.slane %v2577, %v3315
    %v3317 = vsel %vm2838, %v3316, %v3312
    %v3318 = vlaneseq
    %v3319 = vshrl.u32 %v3318, 7
    %v3320 = vsub.s32 %v2840, %v3319
    %v3321 = vrot.slane %v2579, %v3320
    %v3322 = vsel %vm2845, %v3321, %v3317
    %v3323 = vlaneseq
    %v3324 = vshrl.u32 %v3323, 7
    %v3325 = vsub.s32 %v2847, %v3324
    %v3326 = vrot.slane %v2581, %v3325
    %v3327 = vsel %vm2852, %v3326, %v3322
    %v3328 = vlaneseq
    %v3329 = vshrl.u32 %v3328, 7
    %v3330 = vsub.s32 %v79, %v3329
    %v3331 = vrot.slane %v2583, %v3330
    %v3332 = vlaneseq
    %v3333 = vshrl.u32 %v3332, 7
    %v3334 = vsub.s32 %v2749, %v3333
    %v3335 = vrot.slane %v2585, %v3334
    %v3336 = vsel %vm2754, %v3335, %v3331
    %v3337 = vlaneseq
    %v3338 = vshrl.u32 %v3337, 7
    %v3339 = vsub.s32 %v2756, %v3338
    %v3340 = vrot.slane %v2587, %v3339
    %v3341 = vsel %vm2761, %v3340, %v3336
    %v3342 = vlaneseq
    %v3343 = vshrl.u32 %v3342, 7
    %v3344 = vsub.s32 %v2763, %v3343
    %v3345 = vrot.slane %v2589, %v3344
    %v3346 = vsel %vm2768, %v3345, %v3341
    %v3347 = vlaneseq
    %v3348 = vshrl.u32 %v3347, 7
    %v3349 = vsub.s32 %v2770, %v3348
    %v3350 = vrot.slane %v2591, %v3349
    %v3351 = vsel %vm2775, %v3350, %v3346
    %v3352 = vlaneseq
    %v3353 = vshrl.u32 %v3352, 7
    %v3354 = vsub.s32 %v2777, %v3353
    %v3355 = vrot.slane %v2593, %v3354
    %v3356 = vsel %vm2782, %v3355, %v3351
    %v3357 = vlaneseq
    %v3358 = vshrl.u32 %v3357, 7
    %v3359 = vsub.s32 %v2784, %v3358
    %v3360 = vrot.slane %v2595, %v3359
    %v3361 = vsel %vm2789, %v3360, %v3356
    %v3362 = vlaneseq
    %v3363 = vshrl.u32 %v3362, 7
    %v3364 = vsub.s32 %v2791, %v3363
    %v3365 = vrot.slane %v2597, %v3364
    %v3366 = vsel %vm2796, %v3365, %v3361
    %v3367 = vlaneseq
    %v3368 = vshrl.u32 %v3367, 7
    %v3369 = vsub.s32 %v2798, %v3368
    %v3370 = vrot.slane %v2599, %v3369
    %v3371 = vsel %vm2803, %v3370, %v3366
    %v3372 = vlaneseq
    %v3373 = vshrl.u32 %v3372, 7
    %v3374 = vsub.s32 %v2805, %v3373
    %v3375 = vrot.slane %v2601, %v3374
    %v3376 = vsel %vm2810, %v3375, %v3371
    %v3377 = vlaneseq
    %v3378 = vshrl.u32 %v3377, 7
    %v3379 = vsub.s32 %v2812, %v3378
    %v3380 = vrot.slane %v2603, %v3379
    %v3381 = vsel %vm2817, %v3380, %v3376
    %v3382 = vlaneseq
    %v3383 = vshrl.u32 %v3382, 7
    %v3384 = vsub.s32 %v2819, %v3383
    %v3385 = vrot.slane %v2605, %v3384
    %v3386 = vsel %vm2824, %v3385, %v3381
    %v3387 = vlaneseq
    %v3388 = vshrl.u32 %v3387, 7
    %v3389 = vsub.s32 %v2826, %v3388
    %v3390 = vrot.slane %v2607, %v3389
    %v3391 = vsel %vm2831, %v3390, %v3386
    %v3392 = vlaneseq
    %v3393 = vshrl.u32 %v3392, 7
    %v3394 = vsub.s32 %v2833, %v3393
    %v3395 = vrot.slane %v2609, %v3394
    %v3396 = vsel %vm2838, %v3395, %v3391
    %v3397 = vlaneseq
    %v3398 = vshrl.u32 %v3397, 7
    %v3399 = vsub.s32 %v2840, %v3398
    %v3400 = vrot.slane %v2611, %v3399
    %v3401 = vsel %vm2845, %v3400, %v3396
    %v3402 = vlaneseq
    %v3403 = vshrl.u32 %v3402, 7
    %v3404 = vsub.s32 %v2847, %v3403
    %v3405 = vrot.slane %v2613, %v3404
    %v3406 = vsel %vm2852, %v3405, %v3401
    %vm3407 = vcmask 1041409
    %vm3408 = vcmask 1042434
    %v3409 = vsel %vm3408, %v2853, %v2853
    %vm3410 = vcmask 1043459
    %v3411 = vsel %vm3410, %v2853, %v3409
    %vm3412 = vcmask 1044484
    %v3413 = vsel %vm3412, %v2853, %v3411
    %vm3414 = vcmask 1045509
    %v3415 = vsel %vm3414, %v2853, %v3413
    %vm3416 = vcmask 1046534
    %v3417 = vsel %vm3416, %v2853, %v3415
    %vm3418 = vcmask 1047559
    %v3419 = vsel %vm3418, %v2853, %v3417
    %v3420 = vsel %vm3408, %v2932, %v2932
    %v3421 = vsel %vm3410, %v2932, %v3420
    %v3422 = vsel %vm3412, %v2932, %v3421
    %v3423 = vsel %vm3414, %v2932, %v3422
    %v3424 = vsel %vm3416, %v2932, %v3423
    %v3425 = vsel %vm3418, %v2932, %v3424
    %v3426 = vsel %vm3408, %v3011, %v3011
    %v3427 = vsel %vm3410, %v3011, %v3426
    %v3428 = vsel %vm3412, %v3011, %v3427
    %v3429 = vsel %vm3414, %v3011, %v3428
    %v3430 = vsel %vm3416, %v3011, %v3429
    %v3431 = vsel %vm3418, %v3011, %v3430
    %v3432 = vsel %vm3408, %v3090, %v3090
    %v3433 = vsel %vm3410, %v3090, %v3432
    %v3434 = vsel %vm3412, %v3090, %v3433
    %v3435 = vsel %vm3414, %v3090, %v3434
    %v3436 = vsel %vm3416, %v3090, %v3435
    %v3437 = vsel %vm3418, %v3090, %v3436
    %v3438 = vsel %vm3408, %v3169, %v3169
    %v3439 = vsel %vm3410, %v3169, %v3438
    %v3440 = vsel %vm3412, %v3169, %v3439
    %v3441 = vsel %vm3414, %v3169, %v3440
    %v3442 = vsel %vm3416, %v3169, %v3441
    %v3443 = vsel %vm3418, %v3169, %v3442
    %v3444 = vsel %vm3408, %v3248, %v3248
    %v3445 = vsel %vm3410, %v3248, %v3444
    %v3446 = vsel %vm3412, %v3248, %v3445
    %v3447 = vsel %vm3414, %v3248, %v3446
    %v3448 = vsel %vm3416, %v3248, %v3447
    %v3449 = vsel %vm3418, %v3248, %v3448
    %v3450 = vsel %vm3408, %v3327, %v3327
    %v3451 = vsel %vm3410, %v3327, %v3450
    %v3452 = vsel %vm3412, %v3327, %v3451
    %v3453 = vsel %vm3414, %v3327, %v3452
    %v3454 = vsel %vm3416, %v3327, %v3453
    %v3455 = vsel %vm3418, %v3327, %v3454
    %v3456 = vsel %vm3408, %v3406, %v3406
    %v3457 = vsel %vm3410, %v3406, %v3456
    %v3458 = vsel %vm3412, %v3406, %v3457
    %v3459 = vsel %vm3414, %v3406, %v3458
    %v3460 = vsel %vm3416, %v3406, %v3459
    %v3461 = vsel %vm3418, %v3406, %v3460
    %vm3470 = vcmp.eq.f32.partialorder %v1847, %v3419
    %vm3471 = vcmp.eq.f32.partialorder %v1849, %v3419
    %vm3472 = vcmp.eq.f32.partialorder %v1851, %v3419
    %vm3473 = vcmp.eq.f32.partialorder %v1853, %v3419
    %vm3474 = vcmp.eq.f32.partialorder %v1855, %v3419
    %vm3475 = vcmp.eq.f32.partialorder %v1857, %v3419
    %vm3476 = vcmp.eq.f32.partialorder %v1859, %v3419
    %vm3477 = vcmp.eq.f32.partialorder %v1861, %v3419
    %vm3478 = vcmp.eq.f32.partialorder %v1863, %v3419
    %vm3479 = vcmp.eq.f32.partialorder %v1865, %v3419
    %vm3480 = vcmp.eq.f32.partialorder %v1867, %v3419
    %vm3481 = vcmp.eq.f32.partialorder %v1869, %v3419
    %vm3482 = vcmp.eq.f32.partialorder %v1871, %v3419
    %vm3483 = vcmp.eq.f32.partialorder %v1873, %v3419
    %vm3484 = vcmp.eq.f32.partialorder %v1875, %v3419
    %vm3485 = vcmp.eq.f32.partialorder %v1877, %v3419
    %vm3486 = vcmp.eq.f32.partialorder %v1879, %v3425
    %vm3487 = vcmp.eq.f32.partialorder %v1881, %v3425
    %vm3488 = vcmp.eq.f32.partialorder %v1883, %v3425
    %vm3489 = vcmp.eq.f32.partialorder %v1885, %v3425
    %vm3490 = vcmp.eq.f32.partialorder %v1887, %v3425
    %vm3491 = vcmp.eq.f32.partialorder %v1889, %v3425
    %vm3492 = vcmp.eq.f32.partialorder %v1891, %v3425
    %vm3493 = vcmp.eq.f32.partialorder %v1893, %v3425
    %vm3494 = vcmp.eq.f32.partialorder %v1895, %v3425
    %vm3495 = vcmp.eq.f32.partialorder %v1897, %v3425
    %vm3496 = vcmp.eq.f32.partialorder %v1899, %v3425
    %vm3497 = vcmp.eq.f32.partialorder %v1901, %v3425
    %vm3498 = vcmp.eq.f32.partialorder %v1903, %v3425
    %vm3499 = vcmp.eq.f32.partialorder %v1905, %v3425
    %vm3500 = vcmp.eq.f32.partialorder %v1907, %v3425
    %vm3501 = vcmp.eq.f32.partialorder %v1909, %v3425
    %vm3502 = vcmp.eq.f32.partialorder %v1911, %v3431
    %vm3503 = vcmp.eq.f32.partialorder %v1913, %v3431
    %vm3504 = vcmp.eq.f32.partialorder %v1915, %v3431
    %vm3505 = vcmp.eq.f32.partialorder %v1917, %v3431
    %vm3506 = vcmp.eq.f32.partialorder %v1919, %v3431
    %vm3507 = vcmp.eq.f32.partialorder %v1921, %v3431
    %vm3508 = vcmp.eq.f32.partialorder %v1923, %v3431
    %vm3509 = vcmp.eq.f32.partialorder %v1925, %v3431
    %vm3510 = vcmp.eq.f32.partialorder %v1927, %v3431
    %vm3511 = vcmp.eq.f32.partialorder %v1929, %v3431
    %vm3512 = vcmp.eq.f32.partialorder %v1931, %v3431
    %vm3513 = vcmp.eq.f32.partialorder %v1933, %v3431
    %vm3514 = vcmp.eq.f32.partialorder %v1935, %v3431
    %vm3515 = vcmp.eq.f32.partialorder %v1937, %v3431
    %vm3516 = vcmp.eq.f32.partialorder %v1939, %v3431
    %vm3517 = vcmp.eq.f32.partialorder %v1941, %v3431
    %vm3518 = vcmp.eq.f32.partialorder %v1943, %v3437
    %vm3519 = vcmp.eq.f32.partialorder %v1945, %v3437
    %vm3520 = vcmp.eq.f32.partialorder %v1947, %v3437
    %vm3521 = vcmp.eq.f32.partialorder %v1949, %v3437
    %vm3522 = vcmp.eq.f32.partialorder %v1951, %v3437
    %vm3523 = vcmp.eq.f32.partialorder %v1953, %v3437
    %vm3524 = vcmp.eq.f32.partialorder %v1955, %v3437
    %vm3525 = vcmp.eq.f32.partialorder %v1957, %v3437
    %vm3526 = vcmp.eq.f32.partialorder %v1959, %v3437
    %vm3527 = vcmp.eq.f32.partialorder %v1961, %v3437
    %vm3528 = vcmp.eq.f32.partialorder %v1963, %v3437
    %vm3529 = vcmp.eq.f32.partialorder %v1965, %v3437
    %vm3530 = vcmp.eq.f32.partialorder %v1967, %v3437
    %vm3531 = vcmp.eq.f32.partialorder %v1969, %v3437
    %vm3532 = vcmp.eq.f32.partialorder %v1971, %v3437
    %vm3533 = vcmp.eq.f32.partialorder %v1973, %v3437
    %vm3534 = vcmp.eq.f32.partialorder %v1975, %v3443
    %vm3535 = vcmp.eq.f32.partialorder %v1977, %v3443
    %vm3536 = vcmp.eq.f32.partialorder %v1979, %v3443
    %vm3537 = vcmp.eq.f32.partialorder %v1981, %v3443
    %vm3538 = vcmp.eq.f32.partialorder %v1983, %v3443
    %vm3539 = vcmp.eq.f32.partialorder %v1985, %v3443
    %vm3540 = vcmp.eq.f32.partialorder %v1987, %v3443
    %vm3541 = vcmp.eq.f32.partialorder %v1989, %v3443
    %vm3542 = vcmp.eq.f32.partialorder %v1991, %v3443
    %vm3543 = vcmp.eq.f32.partialorder %v1993, %v3443
    %vm3544 = vcmp.eq.f32.partialorder %v1995, %v3443
    %vm3545 = vcmp.eq.f32.partialorder %v1997, %v3443
    %vm3546 = vcmp.eq.f32.partialorder %v1999, %v3443
    %vm3547 = vcmp.eq.f32.partialorder %v2001, %v3443
    %vm3548 = vcmp.eq.f32.partialorder %v2003, %v3443
    %vm3549 = vcmp.eq.f32.partialorder %v2005, %v3443
    %vm3550 = vcmp.eq.f32.partialorder %v2007, %v3449
    %vm3551 = vcmp.eq.f32.partialorder %v2009, %v3449
    %vm3552 = vcmp.eq.f32.partialorder %v2011, %v3449
    %vm3553 = vcmp.eq.f32.partialorder %v2013, %v3449
    %vm3554 = vcmp.eq.f32.partialorder %v2015, %v3449
    %vm3555 = vcmp.eq.f32.partialorder %v2017, %v3449
    %vm3556 = vcmp.eq.f32.partialorder %v2019, %v3449
    %vm3557 = vcmp.eq.f32.partialorder %v2021, %v3449
    %vm3558 = vcmp.eq.f32.partialorder %v2023, %v3449
    %vm3559 = vcmp.eq.f32.partialorder %v2025, %v3449
    %vm3560 = vcmp.eq.f32.partialorder %v2027, %v3449
    %vm3561 = vcmp.eq.f32.partialorder %v2029, %v3449
    %vm3562 = vcmp.eq.f32.partialorder %v2031, %v3449
    %vm3563 = vcmp.eq.f32.partialorder %v2033, %v3449
    %vm3564 = vcmp.eq.f32.partialorder %v2035, %v3449
    %vm3565 = vcmp.eq.f32.partialorder %v2037, %v3449
    %vm3566 = vcmp.eq.f32.partialorder %v2039, %v3455
    %vm3567 = vcmp.eq.f32.partialorder %v2041, %v3455
    %vm3568 = vcmp.eq.f32.partialorder %v2043, %v3455
    %vm3569 = vcmp.eq.f32.partialorder %v2045, %v3455
    %vm3570 = vcmp.eq.f32.partialorder %v2047, %v3455
    %vm3571 = vcmp.eq.f32.partialorder %v2049, %v3455
    %vm3572 = vcmp.eq.f32.partialorder %v2051, %v3455
    %vm3573 = vcmp.eq.f32.partialorder %v2053, %v3455
    %vm3574 = vcmp.eq.f32.partialorder %v2055, %v3455
    %vm3575 = vcmp.eq.f32.partialorder %v2057, %v3455
    %vm3576 = vcmp.eq.f32.partialorder %v2059, %v3455
    %vm3577 = vcmp.eq.f32.partialorder %v2061, %v3455
    %vm3578 = vcmp.eq.f32.partialorder %v2063, %v3455
    %vm3579 = vcmp.eq.f32.partialorder %v2065, %v3455
    %vm3580 = vcmp.eq.f32.partialorder %v2067, %v3455
    %vm3581 = vcmp.eq.f32.partialorder %v2069, %v3455
    %vm3582 = vcmp.eq.f32.partialorder %v2071, %v3461
    %vm3583 = vcmp.eq.f32.partialorder %v2073, %v3461
    %vm3584 = vcmp.eq.f32.partialorder %v2075, %v3461
    %vm3585 = vcmp.eq.f32.partialorder %v2077, %v3461
    %vm3586 = vcmp.eq.f32.partialorder %v2079, %v3461
    %vm3587 = vcmp.eq.f32.partialorder %v2081, %v3461
    %vm3588 = vcmp.eq.f32.partialorder %v2083, %v3461
    %vm3589 = vcmp.eq.f32.partialorder %v2085, %v3461
    %vm3590 = vcmp.eq.f32.partialorder %v2087, %v3461
    %vm3591 = vcmp.eq.f32.partialorder %v2089, %v3461
    %vm3592 = vcmp.eq.f32.partialorder %v2091, %v3461
    %vm3593 = vcmp.eq.f32.partialorder %v2093, %v3461
    %vm3594 = vcmp.eq.f32.partialorder %v2095, %v3461
    %vm3595 = vcmp.eq.f32.partialorder %v2097, %v3461
    %vm3596 = vcmp.eq.f32.partialorder %v2099, %v3461
    %vm3597 = vcmp.eq.f32.partialorder %v2101, %v3461
    %v3598 = vsel %vm3470, 1.0, 0.0
    %v3599 = vsel %vm3471, 1.0, 0.0
    %v3600 = vsel %vm3472, 1.0, 0.0
    %v3601 = vsel %vm3473, 1.0, 0.0
    %v3602 = vsel %vm3474, 1.0, 0.0
    %v3603 = vsel %vm3475, 1.0, 0.0
    %v3604 = vsel %vm3476, 1.0, 0.0
    %v3605 = vsel %vm3477, 1.0, 0.0
    %v3606 = vsel %vm3478, 1.0, 0.0
    %v3607 = vsel %vm3479, 1.0, 0.0
    %v3608 = vsel %vm3480, 1.0, 0.0
    %v3609 = vsel %vm3481, 1.0, 0.0
    %v3610 = vsel %vm3482, 1.0, 0.0
    %v3611 = vsel %vm3483, 1.0, 0.0
    %v3612 = vsel %vm3484, 1.0, 0.0
    %v3613 = vsel %vm3485, 1.0, 0.0
    %v3614 = vsel %vm3486, 1.0, 0.0
    %v3615 = vsel %vm3487, 1.0, 0.0
    %v3616 = vsel %vm3488, 1.0, 0.0
    %v3617 = vsel %vm3489, 1.0, 0.0
    %v3618 = vsel %vm3490, 1.0, 0.0
    %v3619 = vsel %vm3491, 1.0, 0.0
    %v3620 = vsel %vm3492, 1.0, 0.0
    %v3621 = vsel %vm3493, 1.0, 0.0
    %v3622 = vsel %vm3494, 1.0, 0.0
    %v3623 = vsel %vm3495, 1.0, 0.0
    %v3624 = vsel %vm3496, 1.0, 0.0
    %v3625 = vsel %vm3497, 1.0, 0.0
    %v3626 = vsel %vm3498, 1.0, 0.0
    %v3627 = vsel %vm3499, 1.0, 0.0
    %v3628 = vsel %vm3500, 1.0, 0.0
    %v3629 = vsel %vm3501, 1.0, 0.0
    %v3630 = vsel %vm3502, 1.0, 0.0
    %v3631 = vsel %vm3503, 1.0, 0.0
    %v3632 = vsel %vm3504, 1.0, 0.0
    %v3633 = vsel %vm3505, 1.0, 0.0
    %v3634 = vsel %vm3506, 1.0, 0.0
    %v3635 = vsel %vm3507, 1.0, 0.0
    %v3636 = vsel %vm3508, 1.0, 0.0
    %v3637 = vsel %vm3509, 1.0, 0.0
    %v3638 = vsel %vm3510, 1.0, 0.0
    %v3639 = vsel %vm3511, 1.0, 0.0
    %v3640 = vsel %vm3512, 1.0, 0.0
    %v3641 = vsel %vm3513, 1.0, 0.0
    %v3642 = vsel %vm3514, 1.0, 0.0
    %v3643 = vsel %vm3515, 1.0, 0.0
    %v3644 = vsel %vm3516, 1.0, 0.0
    %v3645 = vsel %vm3517, 1.0, 0.0
    %v3646 = vsel %vm3518, 1.0, 0.0
    %v3647 = vsel %vm3519, 1.0, 0.0
    %v3648 = vsel %vm3520, 1.0, 0.0
    %v3649 = vsel %vm3521, 1.0, 0.0
    %v3650 = vsel %vm3522, 1.0, 0.0
    %v3651 = vsel %vm3523, 1.0, 0.0
    %v3652 = vsel %vm3524, 1.0, 0.0
    %v3653 = vsel %vm3525, 1.0, 0.0
    %v3654 = vsel %vm3526, 1.0, 0.0
    %v3655 = vsel %vm3527, 1.0, 0.0
    %v3656 = vsel %vm3528, 1.0, 0.0
    %v3657 = vsel %vm3529, 1.0, 0.0
    %v3658 = vsel %vm3530, 1.0, 0.0
    %v3659 = vsel %vm3531, 1.0, 0.0
    %v3660 = vsel %vm3532, 1.0, 0.0
    %v3661 = vsel %vm3533, 1.0, 0.0
    %v3662 = vsel %vm3534, 1.0, 0.0
    %v3663 = vsel %vm3535, 1.0, 0.0
    %v3664 = vsel %vm3536, 1.0, 0.0
    %v3665 = vsel %vm3537, 1.0, 0.0
    %v3666 = vsel %vm3538, 1.0, 0.0
    %v3667 = vsel %vm3539, 1.0, 0.0
    %v3668 = vsel %vm3540, 1.0, 0.0
    %v3669 = vsel %vm3541, 1.0, 0.0
    %v3670 = vsel %vm3542, 1.0, 0.0
    %v3671 = vsel %vm3543, 1.0, 0.0
    %v3672 = vsel %vm3544, 1.0, 0.0
    %v3673 = vsel %vm3545, 1.0, 0.0
    %v3674 = vsel %vm3546, 1.0, 0.0
    %v3675 = vsel %vm3547, 1.0, 0.0
    %v3676 = vsel %vm3548, 1.0, 0.0
    %v3677 = vsel %vm3549, 1.0, 0.0
    %v3678 = vsel %vm3550, 1.0, 0.0
    %v3679 = vsel %vm3551, 1.0, 0.0
    %v3680 = vsel %vm3552, 1.0, 0.0
    %v3681 = vsel %vm3553, 1.0, 0.0
    %v3682 = vsel %vm3554, 1.0, 0.0
    %v3683 = vsel %vm3555, 1.0, 0.0
    %v3684 = vsel %vm3556, 1.0, 0.0
    %v3685 = vsel %vm3557, 1.0, 0.0
    %v3686 = vsel %vm3558, 1.0, 0.0
    %v3687 = vsel %vm3559, 1.0, 0.0
    %v3688 = vsel %vm3560, 1.0, 0.0
    %v3689 = vsel %vm3561, 1.0, 0.0
    %v3690 = vsel %vm3562, 1.0, 0.0
    %v3691 = vsel %vm3563, 1.0, 0.0
    %v3692 = vsel %vm3564, 1.0, 0.0
    %v3693 = vsel %vm3565, 1.0, 0.0
    %v3694 = vsel %vm3566, 1.0, 0.0
    %v3695 = vsel %vm3567, 1.0, 0.0
    %v3696 = vsel %vm3568, 1.0, 0.0
    %v3697 = vsel %vm3569, 1.0, 0.0
    %v3698 = vsel %vm3570, 1.0, 0.0
    %v3699 = vsel %vm3571, 1.0, 0.0
    %v3700 = vsel %vm3572, 1.0, 0.0
    %v3701 = vsel %vm3573, 1.0, 0.0
    %v3702 = vsel %vm3574, 1.0, 0.0
    %v3703 = vsel %vm3575, 1.0, 0.0
    %v3704 = vsel %vm3576, 1.0, 0.0
    %v3705 = vsel %vm3577, 1.0, 0.0
    %v3706 = vsel %vm3578, 1.0, 0.0
    %v3707 = vsel %vm3579, 1.0, 0.0
    %v3708 = vsel %vm3580, 1.0, 0.0
    %v3709 = vsel %vm3581, 1.0, 0.0
    %v3710 = vsel %vm3582, 1.0, 0.0
    %v3711 = vsel %vm3583, 1.0, 0.0
    %v3712 = vsel %vm3584, 1.0, 0.0
    %v3713 = vsel %vm3585, 1.0, 0.0
    %v3714 = vsel %vm3586, 1.0, 0.0
    %v3715 = vsel %vm3587, 1.0, 0.0
    %v3716 = vsel %vm3588, 1.0, 0.0
    %v3717 = vsel %vm3589, 1.0, 0.0
    %v3718 = vsel %vm3590, 1.0, 0.0
    %v3719 = vsel %vm3591, 1.0, 0.0
    %v3720 = vsel %vm3592, 1.0, 0.0
    %v3721 = vsel %vm3593, 1.0, 0.0
    %v3722 = vsel %vm3594, 1.0, 0.0
    %v3723 = vsel %vm3595, 1.0, 0.0
    %v3724 = vsel %vm3596, 1.0, 0.0
    %v3725 = vsel %vm3597, 1.0, 0.0
    %v3726 = vmul.f32 %v3598, %v1681
    %v3727 = vmul.f32 %v3599, %v1681
    %v3728 = vmul.f32 %v3600, %v1681
    %v3729 = vmul.f32 %v3601, %v1681
    %v3730 = vmul.f32 %v3602, %v1681
    %v3731 = vmul.f32 %v3603, %v1681
    %v3732 = vmul.f32 %v3604, %v1681
    %v3733 = vmul.f32 %v3605, %v1681
    %v3734 = vmul.f32 %v3606, %v1681
    %v3735 = vmul.f32 %v3607, %v1681
    %v3736 = vmul.f32 %v3608, %v1681
    %v3737 = vmul.f32 %v3609, %v1681
    %v3738 = vmul.f32 %v3610, %v1681
    %v3739 = vmul.f32 %v3611, %v1681
    %v3740 = vmul.f32 %v3612, %v1681
    %v3741 = vmul.f32 %v3613, %v1681
    %v3742 = vmul.f32 %v3614, %v1685
    %v3743 = vmul.f32 %v3615, %v1685
    %v3744 = vmul.f32 %v3616, %v1685
    %v3745 = vmul.f32 %v3617, %v1685
    %v3746 = vmul.f32 %v3618, %v1685
    %v3747 = vmul.f32 %v3619, %v1685
    %v3748 = vmul.f32 %v3620, %v1685
    %v3749 = vmul.f32 %v3621, %v1685
    %v3750 = vmul.f32 %v3622, %v1685
    %v3751 = vmul.f32 %v3623, %v1685
    %v3752 = vmul.f32 %v3624, %v1685
    %v3753 = vmul.f32 %v3625, %v1685
    %v3754 = vmul.f32 %v3626, %v1685
    %v3755 = vmul.f32 %v3627, %v1685
    %v3756 = vmul.f32 %v3628, %v1685
    %v3757 = vmul.f32 %v3629, %v1685
    %v3758 = vmul.f32 %v3630, %v1689
    %v3759 = vmul.f32 %v3631, %v1689
    %v3760 = vmul.f32 %v3632, %v1689
    %v3761 = vmul.f32 %v3633, %v1689
    %v3762 = vmul.f32 %v3634, %v1689
    %v3763 = vmul.f32 %v3635, %v1689
    %v3764 = vmul.f32 %v3636, %v1689
    %v3765 = vmul.f32 %v3637, %v1689
    %v3766 = vmul.f32 %v3638, %v1689
    %v3767 = vmul.f32 %v3639, %v1689
    %v3768 = vmul.f32 %v3640, %v1689
    %v3769 = vmul.f32 %v3641, %v1689
    %v3770 = vmul.f32 %v3642, %v1689
    %v3771 = vmul.f32 %v3643, %v1689
    %v3772 = vmul.f32 %v3644, %v1689
    %v3773 = vmul.f32 %v3645, %v1689
    %v3774 = vmul.f32 %v3646, %v1693
    %v3775 = vmul.f32 %v3647, %v1693
    %v3776 = vmul.f32 %v3648, %v1693
    %v3777 = vmul.f32 %v3649, %v1693
    %v3778 = vmul.f32 %v3650, %v1693
    %v3779 = vmul.f32 %v3651, %v1693
    %v3780 = vmul.f32 %v3652, %v1693
    %v3781 = vmul.f32 %v3653, %v1693
    %v3782 = vmul.f32 %v3654, %v1693
    %v3783 = vmul.f32 %v3655, %v1693
    %v3784 = vmul.f32 %v3656, %v1693
    %v3785 = vmul.f32 %v3657, %v1693
    %v3786 = vmul.f32 %v3658, %v1693
    %v3787 = vmul.f32 %v3659, %v1693
    %v3788 = vmul.f32 %v3660, %v1693
    %v3789 = vmul.f32 %v3661, %v1693
    %v3790 = vmul.f32 %v3662, %v1697
    %v3791 = vmul.f32 %v3663, %v1697
    %v3792 = vmul.f32 %v3664, %v1697
    %v3793 = vmul.f32 %v3665, %v1697
    %v3794 = vmul.f32 %v3666, %v1697
    %v3795 = vmul.f32 %v3667, %v1697
    %v3796 = vmul.f32 %v3668, %v1697
    %v3797 = vmul.f32 %v3669, %v1697
    %v3798 = vmul.f32 %v3670, %v1697
    %v3799 = vmul.f32 %v3671, %v1697
    %v3800 = vmul.f32 %v3672, %v1697
    %v3801 = vmul.f32 %v3673, %v1697
    %v3802 = vmul.f32 %v3674, %v1697
    %v3803 = vmul.f32 %v3675, %v1697
    %v3804 = vmul.f32 %v3676, %v1697
    %v3805 = vmul.f32 %v3677, %v1697
    %v3806 = vmul.f32 %v3678, %v1701
    %v3807 = vmul.f32 %v3679, %v1701
    %v3808 = vmul.f32 %v3680, %v1701
    %v3809 = vmul.f32 %v3681, %v1701
    %v3810 = vmul.f32 %v3682, %v1701
    %v3811 = vmul.f32 %v3683, %v1701
    %v3812 = vmul.f32 %v3684, %v1701
    %v3813 = vmul.f32 %v3685, %v1701
    %v3814 = vmul.f32 %v3686, %v1701
    %v3815 = vmul.f32 %v3687, %v1701
    %v3816 = vmul.f32 %v3688, %v1701
    %v3817 = vmul.f32 %v3689, %v1701
    %v3818 = vmul.f32 %v3690, %v1701
    %v3819 = vmul.f32 %v3691, %v1701
    %v3820 = vmul.f32 %v3692, %v1701
    %v3821 = vmul.f32 %v3693, %v1701
    %v3822 = vmul.f32 %v3694, %v1705
    %v3823 = vmul.f32 %v3695, %v1705
    %v3824 = vmul.f32 %v3696, %v1705
    %v3825 = vmul.f32 %v3697, %v1705
    %v3826 = vmul.f32 %v3698, %v1705
    %v3827 = vmul.f32 %v3699, %v1705
    %v3828 = vmul.f32 %v3700, %v1705
    %v3829 = vmul.f32 %v3701, %v1705
    %v3830 = vmul.f32 %v3702, %v1705
    %v3831 = vmul.f32 %v3703, %v1705
    %v3832 = vmul.f32 %v3704, %v1705
    %v3833 = vmul.f32 %v3705, %v1705
    %v3834 = vmul.f32 %v3706, %v1705
    %v3835 = vmul.f32 %v3707, %v1705
    %v3836 = vmul.f32 %v3708, %v1705
    %v3837 = vmul.f32 %v3709, %v1705
    %v3838 = vmul.f32 %v3710, %v1709
    %v3839 = vmul.f32 %v3711, %v1709
    %v3840 = vmul.f32 %v3712, %v1709
    %v3841 = vmul.f32 %v3713, %v1709
    %v3842 = vmul.f32 %v3714, %v1709
    %v3843 = vmul.f32 %v3715, %v1709
    %v3844 = vmul.f32 %v3716, %v1709
    %v3845 = vmul.f32 %v3717, %v1709
    %v3846 = vmul.f32 %v3718, %v1709
    %v3847 = vmul.f32 %v3719, %v1709
    %v3848 = vmul.f32 %v3720, %v1709
    %v3849 = vmul.f32 %v3721, %v1709
    %v3850 = vmul.f32 %v3722, %v1709
    %v3851 = vmul.f32 %v3723, %v1709
    %v3852 = vmul.f32 %v3724, %v1709
    %v3853 = vmul.f32 %v3725, %v1709
    %v3855 = vcombine.high %v2616, %v2616
    %v3857 = vunpack.c.l.s4 1966171168
    %v3858 = vunpack.c.0.s8 %v3857
    %v3859 = vlaneseq
    %v3860 = vshrl.u32 %v3859, 7
    %v3861 = vsub.s32 %v3858, %v3860
    %v3862 = vrot.slane %v2616, %v3861
    %v3864 = vunpack.c.l.s4 1966171168
    %v3865 = vunpack.c.0.s8 %v3864
    %v3866 = vlaneseq
    %v3867 = vshrl.u32 %v3866, 7
    %v3868 = vsub.s32 %v3865, %v3867
    %v3869 = vrot.slane %v3855, %v3868
    %v3870 = vcombine.high %v3862, %v3862
    %v3871 = vcombine.high %v3869, %v3869
    %v3873 = vunpack.c.l.s4 1966171168
    %v3874 = vunpack.c.0.s8 %v3873
    %v3875 = vlaneseq
    %v3876 = vshrl.u32 %v3875, 7
    %v3877 = vsub.s32 %v3874, %v3876
    %v3878 = vrot.slane %v3862, %v3877
    %v3880 = vunpack.c.l.s4 1966171168
    %v3881 = vunpack.c.0.s8 %v3880
    %v3882 = vlaneseq
    %v3883 = vshrl.u32 %v3882, 7
    %v3884 = vsub.s32 %v3881, %v3883
    %v3885 = vrot.slane %v3869, %v3884
    %v3887 = vunpack.c.l.s4 1966171168
    %v3888 = vunpack.c.0.s8 %v3887
    %v3889 = vlaneseq
    %v3890 = vshrl.u32 %v3889, 7
    %v3891 = vsub.s32 %v3888, %v3890
    %v3892 = vrot.slane %v3870, %v3891
    %v3894 = vunpack.c.l.s4 1966171168
    %v3895 = vunpack.c.0.s8 %v3894
    %v3896 = vlaneseq
    %v3897 = vshrl.u32 %v3896, 7
    %v3898 = vsub.s32 %v3895, %v3897
    %v3899 = vrot.slane %v3871, %v3898
    %v3900 = vcombine.high %v3878, %v3878
    %v3901 = vcombine.high %v3885, %v3885
    %v3902 = vcombine.high %v3892, %v3892
    %v3903 = vcombine.high %v3899, %v3899
    %v3904 = vlaneseq
    %v3905 = vshrl.u32 %v3904, 7
    %v3906 = vsub.s32 0, %v3905
    %v3907 = vrot.slane %v3878, %v3906
    %v3908 = vlaneseq
    %v3909 = vshrl.u32 %v3908, 7
    %v3910 = vsub.s32 0, %v3909
    %v3911 = vrot.slane %v3892, %v3910
    %v3912 = vlaneseq
    %v3913 = vshrl.u32 %v3912, 7
    %v3914 = vsub.s32 0, %v3913
    %v3915 = vrot.slane %v3900, %v3914
    %v3916 = vlaneseq
    %v3917 = vshrl.u32 %v3916, 7
    %v3918 = vsub.s32 0, %v3917
    %v3919 = vrot.slane %v3902, %v3918
    %v3920 = vlaneseq
    %v3921 = vshrl.u32 %v3920, 7
    %v3922 = vsub.s32 0, %v3921
    %v3923 = vrot.slane %v3885, %v3922
    %v3924 = vlaneseq
    %v3925 = vshrl.u32 %v3924, 7
    %v3926 = vsub.s32 0, %v3925
    %v3927 = vrot.slane %v3899, %v3926
    %v3928 = vlaneseq
    %v3929 = vshrl.u32 %v3928, 7
    %v3930 = vsub.s32 0, %v3929
    %v3931 = vrot.slane %v3901, %v3930
    %v3932 = vlaneseq
    %v3933 = vshrl.u32 %v3932, 7
    %v3934 = vsub.s32 0, %v3933
    %v3935 = vrot.slane %v3903, %v3934
    %v3944 = vmul.f32 %v3726, %v3907
    %v3945 = vmul.f32 %v3727, %v3907
    %v3946 = vmul.f32 %v3728, %v3907
    %v3947 = vmul.f32 %v3729, %v3907
    %v3948 = vmul.f32 %v3730, %v3907
    %v3949 = vmul.f32 %v3731, %v3907
    %v3950 = vmul.f32 %v3732, %v3907
    %v3951 = vmul.f32 %v3733, %v3907
    %v3952 = vmul.f32 %v3734, %v3907
    %v3953 = vmul.f32 %v3735, %v3907
    %v3954 = vmul.f32 %v3736, %v3907
    %v3955 = vmul.f32 %v3737, %v3907
    %v3956 = vmul.f32 %v3738, %v3907
    %v3957 = vmul.f32 %v3739, %v3907
    %v3958 = vmul.f32 %v3740, %v3907
    %v3959 = vmul.f32 %v3741, %v3907
    %v3960 = vmul.f32 %v3742, %v3911
    %v3961 = vmul.f32 %v3743, %v3911
    %v3962 = vmul.f32 %v3744, %v3911
    %v3963 = vmul.f32 %v3745, %v3911
    %v3964 = vmul.f32 %v3746, %v3911
    %v3965 = vmul.f32 %v3747, %v3911
    %v3966 = vmul.f32 %v3748, %v3911
    %v3967 = vmul.f32 %v3749, %v3911
    %v3968 = vmul.f32 %v3750, %v3911
    %v3969 = vmul.f32 %v3751, %v3911
    %v3970 = vmul.f32 %v3752, %v3911
    %v3971 = vmul.f32 %v3753, %v3911
    %v3972 = vmul.f32 %v3754, %v3911
    %v3973 = vmul.f32 %v3755, %v3911
    %v3974 = vmul.f32 %v3756, %v3911
    %v3975 = vmul.f32 %v3757, %v3911
    %v3976 = vmul.f32 %v3758, %v3915
    %v3977 = vmul.f32 %v3759, %v3915
    %v3978 = vmul.f32 %v3760, %v3915
    %v3979 = vmul.f32 %v3761, %v3915
    %v3980 = vmul.f32 %v3762, %v3915
    %v3981 = vmul.f32 %v3763, %v3915
    %v3982 = vmul.f32 %v3764, %v3915
    %v3983 = vmul.f32 %v3765, %v3915
    %v3984 = vmul.f32 %v3766, %v3915
    %v3985 = vmul.f32 %v3767, %v3915
    %v3986 = vmul.f32 %v3768, %v3915
    %v3987 = vmul.f32 %v3769, %v3915
    %v3988 = vmul.f32 %v3770, %v3915
    %v3989 = vmul.f32 %v3771, %v3915
    %v3990 = vmul.f32 %v3772, %v3915
    %v3991 = vmul.f32 %v3773, %v3915
    %v3992 = vmul.f32 %v3774, %v3919
    %v3993 = vmul.f32 %v3775, %v3919
    %v3994 = vmul.f32 %v3776, %v3919
    %v3995 = vmul.f32 %v3777, %v3919
    %v3996 = vmul.f32 %v3778, %v3919
    %v3997 = vmul.f32 %v3779, %v3919
    %v3998 = vmul.f32 %v3780, %v3919
    %v3999 = vmul.f32 %v3781, %v3919
    %v4000 = vmul.f32 %v3782, %v3919
    %v4001 = vmul.f32 %v3783, %v3919
    %v4002 = vmul.f32 %v3784, %v3919
    %v4003 = vmul.f32 %v3785, %v3919
    %v4004 = vmul.f32 %v3786, %v3919
    %v4005 = vmul.f32 %v3787, %v3919
    %v4006 = vmul.f32 %v3788, %v3919
    %v4007 = vmul.f32 %v3789, %v3919
    %v4008 = vmul.f32 %v3790, %v3923
    %v4009 = vmul.f32 %v3791, %v3923
    %v4010 = vmul.f32 %v3792, %v3923
    %v4011 = vmul.f32 %v3793, %v3923
    %v4012 = vmul.f32 %v3794, %v3923
    %v4013 = vmul.f32 %v3795, %v3923
    %v4014 = vmul.f32 %v3796, %v3923
    %v4015 = vmul.f32 %v3797, %v3923
    %v4016 = vmul.f32 %v3798, %v3923
    %v4017 = vmul.f32 %v3799, %v3923
    %v4018 = vmul.f32 %v3800, %v3923
    %v4019 = vmul.f32 %v3801, %v3923
    %v4020 = vmul.f32 %v3802, %v3923
    %v4021 = vmul.f32 %v3803, %v3923
    %v4022 = vmul.f32 %v3804, %v3923
    %v4023 = vmul.f32 %v3805, %v3923
    %v4024 = vmul.f32 %v3806, %v3927
    %v4025 = vmul.f32 %v3807, %v3927
    %v4026 = vmul.f32 %v3808, %v3927
    %v4027 = vmul.f32 %v3809, %v3927
    %v4028 = vmul.f32 %v3810, %v3927
    %v4029 = vmul.f32 %v3811, %v3927
    %v4030 = vmul.f32 %v3812, %v3927
    %v4031 = vmul.f32 %v3813, %v3927
    %v4032 = vmul.f32 %v3814, %v3927
    %v4033 = vmul.f32 %v3815, %v3927
    %v4034 = vmul.f32 %v3816, %v3927
    %v4035 = vmul.f32 %v3817, %v3927
    %v4036 = vmul.f32 %v3818, %v3927
    %v4037 = vmul.f32 %v3819, %v3927
    %v4038 = vmul.f32 %v3820, %v3927
    %v4039 = vmul.f32 %v3821, %v3927
    %v4040 = vmul.f32 %v3822, %v3931
    %v4041 = vmul.f32 %v3823, %v3931
    %v4042 = vmul.f32 %v3824, %v3931
    %v4043 = vmul.f32 %v3825, %v3931
    %v4044 = vmul.f32 %v3826, %v3931
    %v4045 = vmul.f32 %v3827, %v3931
    %v4046 = vmul.f32 %v3828, %v3931
    %v4047 = vmul.f32 %v3829, %v3931
    %v4048 = vmul.f32 %v3830, %v3931
    %v4049 = vmul.f32 %v3831, %v3931
    %v4050 = vmul.f32 %v3832, %v3931
    %v4051 = vmul.f32 %v3833, %v3931
    %v4052 = vmul.f32 %v3834, %v3931
    %v4053 = vmul.f32 %v3835, %v3931
    %v4054 = vmul.f32 %v3836, %v3931
    %v4055 = vmul.f32 %v3837, %v3931
    %v4056 = vmul.f32 %v3838, %v3935
    %v4057 = vmul.f32 %v3839, %v3935
    %v4058 = vmul.f32 %v3840, %v3935
    %v4059 = vmul.f32 %v3841, %v3935
    %v4060 = vmul.f32 %v3842, %v3935
    %v4061 = vmul.f32 %v3843, %v3935
    %v4062 = vmul.f32 %v3844, %v3935
    %v4063 = vmul.f32 %v3845, %v3935
    %v4064 = vmul.f32 %v3846, %v3935
    %v4065 = vmul.f32 %v3847, %v3935
    %v4066 = vmul.f32 %v3848, %v3935
    %v4067 = vmul.f32 %v3849, %v3935
    %v4068 = vmul.f32 %v3850, %v3935
    %v4069 = vmul.f32 %v3851, %v3935
    %v4070 = vmul.f32 %v3852, %v3935
    %v4071 = vmul.f32 %v3853, %v3935
    %4072 = vadd.xlane.f32.xlu0 %v3944
    %v4073 = vpop.xlane.xlu0 %4072
    %4074 = vadd.xlane.f32.xlu0 %v3945
    %v4075 = vpop.xlane.xlu0 %4074
    %4076 = vadd.xlane.f32.xlu0 %v3946
    %v4077 = vpop.xlane.xlu0 %4076
    %4078 = vadd.xlane.f32.xlu0 %v3947
    %v4079 = vpop.xlane.xlu0 %4078
    %4080 = vadd.xlane.f32.xlu0 %v3948
    %v4081 = vpop.xlane.xlu0 %4080
    %4082 = vadd.xlane.f32.xlu0 %v3949
    %v4083 = vpop.xlane.xlu0 %4082
    %4084 = vadd.xlane.f32.xlu0 %v3950
    %v4085 = vpop.xlane.xlu0 %4084
    %4086 = vadd.xlane.f32.xlu0 %v3951
    %v4087 = vpop.xlane.xlu0 %4086
    %4088 = vadd.xlane.f32.xlu0 %v3952
    %v4089 = vpop.xlane.xlu0 %4088
    %4090 = vadd.xlane.f32.xlu0 %v3953
    %v4091 = vpop.xlane.xlu0 %4090
    %4092 = vadd.xlane.f32.xlu0 %v3954
    %v4093 = vpop.xlane.xlu0 %4092
    %4094 = vadd.xlane.f32.xlu0 %v3955
    %v4095 = vpop.xlane.xlu0 %4094
    %4096 = vadd.xlane.f32.xlu0 %v3956
    %v4097 = vpop.xlane.xlu0 %4096
    %4098 = vadd.xlane.f32.xlu0 %v3957
    %v4099 = vpop.xlane.xlu0 %4098
    %4100 = vadd.xlane.f32.xlu0 %v3958
    %v4101 = vpop.xlane.xlu0 %4100
    %4102 = vadd.xlane.f32.xlu0 %v3959
    %v4103 = vpop.xlane.xlu0 %4102
    %4104 = vadd.xlane.f32.xlu0 %v3960
    %v4105 = vpop.xlane.xlu0 %4104
    %4106 = vadd.xlane.f32.xlu0 %v3961
    %v4107 = vpop.xlane.xlu0 %4106
    %4108 = vadd.xlane.f32.xlu0 %v3962
    %v4109 = vpop.xlane.xlu0 %4108
    %4110 = vadd.xlane.f32.xlu0 %v3963
    %v4111 = vpop.xlane.xlu0 %4110
    %4112 = vadd.xlane.f32.xlu0 %v3964
    %v4113 = vpop.xlane.xlu0 %4112
    %4114 = vadd.xlane.f32.xlu0 %v3965
    %v4115 = vpop.xlane.xlu0 %4114
    %4116 = vadd.xlane.f32.xlu0 %v3966
    %v4117 = vpop.xlane.xlu0 %4116
    %4118 = vadd.xlane.f32.xlu0 %v3967
    %v4119 = vpop.xlane.xlu0 %4118
    %4120 = vadd.xlane.f32.xlu0 %v3968
    %v4121 = vpop.xlane.xlu0 %4120
    %4122 = vadd.xlane.f32.xlu0 %v3969
    %v4123 = vpop.xlane.xlu0 %4122
    %4124 = vadd.xlane.f32.xlu0 %v3970
    %v4125 = vpop.xlane.xlu0 %4124
    %4126 = vadd.xlane.f32.xlu0 %v3971
    %v4127 = vpop.xlane.xlu0 %4126
    %4128 = vadd.xlane.f32.xlu0 %v3972
    %v4129 = vpop.xlane.xlu0 %4128
    %4130 = vadd.xlane.f32.xlu0 %v3973
    %v4131 = vpop.xlane.xlu0 %4130
    %4132 = vadd.xlane.f32.xlu0 %v3974
    %v4133 = vpop.xlane.xlu0 %4132
    %4134 = vadd.xlane.f32.xlu0 %v3975
    %v4135 = vpop.xlane.xlu0 %4134
    %4136 = vadd.xlane.f32.xlu0 %v3976
    %v4137 = vpop.xlane.xlu0 %4136
    %4138 = vadd.xlane.f32.xlu0 %v3977
    %v4139 = vpop.xlane.xlu0 %4138
    %4140 = vadd.xlane.f32.xlu0 %v3978
    %v4141 = vpop.xlane.xlu0 %4140
    %4142 = vadd.xlane.f32.xlu0 %v3979
    %v4143 = vpop.xlane.xlu0 %4142
    %4144 = vadd.xlane.f32.xlu0 %v3980
    %v4145 = vpop.xlane.xlu0 %4144
    %4146 = vadd.xlane.f32.xlu0 %v3981
    %v4147 = vpop.xlane.xlu0 %4146
    %4148 = vadd.xlane.f32.xlu0 %v3982
    %v4149 = vpop.xlane.xlu0 %4148
    %4150 = vadd.xlane.f32.xlu0 %v3983
    %v4151 = vpop.xlane.xlu0 %4150
    %4152 = vadd.xlane.f32.xlu0 %v3984
    %v4153 = vpop.xlane.xlu0 %4152
    %4154 = vadd.xlane.f32.xlu0 %v3985
    %v4155 = vpop.xlane.xlu0 %4154
    %4156 = vadd.xlane.f32.xlu0 %v3986
    %v4157 = vpop.xlane.xlu0 %4156
    %4158 = vadd.xlane.f32.xlu0 %v3987
    %v4159 = vpop.xlane.xlu0 %4158
    %4160 = vadd.xlane.f32.xlu0 %v3988
    %v4161 = vpop.xlane.xlu0 %4160
    %4162 = vadd.xlane.f32.xlu0 %v3989
    %v4163 = vpop.xlane.xlu0 %4162
    %4164 = vadd.xlane.f32.xlu0 %v3990
    %v4165 = vpop.xlane.xlu0 %4164
    %4166 = vadd.xlane.f32.xlu0 %v3991
    %v4167 = vpop.xlane.xlu0 %4166
    %4168 = vadd.xlane.f32.xlu0 %v3992
    %v4169 = vpop.xlane.xlu0 %4168
    %4170 = vadd.xlane.f32.xlu0 %v3993
    %v4171 = vpop.xlane.xlu0 %4170
    %4172 = vadd.xlane.f32.xlu0 %v3994
    %v4173 = vpop.xlane.xlu0 %4172
    %4174 = vadd.xlane.f32.xlu0 %v3995
    %v4175 = vpop.xlane.xlu0 %4174
    %4176 = vadd.xlane.f32.xlu0 %v3996
    %v4177 = vpop.xlane.xlu0 %4176
    %4178 = vadd.xlane.f32.xlu0 %v3997
    %v4179 = vpop.xlane.xlu0 %4178
    %4180 = vadd.xlane.f32.xlu0 %v3998
    %v4181 = vpop.xlane.xlu0 %4180
    %4182 = vadd.xlane.f32.xlu0 %v3999
    %v4183 = vpop.xlane.xlu0 %4182
    %4184 = vadd.xlane.f32.xlu0 %v4000
    %v4185 = vpop.xlane.xlu0 %4184
    %4186 = vadd.xlane.f32.xlu0 %v4001
    %v4187 = vpop.xlane.xlu0 %4186
    %4188 = vadd.xlane.f32.xlu0 %v4002
    %v4189 = vpop.xlane.xlu0 %4188
    %4190 = vadd.xlane.f32.xlu0 %v4003
    %v4191 = vpop.xlane.xlu0 %4190
    %4192 = vadd.xlane.f32.xlu0 %v4004
    %v4193 = vpop.xlane.xlu0 %4192
    %4194 = vadd.xlane.f32.xlu0 %v4005
    %v4195 = vpop.xlane.xlu0 %4194
    %4196 = vadd.xlane.f32.xlu0 %v4006
    %v4197 = vpop.xlane.xlu0 %4196
    %4198 = vadd.xlane.f32.xlu0 %v4007
    %v4199 = vpop.xlane.xlu0 %4198
    %4200 = vadd.xlane.f32.xlu0 %v4008
    %v4201 = vpop.xlane.xlu0 %4200
    %4202 = vadd.xlane.f32.xlu0 %v4009
    %v4203 = vpop.xlane.xlu0 %4202
    %4204 = vadd.xlane.f32.xlu0 %v4010
    %v4205 = vpop.xlane.xlu0 %4204
    %4206 = vadd.xlane.f32.xlu0 %v4011
    %v4207 = vpop.xlane.xlu0 %4206
    %4208 = vadd.xlane.f32.xlu0 %v4012
    %v4209 = vpop.xlane.xlu0 %4208
    %4210 = vadd.xlane.f32.xlu0 %v4013
    %v4211 = vpop.xlane.xlu0 %4210
    %4212 = vadd.xlane.f32.xlu0 %v4014
    %v4213 = vpop.xlane.xlu0 %4212
    %4214 = vadd.xlane.f32.xlu0 %v4015
    %v4215 = vpop.xlane.xlu0 %4214
    %4216 = vadd.xlane.f32.xlu0 %v4016
    %v4217 = vpop.xlane.xlu0 %4216
    %4218 = vadd.xlane.f32.xlu0 %v4017
    %v4219 = vpop.xlane.xlu0 %4218
    %4220 = vadd.xlane.f32.xlu0 %v4018
    %v4221 = vpop.xlane.xlu0 %4220
    %4222 = vadd.xlane.f32.xlu0 %v4019
    %v4223 = vpop.xlane.xlu0 %4222
    %4224 = vadd.xlane.f32.xlu0 %v4020
    %v4225 = vpop.xlane.xlu0 %4224
    %4226 = vadd.xlane.f32.xlu0 %v4021
    %v4227 = vpop.xlane.xlu0 %4226
    %4228 = vadd.xlane.f32.xlu0 %v4022
    %v4229 = vpop.xlane.xlu0 %4228
    %4230 = vadd.xlane.f32.xlu0 %v4023
    %v4231 = vpop.xlane.xlu0 %4230
    %4232 = vadd.xlane.f32.xlu0 %v4024
    %v4233 = vpop.xlane.xlu0 %4232
    %4234 = vadd.xlane.f32.xlu0 %v4025
    %v4235 = vpop.xlane.xlu0 %4234
    %4236 = vadd.xlane.f32.xlu0 %v4026
    %v4237 = vpop.xlane.xlu0 %4236
    %4238 = vadd.xlane.f32.xlu0 %v4027
    %v4239 = vpop.xlane.xlu0 %4238
    %4240 = vadd.xlane.f32.xlu0 %v4028
    %v4241 = vpop.xlane.xlu0 %4240
    %4242 = vadd.xlane.f32.xlu0 %v4029
    %v4243 = vpop.xlane.xlu0 %4242
    %4244 = vadd.xlane.f32.xlu0 %v4030
    %v4245 = vpop.xlane.xlu0 %4244
    %4246 = vadd.xlane.f32.xlu0 %v4031
    %v4247 = vpop.xlane.xlu0 %4246
    %4248 = vadd.xlane.f32.xlu0 %v4032
    %v4249 = vpop.xlane.xlu0 %4248
    %4250 = vadd.xlane.f32.xlu0 %v4033
    %v4251 = vpop.xlane.xlu0 %4250
    %4252 = vadd.xlane.f32.xlu0 %v4034
    %v4253 = vpop.xlane.xlu0 %4252
    %4254 = vadd.xlane.f32.xlu0 %v4035
    %v4255 = vpop.xlane.xlu0 %4254
    %4256 = vadd.xlane.f32.xlu0 %v4036
    %v4257 = vpop.xlane.xlu0 %4256
    %4258 = vadd.xlane.f32.xlu0 %v4037
    %v4259 = vpop.xlane.xlu0 %4258
    %4260 = vadd.xlane.f32.xlu0 %v4038
    %v4261 = vpop.xlane.xlu0 %4260
    %4262 = vadd.xlane.f32.xlu0 %v4039
    %v4263 = vpop.xlane.xlu0 %4262
    %4264 = vadd.xlane.f32.xlu0 %v4040
    %v4265 = vpop.xlane.xlu0 %4264
    %4266 = vadd.xlane.f32.xlu0 %v4041
    %v4267 = vpop.xlane.xlu0 %4266
    %4268 = vadd.xlane.f32.xlu0 %v4042
    %v4269 = vpop.xlane.xlu0 %4268
    %4270 = vadd.xlane.f32.xlu0 %v4043
    %v4271 = vpop.xlane.xlu0 %4270
    %4272 = vadd.xlane.f32.xlu0 %v4044
    %v4273 = vpop.xlane.xlu0 %4272
    %4274 = vadd.xlane.f32.xlu0 %v4045
    %v4275 = vpop.xlane.xlu0 %4274
    %4276 = vadd.xlane.f32.xlu0 %v4046
    %v4277 = vpop.xlane.xlu0 %4276
    %4278 = vadd.xlane.f32.xlu0 %v4047
    %v4279 = vpop.xlane.xlu0 %4278
    %4280 = vadd.xlane.f32.xlu0 %v4048
    %v4281 = vpop.xlane.xlu0 %4280
    %4282 = vadd.xlane.f32.xlu0 %v4049
    %v4283 = vpop.xlane.xlu0 %4282
    %4284 = vadd.xlane.f32.xlu0 %v4050
    %v4285 = vpop.xlane.xlu0 %4284
    %4286 = vadd.xlane.f32.xlu0 %v4051
    %v4287 = vpop.xlane.xlu0 %4286
    %4288 = vadd.xlane.f32.xlu0 %v4052
    %v4289 = vpop.xlane.xlu0 %4288
    %4290 = vadd.xlane.f32.xlu0 %v4053
    %v4291 = vpop.xlane.xlu0 %4290
    %4292 = vadd.xlane.f32.xlu0 %v4054
    %v4293 = vpop.xlane.xlu0 %4292
    %4294 = vadd.xlane.f32.xlu0 %v4055
    %v4295 = vpop.xlane.xlu0 %4294
    %4296 = vadd.xlane.f32.xlu0 %v4056
    %v4297 = vpop.xlane.xlu0 %4296
    %4298 = vadd.xlane.f32.xlu0 %v4057
    %v4299 = vpop.xlane.xlu0 %4298
    %4300 = vadd.xlane.f32.xlu0 %v4058
    %v4301 = vpop.xlane.xlu0 %4300
    %4302 = vadd.xlane.f32.xlu0 %v4059
    %v4303 = vpop.xlane.xlu0 %4302
    %4304 = vadd.xlane.f32.xlu0 %v4060
    %v4305 = vpop.xlane.xlu0 %4304
    %4306 = vadd.xlane.f32.xlu0 %v4061
    %v4307 = vpop.xlane.xlu0 %4306
    %4308 = vadd.xlane.f32.xlu0 %v4062
    %v4309 = vpop.xlane.xlu0 %4308
    %4310 = vadd.xlane.f32.xlu0 %v4063
    %v4311 = vpop.xlane.xlu0 %4310
    %4312 = vadd.xlane.f32.xlu0 %v4064
    %v4313 = vpop.xlane.xlu0 %4312
    %4314 = vadd.xlane.f32.xlu0 %v4065
    %v4315 = vpop.xlane.xlu0 %4314
    %4316 = vadd.xlane.f32.xlu0 %v4066
    %v4317 = vpop.xlane.xlu0 %4316
    %4318 = vadd.xlane.f32.xlu0 %v4067
    %v4319 = vpop.xlane.xlu0 %4318
    %4320 = vadd.xlane.f32.xlu0 %v4068
    %v4321 = vpop.xlane.xlu0 %4320
    %4322 = vadd.xlane.f32.xlu0 %v4069
    %v4323 = vpop.xlane.xlu0 %4322
    %4324 = vadd.xlane.f32.xlu0 %v4070
    %v4325 = vpop.xlane.xlu0 %4324
    %4326 = vadd.xlane.f32.xlu0 %v4071
    %v4327 = vpop.xlane.xlu0 %4326
    %v4456 = vlaneseq
    %v4457 = vshrl.u32 %v4456, 7
    %v4458 = vsub.s32 %v79, %v4457
    %v4459 = vrot.slane %v4073, %v4458
    %v4460 = vlaneseq
    %v4461 = vshrl.u32 %v4460, 7
    %v4462 = vsub.s32 %v2749, %v4461
    %v4463 = vrot.slane %v4075, %v4462
    %v4464 = vsel %vm2754, %v4463, %v4459
    %v4465 = vlaneseq
    %v4466 = vshrl.u32 %v4465, 7
    %v4467 = vsub.s32 %v2756, %v4466
    %v4468 = vrot.slane %v4077, %v4467
    %v4469 = vsel %vm2761, %v4468, %v4464
    %v4470 = vlaneseq
    %v4471 = vshrl.u32 %v4470, 7
    %v4472 = vsub.s32 %v2763, %v4471
    %v4473 = vrot.slane %v4079, %v4472
    %v4474 = vsel %vm2768, %v4473, %v4469
    %v4475 = vlaneseq
    %v4476 = vshrl.u32 %v4475, 7
    %v4477 = vsub.s32 %v2770, %v4476
    %v4478 = vrot.slane %v4081, %v4477
    %v4479 = vsel %vm2775, %v4478, %v4474
    %v4480 = vlaneseq
    %v4481 = vshrl.u32 %v4480, 7
    %v4482 = vsub.s32 %v2777, %v4481
    %v4483 = vrot.slane %v4083, %v4482
    %v4484 = vsel %vm2782, %v4483, %v4479
    %v4485 = vlaneseq
    %v4486 = vshrl.u32 %v4485, 7
    %v4487 = vsub.s32 %v2784, %v4486
    %v4488 = vrot.slane %v4085, %v4487
    %v4489 = vsel %vm2789, %v4488, %v4484
    %v4490 = vlaneseq
    %v4491 = vshrl.u32 %v4490, 7
    %v4492 = vsub.s32 %v2791, %v4491
    %v4493 = vrot.slane %v4087, %v4492
    %v4494 = vsel %vm2796, %v4493, %v4489
    %v4495 = vlaneseq
    %v4496 = vshrl.u32 %v4495, 7
    %v4497 = vsub.s32 %v2798, %v4496
    %v4498 = vrot.slane %v4089, %v4497
    %v4499 = vsel %vm2803, %v4498, %v4494
    %v4500 = vlaneseq
    %v4501 = vshrl.u32 %v4500, 7
    %v4502 = vsub.s32 %v2805, %v4501
    %v4503 = vrot.slane %v4091, %v4502
    %v4504 = vsel %vm2810, %v4503, %v4499
    %v4505 = vlaneseq
    %v4506 = vshrl.u32 %v4505, 7
    %v4507 = vsub.s32 %v2812, %v4506
    %v4508 = vrot.slane %v4093, %v4507
    %v4509 = vsel %vm2817, %v4508, %v4504
    %v4510 = vlaneseq
    %v4511 = vshrl.u32 %v4510, 7
    %v4512 = vsub.s32 %v2819, %v4511
    %v4513 = vrot.slane %v4095, %v4512
    %v4514 = vsel %vm2824, %v4513, %v4509
    %v4515 = vlaneseq
    %v4516 = vshrl.u32 %v4515, 7
    %v4517 = vsub.s32 %v2826, %v4516
    %v4518 = vrot.slane %v4097, %v4517
    %v4519 = vsel %vm2831, %v4518, %v4514
    %v4520 = vlaneseq
    %v4521 = vshrl.u32 %v4520, 7
    %v4522 = vsub.s32 %v2833, %v4521
    %v4523 = vrot.slane %v4099, %v4522
    %v4524 = vsel %vm2838, %v4523, %v4519
    %v4525 = vlaneseq
    %v4526 = vshrl.u32 %v4525, 7
    %v4527 = vsub.s32 %v2840, %v4526
    %v4528 = vrot.slane %v4101, %v4527
    %v4529 = vsel %vm2845, %v4528, %v4524
    %v4530 = vlaneseq
    %v4531 = vshrl.u32 %v4530, 7
    %v4532 = vsub.s32 %v2847, %v4531
    %v4533 = vrot.slane %v4103, %v4532
    %v4534 = vsel %vm2852, %v4533, %v4529
    %v4535 = vlaneseq
    %v4536 = vshrl.u32 %v4535, 7
    %v4537 = vsub.s32 %v79, %v4536
    %v4538 = vrot.slane %v4105, %v4537
    %v4539 = vlaneseq
    %v4540 = vshrl.u32 %v4539, 7
    %v4541 = vsub.s32 %v2749, %v4540
    %v4542 = vrot.slane %v4107, %v4541
    %v4543 = vsel %vm2754, %v4542, %v4538
    %v4544 = vlaneseq
    %v4545 = vshrl.u32 %v4544, 7
    %v4546 = vsub.s32 %v2756, %v4545
    %v4547 = vrot.slane %v4109, %v4546
    %v4548 = vsel %vm2761, %v4547, %v4543
    %v4549 = vlaneseq
    %v4550 = vshrl.u32 %v4549, 7
    %v4551 = vsub.s32 %v2763, %v4550
    %v4552 = vrot.slane %v4111, %v4551
    %v4553 = vsel %vm2768, %v4552, %v4548
    %v4554 = vlaneseq
    %v4555 = vshrl.u32 %v4554, 7
    %v4556 = vsub.s32 %v2770, %v4555
    %v4557 = vrot.slane %v4113, %v4556
    %v4558 = vsel %vm2775, %v4557, %v4553
    %v4559 = vlaneseq
    %v4560 = vshrl.u32 %v4559, 7
    %v4561 = vsub.s32 %v2777, %v4560
    %v4562 = vrot.slane %v4115, %v4561
    %v4563 = vsel %vm2782, %v4562, %v4558
    %v4564 = vlaneseq
    %v4565 = vshrl.u32 %v4564, 7
    %v4566 = vsub.s32 %v2784, %v4565
    %v4567 = vrot.slane %v4117, %v4566
    %v4568 = vsel %vm2789, %v4567, %v4563
    %v4569 = vlaneseq
    %v4570 = vshrl.u32 %v4569, 7
    %v4571 = vsub.s32 %v2791, %v4570
    %v4572 = vrot.slane %v4119, %v4571
    %v4573 = vsel %vm2796, %v4572, %v4568
    %v4574 = vlaneseq
    %v4575 = vshrl.u32 %v4574, 7
    %v4576 = vsub.s32 %v2798, %v4575
    %v4577 = vrot.slane %v4121, %v4576
    %v4578 = vsel %vm2803, %v4577, %v4573
    %v4579 = vlaneseq
    %v4580 = vshrl.u32 %v4579, 7
    %v4581 = vsub.s32 %v2805, %v4580
    %v4582 = vrot.slane %v4123, %v4581
    %v4583 = vsel %vm2810, %v4582, %v4578
    %v4584 = vlaneseq
    %v4585 = vshrl.u32 %v4584, 7
    %v4586 = vsub.s32 %v2812, %v4585
    %v4587 = vrot.slane %v4125, %v4586
    %v4588 = vsel %vm2817, %v4587, %v4583
    %v4589 = vlaneseq
    %v4590 = vshrl.u32 %v4589, 7
    %v4591 = vsub.s32 %v2819, %v4590
    %v4592 = vrot.slane %v4127, %v4591
    %v4593 = vsel %vm2824, %v4592, %v4588
    %v4594 = vlaneseq
    %v4595 = vshrl.u32 %v4594, 7
    %v4596 = vsub.s32 %v2826, %v4595
    %v4597 = vrot.slane %v4129, %v4596
    %v4598 = vsel %vm2831, %v4597, %v4593
    %v4599 = vlaneseq
    %v4600 = vshrl.u32 %v4599, 7
    %v4601 = vsub.s32 %v2833, %v4600
    %v4602 = vrot.slane %v4131, %v4601
    %v4603 = vsel %vm2838, %v4602, %v4598
    %v4604 = vlaneseq
    %v4605 = vshrl.u32 %v4604, 7
    %v4606 = vsub.s32 %v2840, %v4605
    %v4607 = vrot.slane %v4133, %v4606
    %v4608 = vsel %vm2845, %v4607, %v4603
    %v4609 = vlaneseq
    %v4610 = vshrl.u32 %v4609, 7
    %v4611 = vsub.s32 %v2847, %v4610
    %v4612 = vrot.slane %v4135, %v4611
    %v4613 = vsel %vm2852, %v4612, %v4608
    %v4614 = vlaneseq
    %v4615 = vshrl.u32 %v4614, 7
    %v4616 = vsub.s32 %v79, %v4615
    %v4617 = vrot.slane %v4137, %v4616
    %v4618 = vlaneseq
    %v4619 = vshrl.u32 %v4618, 7
    %v4620 = vsub.s32 %v2749, %v4619
    %v4621 = vrot.slane %v4139, %v4620
    %v4622 = vsel %vm2754, %v4621, %v4617
    %v4623 = vlaneseq
    %v4624 = vshrl.u32 %v4623, 7
    %v4625 = vsub.s32 %v2756, %v4624
    %v4626 = vrot.slane %v4141, %v4625
    %v4627 = vsel %vm2761, %v4626, %v4622
    %v4628 = vlaneseq
    %v4629 = vshrl.u32 %v4628, 7
    %v4630 = vsub.s32 %v2763, %v4629
    %v4631 = vrot.slane %v4143, %v4630
    %v4632 = vsel %vm2768, %v4631, %v4627
    %v4633 = vlaneseq
    %v4634 = vshrl.u32 %v4633, 7
    %v4635 = vsub.s32 %v2770, %v4634
    %v4636 = vrot.slane %v4145, %v4635
    %v4637 = vsel %vm2775, %v4636, %v4632
    %v4638 = vlaneseq
    %v4639 = vshrl.u32 %v4638, 7
    %v4640 = vsub.s32 %v2777, %v4639
    %v4641 = vrot.slane %v4147, %v4640
    %v4642 = vsel %vm2782, %v4641, %v4637
    %v4643 = vlaneseq
    %v4644 = vshrl.u32 %v4643, 7
    %v4645 = vsub.s32 %v2784, %v4644
    %v4646 = vrot.slane %v4149, %v4645
    %v4647 = vsel %vm2789, %v4646, %v4642
    %v4648 = vlaneseq
    %v4649 = vshrl.u32 %v4648, 7
    %v4650 = vsub.s32 %v2791, %v4649
    %v4651 = vrot.slane %v4151, %v4650
    %v4652 = vsel %vm2796, %v4651, %v4647
    %v4653 = vlaneseq
    %v4654 = vshrl.u32 %v4653, 7
    %v4655 = vsub.s32 %v2798, %v4654
    %v4656 = vrot.slane %v4153, %v4655
    %v4657 = vsel %vm2803, %v4656, %v4652
    %v4658 = vlaneseq
    %v4659 = vshrl.u32 %v4658, 7
    %v4660 = vsub.s32 %v2805, %v4659
    %v4661 = vrot.slane %v4155, %v4660
    %v4662 = vsel %vm2810, %v4661, %v4657
    %v4663 = vlaneseq
    %v4664 = vshrl.u32 %v4663, 7
    %v4665 = vsub.s32 %v2812, %v4664
    %v4666 = vrot.slane %v4157, %v4665
    %v4667 = vsel %vm2817, %v4666, %v4662
    %v4668 = vlaneseq
    %v4669 = vshrl.u32 %v4668, 7
    %v4670 = vsub.s32 %v2819, %v4669
    %v4671 = vrot.slane %v4159, %v4670
    %v4672 = vsel %vm2824, %v4671, %v4667
    %v4673 = vlaneseq
    %v4674 = vshrl.u32 %v4673, 7
    %v4675 = vsub.s32 %v2826, %v4674
    %v4676 = vrot.slane %v4161, %v4675
    %v4677 = vsel %vm2831, %v4676, %v4672
    %v4678 = vlaneseq
    %v4679 = vshrl.u32 %v4678, 7
    %v4680 = vsub.s32 %v2833, %v4679
    %v4681 = vrot.slane %v4163, %v4680
    %v4682 = vsel %vm2838, %v4681, %v4677
    %v4683 = vlaneseq
    %v4684 = vshrl.u32 %v4683, 7
    %v4685 = vsub.s32 %v2840, %v4684
    %v4686 = vrot.slane %v4165, %v4685
    %v4687 = vsel %vm2845, %v4686, %v4682
    %v4688 = vlaneseq
    %v4689 = vshrl.u32 %v4688, 7
    %v4690 = vsub.s32 %v2847, %v4689
    %v4691 = vrot.slane %v4167, %v4690
    %v4692 = vsel %vm2852, %v4691, %v4687
    %v4693 = vlaneseq
    %v4694 = vshrl.u32 %v4693, 7
    %v4695 = vsub.s32 %v79, %v4694
    %v4696 = vrot.slane %v4169, %v4695
    %v4697 = vlaneseq
    %v4698 = vshrl.u32 %v4697, 7
    %v4699 = vsub.s32 %v2749, %v4698
    %v4700 = vrot.slane %v4171, %v4699
    %v4701 = vsel %vm2754, %v4700, %v4696
    %v4702 = vlaneseq
    %v4703 = vshrl.u32 %v4702, 7
    %v4704 = vsub.s32 %v2756, %v4703
    %v4705 = vrot.slane %v4173, %v4704
    %v4706 = vsel %vm2761, %v4705, %v4701
    %v4707 = vlaneseq
    %v4708 = vshrl.u32 %v4707, 7
    %v4709 = vsub.s32 %v2763, %v4708
    %v4710 = vrot.slane %v4175, %v4709
    %v4711 = vsel %vm2768, %v4710, %v4706
    %v4712 = vlaneseq
    %v4713 = vshrl.u32 %v4712, 7
    %v4714 = vsub.s32 %v2770, %v4713
    %v4715 = vrot.slane %v4177, %v4714
    %v4716 = vsel %vm2775, %v4715, %v4711
    %v4717 = vlaneseq
    %v4718 = vshrl.u32 %v4717, 7
    %v4719 = vsub.s32 %v2777, %v4718
    %v4720 = vrot.slane %v4179, %v4719
    %v4721 = vsel %vm2782, %v4720, %v4716
    %v4722 = vlaneseq
    %v4723 = vshrl.u32 %v4722, 7
    %v4724 = vsub.s32 %v2784, %v4723
    %v4725 = vrot.slane %v4181, %v4724
    %v4726 = vsel %vm2789, %v4725, %v4721
    %v4727 = vlaneseq
    %v4728 = vshrl.u32 %v4727, 7
    %v4729 = vsub.s32 %v2791, %v4728
    %v4730 = vrot.slane %v4183, %v4729
    %v4731 = vsel %vm2796, %v4730, %v4726
    %v4732 = vlaneseq
    %v4733 = vshrl.u32 %v4732, 7
    %v4734 = vsub.s32 %v2798, %v4733
    %v4735 = vrot.slane %v4185, %v4734
    %v4736 = vsel %vm2803, %v4735, %v4731
    %v4737 = vlaneseq
    %v4738 = vshrl.u32 %v4737, 7
    %v4739 = vsub.s32 %v2805, %v4738
    %v4740 = vrot.slane %v4187, %v4739
    %v4741 = vsel %vm2810, %v4740, %v4736
    %v4742 = vlaneseq
    %v4743 = vshrl.u32 %v4742, 7
    %v4744 = vsub.s32 %v2812, %v4743
    %v4745 = vrot.slane %v4189, %v4744
    %v4746 = vsel %vm2817, %v4745, %v4741
    %v4747 = vlaneseq
    %v4748 = vshrl.u32 %v4747, 7
    %v4749 = vsub.s32 %v2819, %v4748
    %v4750 = vrot.slane %v4191, %v4749
    %v4751 = vsel %vm2824, %v4750, %v4746
    %v4752 = vlaneseq
    %v4753 = vshrl.u32 %v4752, 7
    %v4754 = vsub.s32 %v2826, %v4753
    %v4755 = vrot.slane %v4193, %v4754
    %v4756 = vsel %vm2831, %v4755, %v4751
    %v4757 = vlaneseq
    %v4758 = vshrl.u32 %v4757, 7
    %v4759 = vsub.s32 %v2833, %v4758
    %v4760 = vrot.slane %v4195, %v4759
    %v4761 = vsel %vm2838, %v4760, %v4756
    %v4762 = vlaneseq
    %v4763 = vshrl.u32 %v4762, 7
    %v4764 = vsub.s32 %v2840, %v4763
    %v4765 = vrot.slane %v4197, %v4764
    %v4766 = vsel %vm2845, %v4765, %v4761
    %v4767 = vlaneseq
    %v4768 = vshrl.u32 %v4767, 7
    %v4769 = vsub.s32 %v2847, %v4768
    %v4770 = vrot.slane %v4199, %v4769
    %v4771 = vsel %vm2852, %v4770, %v4766
    %v4772 = vlaneseq
    %v4773 = vshrl.u32 %v4772, 7
    %v4774 = vsub.s32 %v79, %v4773
    %v4775 = vrot.slane %v4201, %v4774
    %v4776 = vlaneseq
    %v4777 = vshrl.u32 %v4776, 7
    %v4778 = vsub.s32 %v2749, %v4777
    %v4779 = vrot.slane %v4203, %v4778
    %v4780 = vsel %vm2754, %v4779, %v4775
    %v4781 = vlaneseq
    %v4782 = vshrl.u32 %v4781, 7
    %v4783 = vsub.s32 %v2756, %v4782
    %v4784 = vrot.slane %v4205, %v4783
    %v4785 = vsel %vm2761, %v4784, %v4780
    %v4786 = vlaneseq
    %v4787 = vshrl.u32 %v4786, 7
    %v4788 = vsub.s32 %v2763, %v4787
    %v4789 = vrot.slane %v4207, %v4788
    %v4790 = vsel %vm2768, %v4789, %v4785
    %v4791 = vlaneseq
    %v4792 = vshrl.u32 %v4791, 7
    %v4793 = vsub.s32 %v2770, %v4792
    %v4794 = vrot.slane %v4209, %v4793
    %v4795 = vsel %vm2775, %v4794, %v4790
    %v4796 = vlaneseq
    %v4797 = vshrl.u32 %v4796, 7
    %v4798 = vsub.s32 %v2777, %v4797
    %v4799 = vrot.slane %v4211, %v4798
    %v4800 = vsel %vm2782, %v4799, %v4795
    %v4801 = vlaneseq
    %v4802 = vshrl.u32 %v4801, 7
    %v4803 = vsub.s32 %v2784, %v4802
    %v4804 = vrot.slane %v4213, %v4803
    %v4805 = vsel %vm2789, %v4804, %v4800
    %v4806 = vlaneseq
    %v4807 = vshrl.u32 %v4806, 7
    %v4808 = vsub.s32 %v2791, %v4807
    %v4809 = vrot.slane %v4215, %v4808
    %v4810 = vsel %vm2796, %v4809, %v4805
    %v4811 = vlaneseq
    %v4812 = vshrl.u32 %v4811, 7
    %v4813 = vsub.s32 %v2798, %v4812
    %v4814 = vrot.slane %v4217, %v4813
    %v4815 = vsel %vm2803, %v4814, %v4810
    %v4816 = vlaneseq
    %v4817 = vshrl.u32 %v4816, 7
    %v4818 = vsub.s32 %v2805, %v4817
    %v4819 = vrot.slane %v4219, %v4818
    %v4820 = vsel %vm2810, %v4819, %v4815
    %v4821 = vlaneseq
    %v4822 = vshrl.u32 %v4821, 7
    %v4823 = vsub.s32 %v2812, %v4822
    %v4824 = vrot.slane %v4221, %v4823
    %v4825 = vsel %vm2817, %v4824, %v4820
    %v4826 = vlaneseq
    %v4827 = vshrl.u32 %v4826, 7
    %v4828 = vsub.s32 %v2819, %v4827
    %v4829 = vrot.slane %v4223, %v4828
    %v4830 = vsel %vm2824, %v4829, %v4825
    %v4831 = vlaneseq
    %v4832 = vshrl.u32 %v4831, 7
    %v4833 = vsub.s32 %v2826, %v4832
    %v4834 = vrot.slane %v4225, %v4833
    %v4835 = vsel %vm2831, %v4834, %v4830
    %v4836 = vlaneseq
    %v4837 = vshrl.u32 %v4836, 7
    %v4838 = vsub.s32 %v2833, %v4837
    %v4839 = vrot.slane %v4227, %v4838
    %v4840 = vsel %vm2838, %v4839, %v4835
    %v4841 = vlaneseq
    %v4842 = vshrl.u32 %v4841, 7
    %v4843 = vsub.s32 %v2840, %v4842
    %v4844 = vrot.slane %v4229, %v4843
    %v4845 = vsel %vm2845, %v4844, %v4840
    %v4846 = vlaneseq
    %v4847 = vshrl.u32 %v4846, 7
    %v4848 = vsub.s32 %v2847, %v4847
    %v4849 = vrot.slane %v4231, %v4848
    %v4850 = vsel %vm2852, %v4849, %v4845
    %v4851 = vlaneseq
    %v4852 = vshrl.u32 %v4851, 7
    %v4853 = vsub.s32 %v79, %v4852
    %v4854 = vrot.slane %v4233, %v4853
    %v4855 = vlaneseq
    %v4856 = vshrl.u32 %v4855, 7
    %v4857 = vsub.s32 %v2749, %v4856
    %v4858 = vrot.slane %v4235, %v4857
    %v4859 = vsel %vm2754, %v4858, %v4854
    %v4860 = vlaneseq
    %v4861 = vshrl.u32 %v4860, 7
    %v4862 = vsub.s32 %v2756, %v4861
    %v4863 = vrot.slane %v4237, %v4862
    %v4864 = vsel %vm2761, %v4863, %v4859
    %v4865 = vlaneseq
    %v4866 = vshrl.u32 %v4865, 7
    %v4867 = vsub.s32 %v2763, %v4866
    %v4868 = vrot.slane %v4239, %v4867
    %v4869 = vsel %vm2768, %v4868, %v4864
    %v4870 = vlaneseq
    %v4871 = vshrl.u32 %v4870, 7
    %v4872 = vsub.s32 %v2770, %v4871
    %v4873 = vrot.slane %v4241, %v4872
    %v4874 = vsel %vm2775, %v4873, %v4869
    %v4875 = vlaneseq
    %v4876 = vshrl.u32 %v4875, 7
    %v4877 = vsub.s32 %v2777, %v4876
    %v4878 = vrot.slane %v4243, %v4877
    %v4879 = vsel %vm2782, %v4878, %v4874
    %v4880 = vlaneseq
    %v4881 = vshrl.u32 %v4880, 7
    %v4882 = vsub.s32 %v2784, %v4881
    %v4883 = vrot.slane %v4245, %v4882
    %v4884 = vsel %vm2789, %v4883, %v4879
    %v4885 = vlaneseq
    %v4886 = vshrl.u32 %v4885, 7
    %v4887 = vsub.s32 %v2791, %v4886
    %v4888 = vrot.slane %v4247, %v4887
    %v4889 = vsel %vm2796, %v4888, %v4884
    %v4890 = vlaneseq
    %v4891 = vshrl.u32 %v4890, 7
    %v4892 = vsub.s32 %v2798, %v4891
    %v4893 = vrot.slane %v4249, %v4892
    %v4894 = vsel %vm2803, %v4893, %v4889
    %v4895 = vlaneseq
    %v4896 = vshrl.u32 %v4895, 7
    %v4897 = vsub.s32 %v2805, %v4896
    %v4898 = vrot.slane %v4251, %v4897
    %v4899 = vsel %vm2810, %v4898, %v4894
    %v4900 = vlaneseq
    %v4901 = vshrl.u32 %v4900, 7
    %v4902 = vsub.s32 %v2812, %v4901
    %v4903 = vrot.slane %v4253, %v4902
    %v4904 = vsel %vm2817, %v4903, %v4899
    %v4905 = vlaneseq
    %v4906 = vshrl.u32 %v4905, 7
    %v4907 = vsub.s32 %v2819, %v4906
    %v4908 = vrot.slane %v4255, %v4907
    %v4909 = vsel %vm2824, %v4908, %v4904
    %v4910 = vlaneseq
    %v4911 = vshrl.u32 %v4910, 7
    %v4912 = vsub.s32 %v2826, %v4911
    %v4913 = vrot.slane %v4257, %v4912
    %v4914 = vsel %vm2831, %v4913, %v4909
    %v4915 = vlaneseq
    %v4916 = vshrl.u32 %v4915, 7
    %v4917 = vsub.s32 %v2833, %v4916
    %v4918 = vrot.slane %v4259, %v4917
    %v4919 = vsel %vm2838, %v4918, %v4914
    %v4920 = vlaneseq
    %v4921 = vshrl.u32 %v4920, 7
    %v4922 = vsub.s32 %v2840, %v4921
    %v4923 = vrot.slane %v4261, %v4922
    %v4924 = vsel %vm2845, %v4923, %v4919
    %v4925 = vlaneseq
    %v4926 = vshrl.u32 %v4925, 7
    %v4927 = vsub.s32 %v2847, %v4926
    %v4928 = vrot.slane %v4263, %v4927
    %v4929 = vsel %vm2852, %v4928, %v4924
    %v4930 = vlaneseq
    %v4931 = vshrl.u32 %v4930, 7
    %v4932 = vsub.s32 %v79, %v4931
    %v4933 = vrot.slane %v4265, %v4932
    %v4934 = vlaneseq
    %v4935 = vshrl.u32 %v4934, 7
    %v4936 = vsub.s32 %v2749, %v4935
    %v4937 = vrot.slane %v4267, %v4936
    %v4938 = vsel %vm2754, %v4937, %v4933
    %v4939 = vlaneseq
    %v4940 = vshrl.u32 %v4939, 7
    %v4941 = vsub.s32 %v2756, %v4940
    %v4942 = vrot.slane %v4269, %v4941
    %v4943 = vsel %vm2761, %v4942, %v4938
    %v4944 = vlaneseq
    %v4945 = vshrl.u32 %v4944, 7
    %v4946 = vsub.s32 %v2763, %v4945
    %v4947 = vrot.slane %v4271, %v4946
    %v4948 = vsel %vm2768, %v4947, %v4943
    %v4949 = vlaneseq
    %v4950 = vshrl.u32 %v4949, 7
    %v4951 = vsub.s32 %v2770, %v4950
    %v4952 = vrot.slane %v4273, %v4951
    %v4953 = vsel %vm2775, %v4952, %v4948
    %v4954 = vlaneseq
    %v4955 = vshrl.u32 %v4954, 7
    %v4956 = vsub.s32 %v2777, %v4955
    %v4957 = vrot.slane %v4275, %v4956
    %v4958 = vsel %vm2782, %v4957, %v4953
    %v4959 = vlaneseq
    %v4960 = vshrl.u32 %v4959, 7
    %v4961 = vsub.s32 %v2784, %v4960
    %v4962 = vrot.slane %v4277, %v4961
    %v4963 = vsel %vm2789, %v4962, %v4958
    %v4964 = vlaneseq
    %v4965 = vshrl.u32 %v4964, 7
    %v4966 = vsub.s32 %v2791, %v4965
    %v4967 = vrot.slane %v4279, %v4966
    %v4968 = vsel %vm2796, %v4967, %v4963
    %v4969 = vlaneseq
    %v4970 = vshrl.u32 %v4969, 7
    %v4971 = vsub.s32 %v2798, %v4970
    %v4972 = vrot.slane %v4281, %v4971
    %v4973 = vsel %vm2803, %v4972, %v4968
    %v4974 = vlaneseq
    %v4975 = vshrl.u32 %v4974, 7
    %v4976 = vsub.s32 %v2805, %v4975
    %v4977 = vrot.slane %v4283, %v4976
    %v4978 = vsel %vm2810, %v4977, %v4973
    %v4979 = vlaneseq
    %v4980 = vshrl.u32 %v4979, 7
    %v4981 = vsub.s32 %v2812, %v4980
    %v4982 = vrot.slane %v4285, %v4981
    %v4983 = vsel %vm2817, %v4982, %v4978
    %v4984 = vlaneseq
    %v4985 = vshrl.u32 %v4984, 7
    %v4986 = vsub.s32 %v2819, %v4985
    %v4987 = vrot.slane %v4287, %v4986
    %v4988 = vsel %vm2824, %v4987, %v4983
    %v4989 = vlaneseq
    %v4990 = vshrl.u32 %v4989, 7
    %v4991 = vsub.s32 %v2826, %v4990
    %v4992 = vrot.slane %v4289, %v4991
    %v4993 = vsel %vm2831, %v4992, %v4988
    %v4994 = vlaneseq
    %v4995 = vshrl.u32 %v4994, 7
    %v4996 = vsub.s32 %v2833, %v4995
    %v4997 = vrot.slane %v4291, %v4996
    %v4998 = vsel %vm2838, %v4997, %v4993
    %v4999 = vlaneseq
    %v5000 = vshrl.u32 %v4999, 7
    %v5001 = vsub.s32 %v2840, %v5000
    %v5002 = vrot.slane %v4293, %v5001
    %v5003 = vsel %vm2845, %v5002, %v4998
    %v5004 = vlaneseq
    %v5005 = vshrl.u32 %v5004, 7
    %v5006 = vsub.s32 %v2847, %v5005
    %v5007 = vrot.slane %v4295, %v5006
    %v5008 = vsel %vm2852, %v5007, %v5003
    %v5009 = vlaneseq
    %v5010 = vshrl.u32 %v5009, 7
    %v5011 = vsub.s32 %v79, %v5010
    %v5012 = vrot.slane %v4297, %v5011
    %v5013 = vlaneseq
    %v5014 = vshrl.u32 %v5013, 7
    %v5015 = vsub.s32 %v2749, %v5014
    %v5016 = vrot.slane %v4299, %v5015
    %v5017 = vsel %vm2754, %v5016, %v5012
    %v5018 = vlaneseq
    %v5019 = vshrl.u32 %v5018, 7
    %v5020 = vsub.s32 %v2756, %v5019
    %v5021 = vrot.slane %v4301, %v5020
    %v5022 = vsel %vm2761, %v5021, %v5017
    %v5023 = vlaneseq
    %v5024 = vshrl.u32 %v5023, 7
    %v5025 = vsub.s32 %v2763, %v5024
    %v5026 = vrot.slane %v4303, %v5025
    %v5027 = vsel %vm2768, %v5026, %v5022
    %v5028 = vlaneseq
    %v5029 = vshrl.u32 %v5028, 7
    %v5030 = vsub.s32 %v2770, %v5029
    %v5031 = vrot.slane %v4305, %v5030
    %v5032 = vsel %vm2775, %v5031, %v5027
    %v5033 = vlaneseq
    %v5034 = vshrl.u32 %v5033, 7
    %v5035 = vsub.s32 %v2777, %v5034
    %v5036 = vrot.slane %v4307, %v5035
    %v5037 = vsel %vm2782, %v5036, %v5032
    %v5038 = vlaneseq
    %v5039 = vshrl.u32 %v5038, 7
    %v5040 = vsub.s32 %v2784, %v5039
    %v5041 = vrot.slane %v4309, %v5040
    %v5042 = vsel %vm2789, %v5041, %v5037
    %v5043 = vlaneseq
    %v5044 = vshrl.u32 %v5043, 7
    %v5045 = vsub.s32 %v2791, %v5044
    %v5046 = vrot.slane %v4311, %v5045
    %v5047 = vsel %vm2796, %v5046, %v5042
    %v5048 = vlaneseq
    %v5049 = vshrl.u32 %v5048, 7
    %v5050 = vsub.s32 %v2798, %v5049
    %v5051 = vrot.slane %v4313, %v5050
    %v5052 = vsel %vm2803, %v5051, %v5047
    %v5053 = vlaneseq
    %v5054 = vshrl.u32 %v5053, 7
    %v5055 = vsub.s32 %v2805, %v5054
    %v5056 = vrot.slane %v4315, %v5055
    %v5057 = vsel %vm2810, %v5056, %v5052
    %v5058 = vlaneseq
    %v5059 = vshrl.u32 %v5058, 7
    %v5060 = vsub.s32 %v2812, %v5059
    %v5061 = vrot.slane %v4317, %v5060
    %v5062 = vsel %vm2817, %v5061, %v5057
    %v5063 = vlaneseq
    %v5064 = vshrl.u32 %v5063, 7
    %v5065 = vsub.s32 %v2819, %v5064
    %v5066 = vrot.slane %v4319, %v5065
    %v5067 = vsel %vm2824, %v5066, %v5062
    %v5068 = vlaneseq
    %v5069 = vshrl.u32 %v5068, 7
    %v5070 = vsub.s32 %v2826, %v5069
    %v5071 = vrot.slane %v4321, %v5070
    %v5072 = vsel %vm2831, %v5071, %v5067
    %v5073 = vlaneseq
    %v5074 = vshrl.u32 %v5073, 7
    %v5075 = vsub.s32 %v2833, %v5074
    %v5076 = vrot.slane %v4323, %v5075
    %v5077 = vsel %vm2838, %v5076, %v5072
    %v5078 = vlaneseq
    %v5079 = vshrl.u32 %v5078, 7
    %v5080 = vsub.s32 %v2840, %v5079
    %v5081 = vrot.slane %v4325, %v5080
    %v5082 = vsel %vm2845, %v5081, %v5077
    %v5083 = vlaneseq
    %v5084 = vshrl.u32 %v5083, 7
    %v5085 = vsub.s32 %v2847, %v5084
    %v5086 = vrot.slane %v4327, %v5085
    %v5087 = vsel %vm2852, %v5086, %v5082
    %v5088 = vsel %vm3407, %v4613, %v4534
    %v5089 = vsel %vm3408, %v4692, %v5088
    %v5090 = vsel %vm3410, %v4771, %v5089
    %v5091 = vsel %vm3412, %v4850, %v5090
    %v5092 = vsel %vm3414, %v4929, %v5091
    %v5093 = vsel %vm3416, %v5008, %v5092
    %v5094 = vsel %vm3418, %v5087, %v5093
    %v5096 = vmul.f32 %v74, %v5094
    %5097 = vadd.xlane.f32.xlu0 %v5096
    %v5098 = vpop.xlane.xlu0 %5097
    %v5099 = vsub.f32 %v77, %v5098
    %5100 = vadd.xlane.f32.xlu0 %v58
    %v5101 = vpop.xlane.xlu0 %5100
    %vm5102 = vcmp.ge.f32.partialorder %v5101, 1.5
    %vm5103 = vcmp.ge.f32.partialorder %v5101, 0.5
    %vm5104 = vmand %vm5102, %vm5103
    %v5105 = vsel %vm5104, %v5099, 0.0
    %vm5106 = vcmask 7168
    %5107 = vst.msk [vmem:[%s3] sm:$0xff] %vm5106, %v5105
    %v5108 = vsel %vm5104, 1.0, 0.0
    %5109 = vst.msk [vmem:[%s4] sm:$0xff] %vm5106, %v5108
    // Predicated region
    $region26: #{tpu_custom_call.1} parent=1 // pred_check
      _
    $region27: #{tpu_custom_call.1} parent=1 // pred_check_branch
      %5111 = sbr.rel (0) target = $region29
    $region28: #{tpu_custom_call.1} parent=1 // pred_region
      _
    $region29: #{tpu_custom_call.1} parent=1 // pred_fallthru
      _
    // Predicated region
    $region30: #{tpu_custom_call.1} parent=1 // pred_check
      _
    $region31: #{tpu_custom_call.1} parent=1 // pred_check_branch
      %5113 = sbr.rel (0) target = $region33
    $region32: #{tpu_custom_call.1} parent=1 // pred_region
      _
    $region33: #{tpu_custom_call.1} parent=1 // pred_fallthru
      _
    // Predicated region
    $region34: #{tpu_custom_call.1} parent=1 // pred_check
      _
    $region35: #{tpu_custom_call.1} parent=1 // pred_check_branch
      %5115 = sbr.rel (0) target = $region37
    $region36: #{tpu_custom_call.1} parent=1 // pred_region
      _
    $region37: #{tpu_custom_call.1} parent=1 // pred_fallthru
      _
    // Predicated region
    $region38: #{tpu_custom_call.1} parent=1 // pred_check
      _
    $region39: #{tpu_custom_call.1} parent=1 // pred_check_branch
      %5117 = sbr.rel (0) target = $region41
    $region40: #{tpu_custom_call.1} parent=1 // pred_region
      _
    $region41: #{tpu_custom_call.1} parent=1 // pred_fallthru
      _
    %5118 = vsyncpa [#allocation3], 1
    %5119 = vsyncpa [#allocation5], 1

</llo_original>
